<compile_context>
chip_gen: v5e
topology: v5e:2x2
jax: 0.10.0
libtpu: 0.0.40
codegen_flags: <defaults>
</compile_context>

<pallas_src>
import jax
import jax.numpy as jnp
from jax.experimental import pallas as pl
from jax.experimental.pallas import tpu as pltpu

EPS = 1e-5


def fused_kernel(scale_ref, x29_ref, x23_hbm, w1_ref, w2_hbm, bn_ref, out_ref,
                 x23_vmem, w2_vmem, sem):
    # Kick off DMAs for late-use inputs so they overlap conv1 + BN1 compute.
    cp_x23 = pltpu.make_async_copy(x23_hbm, x23_vmem, sem.at[0])
    cp_x23.start()
    cp_w2 = pltpu.make_async_copy(w2_hbm, w2_vmem, sem.at[1])
    cp_w2.start()

    x = x29_ref[...]                                   # (C, P)
    p = x.shape[1]
    inv_p = 1.0 / p                                    # static
    ones_p = jnp.ones((p, 1), jnp.float32)             # MXU reduction vector

    bn = bn_ref[...]                                   # (C, 4) = [g1, b1, g2, b2]
    g1, b1 = bn[:, 0:1], bn[:, 1:2]
    g2, b2 = bn[:, 2:3], bn[:, 3:4]

    # Fold the per-input-channel scale into conv1's weight: (Cout, Cin) * (1, Cin)
    w1s = w1_ref[...] * scale_ref[...]

    # x36 = conv2d12(x34 * x29): 1x1 conv == matmul over channel dim (MXU)
    x36 = jnp.dot(w1s, x, preferred_element_type=jnp.float32)          # (C, P)

    # x37 = batchnorm2d8(x36): per-channel stats via MXU dots against ones,
    # applied as a single FMA.
    m1 = jnp.dot(x36, ones_p, preferred_element_type=jnp.float32) * inv_p        # (C, 1)
    q1 = jnp.dot(x36 * x36, ones_p, preferred_element_type=jnp.float32) * inv_p  # (C, 1)
    v1 = jnp.maximum(q1 - m1 * m1, 0.0)
    a1 = g1 * jax.lax.rsqrt(v1 + EPS)
    c1 = b1 - m1 * a1
    x37 = x36 * a1 + c1

    # x38 = x23 + x37 ; x39 = relu(x38)   (x23 DMA has been hidden behind the above)
    cp_x23.wait()
    x39 = jnp.maximum(x23_vmem[...] + x37, 0.0)

    # x40 = conv2d13(x39)
    cp_w2.wait()
    x40 = jnp.dot(w2_vmem[...], x39, preferred_element_type=jnp.float32)

    # x41 = batchnorm2d9(x40)
    m2 = jnp.dot(x40, ones_p, preferred_element_type=jnp.float32) * inv_p
    q2 = jnp.dot(x40 * x40, ones_p, preferred_element_type=jnp.float32) * inv_p
    v2 = jnp.maximum(q2 - m2 * m2, 0.0)
    a2 = g2 * jax.lax.rsqrt(v2 + EPS)
    c2 = b2 - m2 * a2
    out_ref[...] = x40 * a2 + c2


@jax.jit
def model_forward(x34, x29, x23, params):
    """x34: (1,C,1,1), x29/x23: (1,C,H,W) float32. Returns (1,C,H,W)."""
    n, c, h, w = x29.shape
    assert n == 1, "module spec has batch size 1 (per-sample scale assumes N == 1)"
    p = h * w

    # Channels-first flattened layout: plain reshapes, no transposes.
    x29_f = x29.reshape(c, p)                       # (C, P)
    x23_f = x23.reshape(c, p)                       # (C, P)
    scale = x34.reshape(1, c)                       # (1, Cin) row for weight folding

    w1 = params["w1"].reshape(c, c)                 # (Cout, Cin)
    w2 = params["w2"].reshape(c, c)
    bn = jnp.stack([params["g1"], params["b1"], params["g2"], params["b2"]], axis=1)  # (C, 4)

    cost = pl.CostEstimate(
        flops=2 * (2 * c * c * p) + 4 * (2 * c * p),   # two (C,C)x(C,P) matmuls + 4 stats dots
        transcendentals=2 * c,                         # two per-channel rsqrt
        bytes_accessed=4 * (3 * c * p + 2 * c * c + 5 * c),
    )

    vmem = pl.BlockSpec(memory_space=pltpu.MemorySpace.VMEM)
    hbm = pl.BlockSpec(memory_space=pl.ANY)           # deferred-use inputs: manual DMA
    out_flat = pl.pallas_call(
        fused_kernel,
        out_shape=jax.ShapeDtypeStruct((c, p), jnp.float32),
        in_specs=[vmem, vmem, hbm, vmem, hbm, vmem],  # scale, x29, x23, w1, w2, bn
        out_specs=vmem,
        scratch_shapes=[
            pltpu.VMEM((c, p), jnp.float32),          # x23 landing buffer
            pltpu.VMEM((c, c), jnp.float32),          # w2 landing buffer
            pltpu.SemaphoreType.DMA((2,)),
        ],
        cost_estimate=cost,
    )(scale, x29_f, x23_f, w1, w2, bn)

    return out_flat.reshape(n, c, h, w)


def reference_forward(x34, x29, x23, params):
    """Pure-JAX reference with identical semantics (training-mode BN)."""
    c = x29.shape[1]
    w1 = params["w1"].reshape(c, c)
    w2 = params["w2"].reshape(c, c)

    def bn(x, g, b):
        mean = jnp.mean(x, axis=(0, 2, 3), keepdims=True)
        var = jnp.mean((x - mean) ** 2, axis=(0, 2, 3), keepdims=True)
        return (x - mean) * jax.lax.rsqrt(var + EPS) * g.reshape(1, c, 1, 1) + b.reshape(1, c, 1, 1)

    x35 = x34 * x29
    x36 = jnp.einsum("oc,nchw->nohw", w1, x35)
    x37 = bn(x36, params["g1"], params["b1"])
    x39 = jnp.maximum(x23 + x37, 0.0)
    x40 = jnp.einsum("oc,nchw->nohw", w2, x39)
    return bn(x40, params["g2"], params["b2"])


def init_params(key, c):
    k1, k2 = jax.random.split(key)
    # Conv2d(C, C, 1x1, bias=False): weight (Cout, Cin, 1, 1)
    w1 = jax.random.normal(k1, (c, c, 1, 1), jnp.float32) * (1.0 / jnp.sqrt(c))
    w2 = jax.random.normal(k2, (c, c, 1, 1), jnp.float32) * (1.0 / jnp.sqrt(c))
    # BatchNorm2d affine params: gamma=1, beta=0 (PyTorch default init)
    g1 = jnp.ones((c,), jnp.float32)
    b1 = jnp.zeros((c,), jnp.float32)
    g2 = jnp.ones((c,), jnp.float32)
    b2 = jnp.zeros((c,), jnp.float32)
    return {"w1": w1, "w2": w2, "g1": g1, "b1": b1, "g2": g2, "b2": b2}


if __name__ == "__main__":
    N, C, H, W = 1, 104, 28, 28
    key = jax.random.PRNGKey(0)
    k_x34, k_x29, k_x23, k_p = jax.random.split(key, 4)

    x34 = jax.random.normal(k_x34, (N, C, 1, 1), jnp.float32)
    x29 = jax.random.normal(k_x29, (N, C, H, W), jnp.float32)
    x23 = jax.random.normal(k_x23, (N, C, H, W), jnp.float32)
    params = init_params(k_p, C)

    out = model_forward(x34, x29, x23, params)
    jax.block_until_ready(out)
    assert out.shape == (N, C, H, W)

    ref = reference_forward(x34, x29, x23, params)
    jax.block_until_ready(ref)
    max_err = float(jnp.max(jnp.abs(out - ref)))
    assert max_err < 5e-2, f"mismatch vs reference: max abs err {max_err}"

    print("KERNEL_OK")
</pallas_src>

<mosaic_0001>
module attributes {stable_mosaic.version = 11 : i64} {
  func.func @fused_kernel(%arg0: memref<1x104xf32, #tpu.memory_space<vmem>>, %arg1: memref<104x784xf32, #tpu.memory_space<vmem>>, %arg2: memref<104x784xf32, #tpu.memory_space<any>>, %arg3: memref<104x104xf32, #tpu.memory_space<vmem>>, %arg4: memref<104x104xf32, #tpu.memory_space<any>>, %arg5: memref<104x4xf32, #tpu.memory_space<vmem>>, %arg6: memref<104x784xf32, #tpu.memory_space<vmem>>, %arg7: memref<104x784xf32, #tpu.memory_space<vmem>>, %arg8: memref<104x104xf32, #tpu.memory_space<vmem>>, %arg9: memref<2x!tpu.dma_semaphore, #tpu.memory_space<semaphore_mem>>) attributes {dimension_semantics = [], scalar_prefetch = 0 : i64, scratch_operands = 3 : i64, tpu.core_type = #tpu.core_type<tc>} {
    %c0_i32 = arith.constant 0 : i32
    %0 = tpu.memref_slice %arg9[%c0_i32] : memref<2x!tpu.dma_semaphore, #tpu.memory_space<semaphore_mem>> -> memref<1x!tpu.dma_semaphore, #tpu.memory_space<semaphore_mem>>
    %1 = tpu.memref_squeeze %0 : memref<1x!tpu.dma_semaphore, #tpu.memory_space<semaphore_mem>> -> memref<!tpu.dma_semaphore, #tpu.memory_space<semaphore_mem>>
    tpu.enqueue_dma source(%arg2 : memref<104x784xf32, #tpu.memory_space<any>>) target(%arg7 : memref<104x784xf32, #tpu.memory_space<vmem>>) target_semaphore(%1 : memref<!tpu.dma_semaphore, #tpu.memory_space<semaphore_mem>>)
    %c1_i32 = arith.constant 1 : i32
    %2 = tpu.memref_slice %arg9[%c1_i32] : memref<2x!tpu.dma_semaphore, #tpu.memory_space<semaphore_mem>> -> memref<1x!tpu.dma_semaphore, #tpu.memory_space<semaphore_mem>>
    %3 = tpu.memref_squeeze %2 : memref<1x!tpu.dma_semaphore, #tpu.memory_space<semaphore_mem>> -> memref<!tpu.dma_semaphore, #tpu.memory_space<semaphore_mem>>
    tpu.enqueue_dma source(%arg4 : memref<104x104xf32, #tpu.memory_space<any>>) target(%arg8 : memref<104x104xf32, #tpu.memory_space<vmem>>) target_semaphore(%3 : memref<!tpu.dma_semaphore, #tpu.memory_space<semaphore_mem>>)
    %c0 = arith.constant 0 : index
    %c0_0 = arith.constant 0 : index
    %4 = vector.load %arg1[%c0, %c0_0] : memref<104x784xf32, #tpu.memory_space<vmem>>, vector<104x784xf32>
    %cst = arith.constant 1.000000e+00 : f32
    %5 = vector.broadcast %cst : f32 to vector<784x1xf32>
    %c0_1 = arith.constant 0 : index
    %c0_2 = arith.constant 0 : index
    %6 = vector.load %arg5[%c0_1, %c0_2] : memref<104x4xf32, #tpu.memory_space<vmem>>, vector<104x4xf32>
    %7 = vector.extract_strided_slice %6 {offsets = [0, 0], sizes = [104, 1], strides = [1, 1]} : vector<104x4xf32> to vector<104x1xf32>
    %8 = vector.extract_strided_slice %6 {offsets = [0, 1], sizes = [104, 1], strides = [1, 1]} : vector<104x4xf32> to vector<104x1xf32>
    %9 = vector.extract_strided_slice %6 {offsets = [0, 2], sizes = [104, 1], strides = [1, 1]} : vector<104x4xf32> to vector<104x1xf32>
    %10 = vector.extract_strided_slice %6 {offsets = [0, 3], sizes = [104, 1], strides = [1, 1]} : vector<104x4xf32> to vector<104x1xf32>
    %c0_3 = arith.constant 0 : index
    %c0_4 = arith.constant 0 : index
    %11 = vector.load %arg3[%c0_3, %c0_4] : memref<104x104xf32, #tpu.memory_space<vmem>>, vector<104x104xf32>
    %c0_5 = arith.constant 0 : index
    %c0_6 = arith.constant 0 : index
    %12 = vector.load %arg0[%c0_5, %c0_6] : memref<1x104xf32, #tpu.memory_space<vmem>>, vector<1x104xf32>
    %13 = vector.broadcast %12 : vector<1x104xf32> to vector<104x104xf32>
    %14 = arith.mulf %11, %13 : vector<104x104xf32>
    %cst_7 = arith.constant dense<0.000000e+00> : vector<104x784xf32>
    %15 = tpu.matmul %14, %4, %cst_7 {dimension_numbers = #tpu.dot_dimension_numbers<[1], [0], [0], [1], [0, 0, 1, 1], [], []>} : vector<104x104xf32>, vector<104x784xf32>, vector<104x784xf32> -> vector<104x784xf32>
    %cst_8 = arith.constant dense<0.000000e+00> : vector<104x1xf32>
    %16 = tpu.matmul %15, %5, %cst_8 {dimension_numbers = #tpu.dot_dimension_numbers<[1], [0], [0], [1], [0, 0, 1, 1], [], []>} : vector<104x784xf32>, vector<784x1xf32>, vector<104x1xf32> -> vector<104x1xf32>
    %cst_9 = arith.constant 0.00127551018 : f32
    %17 = vector.broadcast %cst_9 : f32 to vector<104x1xf32>
    %18 = arith.mulf %16, %17 : vector<104x1xf32>
    %19 = arith.mulf %15, %15 : vector<104x784xf32>
    %cst_10 = arith.constant dense<0.000000e+00> : vector<104x1xf32>
    %20 = tpu.matmul %19, %5, %cst_10 {dimension_numbers = #tpu.dot_dimension_numbers<[1], [0], [0], [1], [0, 0, 1, 1], [], []>} : vector<104x784xf32>, vector<784x1xf32>, vector<104x1xf32> -> vector<104x1xf32>
    %cst_11 = arith.constant 0.00127551018 : f32
    %21 = vector.broadcast %cst_11 : f32 to vector<104x1xf32>
    %22 = arith.mulf %20, %21 : vector<104x1xf32>
    %23 = arith.mulf %18, %18 : vector<104x1xf32>
    %24 = arith.subf %22, %23 : vector<104x1xf32>
    %cst_12 = arith.constant 0.000000e+00 : f32
    %25 = vector.broadcast %cst_12 : f32 to vector<104x1xf32>
    %26 = arith.maximumf %24, %25 : vector<104x1xf32>
    %cst_13 = arith.constant 9.99999974E-6 : f32
    %27 = vector.broadcast %cst_13 : f32 to vector<104x1xf32>
    %28 = arith.addf %26, %27 : vector<104x1xf32>
    %29 = math.rsqrt %28 : vector<104x1xf32>
    %30 = arith.mulf %7, %29 : vector<104x1xf32>
    %31 = arith.mulf %18, %30 : vector<104x1xf32>
    %32 = arith.subf %8, %31 : vector<104x1xf32>
    %33 = vector.broadcast %30 : vector<104x1xf32> to vector<104x784xf32>
    %34 = arith.mulf %15, %33 : vector<104x784xf32>
    %35 = vector.broadcast %32 : vector<104x1xf32> to vector<104x784xf32>
    %36 = arith.addf %34, %35 : vector<104x784xf32>
    %c0_i32_14 = arith.constant 0 : i32
    %37 = tpu.memref_slice %arg9[%c0_i32_14] : memref<2x!tpu.dma_semaphore, #tpu.memory_space<semaphore_mem>> -> memref<1x!tpu.dma_semaphore, #tpu.memory_space<semaphore_mem>>
    %38 = tpu.memref_squeeze %37 : memref<1x!tpu.dma_semaphore, #tpu.memory_space<semaphore_mem>> -> memref<!tpu.dma_semaphore, #tpu.memory_space<semaphore_mem>>
    tpu.wait_dma2 semaphore(%38 : memref<!tpu.dma_semaphore, #tpu.memory_space<semaphore_mem>>) src(%arg2 : memref<104x784xf32, #tpu.memory_space<any>>) dst(%arg7 : memref<104x784xf32, #tpu.memory_space<vmem>>)
    %c0_15 = arith.constant 0 : index
    %c0_16 = arith.constant 0 : index
    %39 = vector.load %arg7[%c0_15, %c0_16] : memref<104x784xf32, #tpu.memory_space<vmem>>, vector<104x784xf32>
    %40 = arith.addf %39, %36 : vector<104x784xf32>
    %cst_17 = arith.constant 0.000000e+00 : f32
    %41 = vector.broadcast %cst_17 : f32 to vector<104x784xf32>
    %42 = arith.maximumf %40, %41 : vector<104x784xf32>
    %c1_i32_18 = arith.constant 1 : i32
    %43 = tpu.memref_slice %arg9[%c1_i32_18] : memref<2x!tpu.dma_semaphore, #tpu.memory_space<semaphore_mem>> -> memref<1x!tpu.dma_semaphore, #tpu.memory_space<semaphore_mem>>
    %44 = tpu.memref_squeeze %43 : memref<1x!tpu.dma_semaphore, #tpu.memory_space<semaphore_mem>> -> memref<!tpu.dma_semaphore, #tpu.memory_space<semaphore_mem>>
    tpu.wait_dma2 semaphore(%44 : memref<!tpu.dma_semaphore, #tpu.memory_space<semaphore_mem>>) src(%arg4 : memref<104x104xf32, #tpu.memory_space<any>>) dst(%arg8 : memref<104x104xf32, #tpu.memory_space<vmem>>)
    %c0_19 = arith.constant 0 : index
    %c0_20 = arith.constant 0 : index
    %45 = vector.load %arg8[%c0_19, %c0_20] : memref<104x104xf32, #tpu.memory_space<vmem>>, vector<104x104xf32>
    %cst_21 = arith.constant dense<0.000000e+00> : vector<104x784xf32>
    %46 = tpu.matmul %45, %42, %cst_21 {dimension_numbers = #tpu.dot_dimension_numbers<[1], [0], [0], [1], [0, 0, 1, 1], [], []>} : vector<104x104xf32>, vector<104x784xf32>, vector<104x784xf32> -> vector<104x784xf32>
    %cst_22 = arith.constant dense<0.000000e+00> : vector<104x1xf32>
    %47 = tpu.matmul %46, %5, %cst_22 {dimension_numbers = #tpu.dot_dimension_numbers<[1], [0], [0], [1], [0, 0, 1, 1], [], []>} : vector<104x784xf32>, vector<784x1xf32>, vector<104x1xf32> -> vector<104x1xf32>
    %cst_23 = arith.constant 0.00127551018 : f32
    %48 = vector.broadcast %cst_23 : f32 to vector<104x1xf32>
    %49 = arith.mulf %47, %48 : vector<104x1xf32>
    %50 = arith.mulf %46, %46 : vector<104x784xf32>
    %cst_24 = arith.constant dense<0.000000e+00> : vector<104x1xf32>
    %51 = tpu.matmul %50, %5, %cst_24 {dimension_numbers = #tpu.dot_dimension_numbers<[1], [0], [0], [1], [0, 0, 1, 1], [], []>} : vector<104x784xf32>, vector<784x1xf32>, vector<104x1xf32> -> vector<104x1xf32>
    %cst_25 = arith.constant 0.00127551018 : f32
    %52 = vector.broadcast %cst_25 : f32 to vector<104x1xf32>
    %53 = arith.mulf %51, %52 : vector<104x1xf32>
    %54 = arith.mulf %49, %49 : vector<104x1xf32>
    %55 = arith.subf %53, %54 : vector<104x1xf32>
    %cst_26 = arith.constant 0.000000e+00 : f32
    %56 = vector.broadcast %cst_26 : f32 to vector<104x1xf32>
    %57 = arith.maximumf %55, %56 : vector<104x1xf32>
    %cst_27 = arith.constant 9.99999974E-6 : f32
    %58 = vector.broadcast %cst_27 : f32 to vector<104x1xf32>
    %59 = arith.addf %57, %58 : vector<104x1xf32>
    %60 = math.rsqrt %59 : vector<104x1xf32>
    %61 = arith.mulf %9, %60 : vector<104x1xf32>
    %62 = arith.mulf %49, %61 : vector<104x1xf32>
    %63 = arith.subf %10, %62 : vector<104x1xf32>
    %64 = vector.broadcast %61 : vector<104x1xf32> to vector<104x784xf32>
    %65 = arith.mulf %46, %64 : vector<104x784xf32>
    %66 = vector.broadcast %63 : vector<104x1xf32> to vector<104x784xf32>
    %67 = arith.addf %65, %66 : vector<104x784xf32>
    %c0_28 = arith.constant 0 : index
    %c0_29 = arith.constant 0 : index
    %68 = vector.load %arg6[%c0_28, %c0_29] : memref<104x784xf32, #tpu.memory_space<vmem>>, vector<104x784xf32>
    tpu.vector_store %arg6[%c0_28, %c0_29], %67 {strides = array<i32>} : memref<104x784xf32, #tpu.memory_space<vmem>>, vector<104x784xf32>,
    return
  }
}

</mosaic_0001>

<llo_original>
// kernel: model_forward.1
$region0: #{model_forward.1}
  #allocation0 [shape = 'u32[]', space=smem, size = 0x4, offset = 0x4, fixed_abs, tag = 'smem constant byte address 0x4 - core index']
  #allocation1 [shape = 'u32[72,128]{1,0:T(1,128)}', space=vmem, size = 0x9000, scoped, tag = 'internal scratch']
  #allocation2 [shape = 'f32[104,784]{1,0:T(8,128)}', space=vmem, size = 0x5b000, scoped, tag = 'scratch operand']
  #allocation3 [shape = 'f32[104,104]{1,0:T(8,128)}', space=vmem, size = 0xd000, scoped, tag = 'scratch operand']
  #allocation4 [shape = 's32[2]{0}', space=sflag, size = 0x8, scoped, tag = 'scratch operand']
  #allocation5 [shape = 's32[]', space=sflag, size = 0x4, offset = 0, fixed_abs, tag = 'sflag constant byte address 0x0 - dummy sync flag']
  #allocation6 [shape = 's32[]', space=sflag, size = 0x4, offset = 0, fixed_abs, tag = 'sflag constant byte address 0x0 - dummy sync flag']
  %s0 = inlined_call_operand.vmem [shape: f32[1,104], index: 0, kind: input, shape index: {}]
  %s1 = inlined_call_operand.vmem [shape: f32[104,784], index: 1, kind: input, shape index: {}]
  %s2 = inlined_call_operand.vmem [shape: f32[104,784], index: 2, kind: input, shape index: {}]
  %s3 = inlined_call_operand.vmem [shape: f32[104,104], index: 3, kind: input, shape index: {}]
  %s4 = inlined_call_operand.vmem [shape: f32[104,104], index: 4, kind: input, shape index: {}]
  %s5 = inlined_call_operand.vmem [shape: f32[104,4], index: 5, kind: input, shape index: {}]
  %s6 = inlined_call_operand.vmem [shape: f32[104,784], index: 6, kind: output, shape index: {}]
  %s7 = sld [smem:[#allocation0]]
  $region64: #{model_forward.1} parent=0
    _
  %s9 = ssub.s32 1, %s7
  %s10 = scalar_select 0, %s9, %s7
  // Predicated region
  $region2: #{model_forward.1} parent=0 // pred_check
    _
  $region3: #{model_forward.1} parent=0 // pred_check_branch
    %12 = sbr.rel (0) target = $region5
  $region4: #{model_forward.1} parent=0 // pred_region
    _
  $region5: #{model_forward.1} parent=0 // pred_fallthru
    _
  // Predicated region
  $region6: #{model_forward.1} parent=0 // pred_check
    _
  $region7: #{model_forward.1} parent=0 // pred_check_branch
    %14 = sbr.rel (0) target = $region9
  $region8: #{model_forward.1} parent=0 // pred_region
    _
  $region9: #{model_forward.1} parent=0 // pred_fallthru
    _
  // Predicated region
  $region10: #{model_forward.1} parent=0 // pred_check
    _
  $region11: #{model_forward.1} parent=0 // pred_check_branch
    %16 = sbr.rel (0) target = $region13
  $region12: #{model_forward.1} parent=0 // pred_region
    _
  $region13: #{model_forward.1} parent=0 // pred_fallthru
    _
  // Predicated region
  $region14: #{model_forward.1} parent=0 // pred_check
    _
  $region15: #{model_forward.1} parent=0 // pred_check_branch
    %18 = sbr.rel (0) target = $region17
  $region16: #{model_forward.1} parent=0 // pred_region
    _
  $region17: #{model_forward.1} parent=0 // pred_fallthru
    _
  // Predicated region
  $region18: #{model_forward.1} parent=0 // pred_check
    _
  $region19: #{model_forward.1} parent=0 // pred_check_branch
    %20 = sbr.rel (0) target = $region21
  $region20: #{model_forward.1} parent=0 // pred_region
    loop: start=0, step=1, limit=1
    $region22: #{model_forward.1} parent=20 // loop_pre_header
      _
    $region23: #{model_forward.1} parent=20 // loop_header
      %s22 = sphi 0, %s26
      %p23 = scmp.ge.s32.totalorder %s22, 1
      %s27 = sphi %s2, %s2
      %s28 = sphi [#allocation2], [#allocation2]
    $region24: #{model_forward.1} parent=20 // loop_header_branch
      %25 = sbr.rel (%p23) target = $region28
    $region25: #{model_forward.1} parent=20 // loop_body
      %v29 = vld [vmem:[%s27] sm:$0xff]
      %30 = vst [vmem:[%s28] sm:$0xff] %v29
      %v31 = vld [vmem:[%s27 + $0x8] sm:$0xff]
      %32 = vst [vmem:[%s28 + $0x8] sm:$0xff] %v31
      %v33 = vld [vmem:[%s27 + $0x10] sm:$0xff]
      %34 = vst [vmem:[%s28 + $0x10] sm:$0xff] %v33
      %v35 = vld [vmem:[%s27 + $0x18] sm:$0xff]
      %36 = vst [vmem:[%s28 + $0x18] sm:$0xff] %v35
      %v37 = vld [vmem:[%s27 + $0x20] sm:$0xff]
      %38 = vst [vmem:[%s28 + $0x20] sm:$0xff] %v37
      %v39 = vld [vmem:[%s27 + $0x28] sm:$0xff]
      %40 = vst [vmem:[%s28 + $0x28] sm:$0xff] %v39
      %v41 = vld [vmem:[%s27 + $0x30] sm:$0xff]
      %42 = vst [vmem:[%s28 + $0x30] sm:$0xff] %v41
      %v43 = vld [vmem:[%s27 + $0x38] sm:$0xff]
      %44 = vst [vmem:[%s28 + $0x38] sm:$0xff] %v43
      %v45 = vld [vmem:[%s27 + $0x40] sm:$0xff]
      %46 = vst [vmem:[%s28 + $0x40] sm:$0xff] %v45
      %v47 = vld [vmem:[%s27 + $0x48] sm:$0xff]
      %48 = vst [vmem:[%s28 + $0x48] sm:$0xff] %v47
      %v49 = vld [vmem:[%s27 + $0x50] sm:$0xff]
      %50 = vst [vmem:[%s28 + $0x50] sm:$0xff] %v49
      %v51 = vld [vmem:[%s27 + $0x58] sm:$0xff]
      %52 = vst [vmem:[%s28 + $0x58] sm:$0xff] %v51
      %v53 = vld [vmem:[%s27 + $0x60] sm:$0xff]
      %54 = vst [vmem:[%s28 + $0x60] sm:$0xff] %v53
      %v55 = vld [vmem:[%s27 + $0x68] sm:$0xff]
      %56 = vst [vmem:[%s28 + $0x68] sm:$0xff] %v55
      %v57 = vld [vmem:[%s27 + $0x70] sm:$0xff]
      %58 = vst [vmem:[%s28 + $0x70] sm:$0xff] %v57
      %v59 = vld [vmem:[%s27 + $0x78] sm:$0xff]
      %60 = vst [vmem:[%s28 + $0x78] sm:$0xff] %v59
      %v61 = vld [vmem:[%s27 + $0x80] sm:$0xff]
      %62 = vst [vmem:[%s28 + $0x80] sm:$0xff] %v61
      %v63 = vld [vmem:[%s27 + $0x88] sm:$0xff]
      %64 = vst [vmem:[%s28 + $0x88] sm:$0xff] %v63
      %v65 = vld [vmem:[%s27 + $0x90] sm:$0xff]
      %66 = vst [vmem:[%s28 + $0x90] sm:$0xff] %v65
      %v67 = vld [vmem:[%s27 + $0x98] sm:$0xff]
      %68 = vst [vmem:[%s28 + $0x98] sm:$0xff] %v67
      %v69 = vld [vmem:[%s27 + $0xa0] sm:$0xff]
      %70 = vst [vmem:[%s28 + $0xa0] sm:$0xff] %v69
      %v71 = vld [vmem:[%s27 + $0xa8] sm:$0xff]
      %72 = vst [vmem:[%s28 + $0xa8] sm:$0xff] %v71
      %v73 = vld [vmem:[%s27 + $0xb0] sm:$0xff]
      %74 = vst [vmem:[%s28 + $0xb0] sm:$0xff] %v73
      %v75 = vld [vmem:[%s27 + $0xb8] sm:$0xff]
      %76 = vst [vmem:[%s28 + $0xb8] sm:$0xff] %v75
      %v77 = vld [vmem:[%s27 + $0xc0] sm:$0xff]
      %78 = vst [vmem:[%s28 + $0xc0] sm:$0xff] %v77
      %v79 = vld [vmem:[%s27 + $0xc8] sm:$0xff]
      %80 = vst [vmem:[%s28 + $0xc8] sm:$0xff] %v79
      %v81 = vld [vmem:[%s27 + $0xd0] sm:$0xff]
      %82 = vst [vmem:[%s28 + $0xd0] sm:$0xff] %v81
      %v83 = vld [vmem:[%s27 + $0xd8] sm:$0xff]
      %84 = vst [vmem:[%s28 + $0xd8] sm:$0xff] %v83
      %v85 = vld [vmem:[%s27 + $0xe0] sm:$0xff]
      %86 = vst [vmem:[%s28 + $0xe0] sm:$0xff] %v85
      %v87 = vld [vmem:[%s27 + $0xe8] sm:$0xff]
      %88 = vst [vmem:[%s28 + $0xe8] sm:$0xff] %v87
      %v89 = vld [vmem:[%s27 + $0xf0] sm:$0xff]
      %90 = vst [vmem:[%s28 + $0xf0] sm:$0xff] %v89
      %v91 = vld [vmem:[%s27 + $0xf8] sm:$0xff]
      %92 = vst [vmem:[%s28 + $0xf8] sm:$0xff] %v91
      %v93 = vld [vmem:[%s27 + $0x100] sm:$0xff]
      %94 = vst [vmem:[%s28 + $0x100] sm:$0xff] %v93
      %v95 = vld [vmem:[%s27 + $0x108] sm:$0xff]
      %96 = vst [vmem:[%s28 + $0x108] sm:$0xff] %v95
      %v97 = vld [vmem:[%s27 + $0x110] sm:$0xff]
      %98 = vst [vmem:[%s28 + $0x110] sm:$0xff] %v97
      %v99 = vld [vmem:[%s27 + $0x118] sm:$0xff]
      %100 = vst [vmem:[%s28 + $0x118] sm:$0xff] %v99
      %v101 = vld [vmem:[%s27 + $0x120] sm:$0xff]
      %102 = vst [vmem:[%s28 + $0x120] sm:$0xff] %v101
      %v103 = vld [vmem:[%s27 + $0x128] sm:$0xff]
      %104 = vst [vmem:[%s28 + $0x128] sm:$0xff] %v103
      %v105 = vld [vmem:[%s27 + $0x130] sm:$0xff]
      %106 = vst [vmem:[%s28 + $0x130] sm:$0xff] %v105
      %v107 = vld [vmem:[%s27 + $0x138] sm:$0xff]
      %108 = vst [vmem:[%s28 + $0x138] sm:$0xff] %v107
      %v109 = vld [vmem:[%s27 + $0x140] sm:$0xff]
      %110 = vst [vmem:[%s28 + $0x140] sm:$0xff] %v109
      %v111 = vld [vmem:[%s27 + $0x148] sm:$0xff]
      %112 = vst [vmem:[%s28 + $0x148] sm:$0xff] %v111
      %v113 = vld [vmem:[%s27 + $0x150] sm:$0xff]
      %114 = vst [vmem:[%s28 + $0x150] sm:$0xff] %v113
      %v115 = vld [vmem:[%s27 + $0x158] sm:$0xff]
      %116 = vst [vmem:[%s28 + $0x158] sm:$0xff] %v115
      %v117 = vld [vmem:[%s27 + $0x160] sm:$0xff]
      %118 = vst [vmem:[%s28 + $0x160] sm:$0xff] %v117
      %v119 = vld [vmem:[%s27 + $0x168] sm:$0xff]
      %120 = vst [vmem:[%s28 + $0x168] sm:$0xff] %v119
      %v121 = vld [vmem:[%s27 + $0x170] sm:$0xff]
      %122 = vst [vmem:[%s28 + $0x170] sm:$0xff] %v121
      %v123 = vld [vmem:[%s27 + $0x178] sm:$0xff]
      %124 = vst [vmem:[%s28 + $0x178] sm:$0xff] %v123
      %v125 = vld [vmem:[%s27 + $0x180] sm:$0xff]
      %126 = vst [vmem:[%s28 + $0x180] sm:$0xff] %v125
      %v127 = vld [vmem:[%s27 + $0x188] sm:$0xff]
      %128 = vst [vmem:[%s28 + $0x188] sm:$0xff] %v127
      %v129 = vld [vmem:[%s27 + $0x190] sm:$0xff]
      %130 = vst [vmem:[%s28 + $0x190] sm:$0xff] %v129
      %v131 = vld [vmem:[%s27 + $0x198] sm:$0xff]
      %132 = vst [vmem:[%s28 + $0x198] sm:$0xff] %v131
      %v133 = vld [vmem:[%s27 + $0x1a0] sm:$0xff]
      %134 = vst [vmem:[%s28 + $0x1a0] sm:$0xff] %v133
      %v135 = vld [vmem:[%s27 + $0x1a8] sm:$0xff]
      %136 = vst [vmem:[%s28 + $0x1a8] sm:$0xff] %v135
      %v137 = vld [vmem:[%s27 + $0x1b0] sm:$0xff]
      %138 = vst [vmem:[%s28 + $0x1b0] sm:$0xff] %v137
      %v139 = vld [vmem:[%s27 + $0x1b8] sm:$0xff]
      %140 = vst [vmem:[%s28 + $0x1b8] sm:$0xff] %v139
      %v141 = vld [vmem:[%s27 + $0x1c0] sm:$0xff]
      %142 = vst [vmem:[%s28 + $0x1c0] sm:$0xff] %v141
      %v143 = vld [vmem:[%s27 + $0x1c8] sm:$0xff]
      %144 = vst [vmem:[%s28 + $0x1c8] sm:$0xff] %v143
      %v145 = vld [vmem:[%s27 + $0x1d0] sm:$0xff]
      %146 = vst [vmem:[%s28 + $0x1d0] sm:$0xff] %v145
      %v147 = vld [vmem:[%s27 + $0x1d8] sm:$0xff]
      %148 = vst [vmem:[%s28 + $0x1d8] sm:$0xff] %v147
      %v149 = vld [vmem:[%s27 + $0x1e0] sm:$0xff]
      %150 = vst [vmem:[%s28 + $0x1e0] sm:$0xff] %v149
      %v151 = vld [vmem:[%s27 + $0x1e8] sm:$0xff]
      %152 = vst [vmem:[%s28 + $0x1e8] sm:$0xff] %v151
      %v153 = vld [vmem:[%s27 + $0x1f0] sm:$0xff]
      %154 = vst [vmem:[%s28 + $0x1f0] sm:$0xff] %v153
      %v155 = vld [vmem:[%s27 + $0x1f8] sm:$0xff]
      %156 = vst [vmem:[%s28 + $0x1f8] sm:$0xff] %v155
      %v157 = vld [vmem:[%s27 + $0x200] sm:$0xff]
      %158 = vst [vmem:[%s28 + $0x200] sm:$0xff] %v157
      %v159 = vld [vmem:[%s27 + $0x208] sm:$0xff]
      %160 = vst [vmem:[%s28 + $0x208] sm:$0xff] %v159
      %v161 = vld [vmem:[%s27 + $0x210] sm:$0xff]
      %162 = vst [vmem:[%s28 + $0x210] sm:$0xff] %v161
      %v163 = vld [vmem:[%s27 + $0x218] sm:$0xff]
      %164 = vst [vmem:[%s28 + $0x218] sm:$0xff] %v163
      %v165 = vld [vmem:[%s27 + $0x220] sm:$0xff]
      %166 = vst [vmem:[%s28 + $0x220] sm:$0xff] %v165
      %v167 = vld [vmem:[%s27 + $0x228] sm:$0xff]
      %168 = vst [vmem:[%s28 + $0x228] sm:$0xff] %v167
      %v169 = vld [vmem:[%s27 + $0x230] sm:$0xff]
      %170 = vst [vmem:[%s28 + $0x230] sm:$0xff] %v169
      %v171 = vld [vmem:[%s27 + $0x238] sm:$0xff]
      %172 = vst [vmem:[%s28 + $0x238] sm:$0xff] %v171
      %v173 = vld [vmem:[%s27 + $0x240] sm:$0xff]
      %174 = vst [vmem:[%s28 + $0x240] sm:$0xff] %v173
      %v175 = vld [vmem:[%s27 + $0x248] sm:$0xff]
      %176 = vst [vmem:[%s28 + $0x248] sm:$0xff] %v175
      %v177 = vld [vmem:[%s27 + $0x250] sm:$0xff]
      %178 = vst [vmem:[%s28 + $0x250] sm:$0xff] %v177
      %v179 = vld [vmem:[%s27 + $0x258] sm:$0xff]
      %180 = vst [vmem:[%s28 + $0x258] sm:$0xff] %v179
      %v181 = vld [vmem:[%s27 + $0x260] sm:$0xff]
      %182 = vst [vmem:[%s28 + $0x260] sm:$0xff] %v181
      %v183 = vld [vmem:[%s27 + $0x268] sm:$0xff]
      %184 = vst [vmem:[%s28 + $0x268] sm:$0xff] %v183
      %v185 = vld [vmem:[%s27 + $0x270] sm:$0xff]
      %186 = vst [vmem:[%s28 + $0x270] sm:$0xff] %v185
      %v187 = vld [vmem:[%s27 + $0x278] sm:$0xff]
      %188 = vst [vmem:[%s28 + $0x278] sm:$0xff] %v187
      %v189 = vld [vmem:[%s27 + $0x280] sm:$0xff]
      %190 = vst [vmem:[%s28 + $0x280] sm:$0xff] %v189
      %v191 = vld [vmem:[%s27 + $0x288] sm:$0xff]
      %192 = vst [vmem:[%s28 + $0x288] sm:$0xff] %v191
      %v193 = vld [vmem:[%s27 + $0x290] sm:$0xff]
      %194 = vst [vmem:[%s28 + $0x290] sm:$0xff] %v193
      %v195 = vld [vmem:[%s27 + $0x298] sm:$0xff]
      %196 = vst [vmem:[%s28 + $0x298] sm:$0xff] %v195
      %v197 = vld [vmem:[%s27 + $0x2a0] sm:$0xff]
      %198 = vst [vmem:[%s28 + $0x2a0] sm:$0xff] %v197
      %v199 = vld [vmem:[%s27 + $0x2a8] sm:$0xff]
      %200 = vst [vmem:[%s28 + $0x2a8] sm:$0xff] %v199
      %v201 = vld [vmem:[%s27 + $0x2b0] sm:$0xff]
      %202 = vst [vmem:[%s28 + $0x2b0] sm:$0xff] %v201
      %v203 = vld [vmem:[%s27 + $0x2b8] sm:$0xff]
      %204 = vst [vmem:[%s28 + $0x2b8] sm:$0xff] %v203
      %v205 = vld [vmem:[%s27 + $0x2c0] sm:$0xff]
      %206 = vst [vmem:[%s28 + $0x2c0] sm:$0xff] %v205
      %v207 = vld [vmem:[%s27 + $0x2c8] sm:$0xff]
      %208 = vst [vmem:[%s28 + $0x2c8] sm:$0xff] %v207
      %v209 = vld [vmem:[%s27 + $0x2d0] sm:$0xff]
      %210 = vst [vmem:[%s28 + $0x2d0] sm:$0xff] %v209
    $region26: #{model_forward.1} parent=20 // loop_footer
      %s26 = sadd.s32 1, %s22
    $region27: #{model_forward.1} parent=20 // loop_footer_branch
      %21 = sbr.rel target = $region23
    $region28: #{model_forward.1} parent=20 // loop_exit
      _
  $region21: #{model_forward.1} parent=0 // pred_fallthru
    _
  // Predicated region
  $region29: #{model_forward.1} parent=0 // pred_check
    _
  $region30: #{model_forward.1} parent=0 // pred_check_branch
    %212 = sbr.rel target = $region32
  $region31: #{model_forward.1} parent=0 // pred_region
    _
  $region32: #{model_forward.1} parent=0 // pred_fallthru
    _
  // Predicated region
  $region33: #{model_forward.1} parent=0 // pred_check
    _
  $region34: #{model_forward.1} parent=0 // pred_check_branch
    %215 = sbr.rel (0) target = $region36
  $region35: #{model_forward.1} parent=0 // pred_region
    %216 = vsyncadd [#allocation4], 11648
  $region36: #{model_forward.1} parent=0 // pred_fallthru
    _
  %s217 = scalar_lea.sflag [#allocation4], 1
  // Predicated region
  $region37: #{model_forward.1} parent=0 // pred_check
    _
  $region38: #{model_forward.1} parent=0 // pred_check_branch
    %219 = sbr.rel (0) target = $region40
  $region39: #{model_forward.1} parent=0 // pred_region
    loop: start=0, step=1, limit=1
    $region41: #{model_forward.1} parent=39 // loop_pre_header
      _
    $region42: #{model_forward.1} parent=39 // loop_header
      %s221 = sphi 0, %s225
      %p222 = scmp.ge.s32.totalorder %s221, 1
      %s226 = sphi %s4, %s4
      %s227 = sphi [#allocation3], [#allocation3]
    $region43: #{model_forward.1} parent=39 // loop_header_branch
      %224 = sbr.rel (%p222) target = $region47
    $region44: #{model_forward.1} parent=39 // loop_body
      %v228 = vld [vmem:[%s226] sm:$0xff]
      %229 = vst [vmem:[%s227] sm:$0xff] %v228
      %v230 = vld [vmem:[%s226 + $0x8] sm:$0xff]
      %231 = vst [vmem:[%s227 + $0x8] sm:$0xff] %v230
      %v232 = vld [vmem:[%s226 + $0x10] sm:$0xff]
      %233 = vst [vmem:[%s227 + $0x10] sm:$0xff] %v232
      %v234 = vld [vmem:[%s226 + $0x18] sm:$0xff]
      %235 = vst [vmem:[%s227 + $0x18] sm:$0xff] %v234
      %v236 = vld [vmem:[%s226 + $0x20] sm:$0xff]
      %237 = vst [vmem:[%s227 + $0x20] sm:$0xff] %v236
      %v238 = vld [vmem:[%s226 + $0x28] sm:$0xff]
      %239 = vst [vmem:[%s227 + $0x28] sm:$0xff] %v238
      %v240 = vld [vmem:[%s226 + $0x30] sm:$0xff]
      %241 = vst [vmem:[%s227 + $0x30] sm:$0xff] %v240
      %v242 = vld [vmem:[%s226 + $0x38] sm:$0xff]
      %243 = vst [vmem:[%s227 + $0x38] sm:$0xff] %v242
      %v244 = vld [vmem:[%s226 + $0x40] sm:$0xff]
      %245 = vst [vmem:[%s227 + $0x40] sm:$0xff] %v244
      %v246 = vld [vmem:[%s226 + $0x48] sm:$0xff]
      %247 = vst [vmem:[%s227 + $0x48] sm:$0xff] %v246
      %v248 = vld [vmem:[%s226 + $0x50] sm:$0xff]
      %249 = vst [vmem:[%s227 + $0x50] sm:$0xff] %v248
      %v250 = vld [vmem:[%s226 + $0x58] sm:$0xff]
      %251 = vst [vmem:[%s227 + $0x58] sm:$0xff] %v250
      %v252 = vld [vmem:[%s226 + $0x60] sm:$0xff]
      %253 = vst [vmem:[%s227 + $0x60] sm:$0xff] %v252
    $region45: #{model_forward.1} parent=39 // loop_footer
      %s225 = sadd.s32 1, %s221
    $region46: #{model_forward.1} parent=39 // loop_footer_branch
      %220 = sbr.rel target = $region42
    $region47: #{model_forward.1} parent=39 // loop_exit
      _
  $region40: #{model_forward.1} parent=0 // pred_fallthru
    _
  // Predicated region
  $region48: #{model_forward.1} parent=0 // pred_check
    _
  $region49: #{model_forward.1} parent=0 // pred_check_branch
    %255 = sbr.rel target = $region51
  $region50: #{model_forward.1} parent=0 // pred_region
    _
  $region51: #{model_forward.1} parent=0 // pred_fallthru
    _
  // Predicated region
  $region52: #{model_forward.1} parent=0 // pred_check
    _
  $region53: #{model_forward.1} parent=0 // pred_check_branch
    %258 = sbr.rel (0) target = $region55
  $region54: #{model_forward.1} parent=0 // pred_region
    %259 = vsyncadd %s217, 1664
  $region55: #{model_forward.1} parent=0 // pred_fallthru
    _
  %v260 = vld [vmem:[%s1] sm:$0xff]
  %v261 = vld [vmem:[%s1 + $0x8] sm:$0xff]
  %v262 = vld [vmem:[%s1 + $0x10] sm:$0xff]
  %v263 = vld [vmem:[%s1 + $0x18] sm:$0xff]
  %v264 = vld [vmem:[%s1 + $0x20] sm:$0xff]
  %v265 = vld [vmem:[%s1 + $0x28] sm:$0xff]
  %v266 = vld [vmem:[%s1 + $0x30] sm:$0xff]
  %v267 = vld [vmem:[%s1 + $0x38] sm:$0xff]
  %v268 = vld [vmem:[%s1 + $0x40] sm:$0xff]
  %v269 = vld [vmem:[%s1 + $0x48] sm:$0xff]
  %v270 = vld [vmem:[%s1 + $0x50] sm:$0xff]
  %v271 = vld [vmem:[%s1 + $0x58] sm:$0xff]
  %v272 = vld [vmem:[%s1 + $0x60] sm:$0xff]
  %v273 = vld [vmem:[%s1 + $0x68] sm:$0xff]
  %v274 = vld [vmem:[%s1 + $0x70] sm:$0xff]
  %v275 = vld [vmem:[%s1 + $0x78] sm:$0xff]
  %v276 = vld [vmem:[%s1 + $0x80] sm:$0xff]
  %v277 = vld [vmem:[%s1 + $0x88] sm:$0xff]
  %v278 = vld [vmem:[%s1 + $0x90] sm:$0xff]
  %v279 = vld [vmem:[%s1 + $0x98] sm:$0xff]
  %v280 = vld [vmem:[%s1 + $0xa0] sm:$0xff]
  %v281 = vld [vmem:[%s1 + $0xa8] sm:$0xff]
  %v282 = vld [vmem:[%s1 + $0xb0] sm:$0xff]
  %v283 = vld [vmem:[%s1 + $0xb8] sm:$0xff]
  %v284 = vld [vmem:[%s1 + $0xc0] sm:$0xff]
  %v285 = vld [vmem:[%s1 + $0xc8] sm:$0xff]
  %v286 = vld [vmem:[%s1 + $0xd0] sm:$0xff]
  %v287 = vld [vmem:[%s1 + $0xd8] sm:$0xff]
  %v288 = vld [vmem:[%s1 + $0xe0] sm:$0xff]
  %v289 = vld [vmem:[%s1 + $0xe8] sm:$0xff]
  %v290 = vld [vmem:[%s1 + $0xf0] sm:$0xff]
  %v291 = vld [vmem:[%s1 + $0xf8] sm:$0xff]
  %v292 = vld [vmem:[%s1 + $0x100] sm:$0xff]
  %v293 = vld [vmem:[%s1 + $0x108] sm:$0xff]
  %v294 = vld [vmem:[%s1 + $0x110] sm:$0xff]
  %v295 = vld [vmem:[%s1 + $0x118] sm:$0xff]
  %v296 = vld [vmem:[%s1 + $0x120] sm:$0xff]
  %v297 = vld [vmem:[%s1 + $0x128] sm:$0xff]
  %v298 = vld [vmem:[%s1 + $0x130] sm:$0xff]
  %v299 = vld [vmem:[%s1 + $0x138] sm:$0xff]
  %v300 = vld [vmem:[%s1 + $0x140] sm:$0xff]
  %v301 = vld [vmem:[%s1 + $0x148] sm:$0xff]
  %v302 = vld [vmem:[%s1 + $0x150] sm:$0xff]
  %v303 = vld [vmem:[%s1 + $0x158] sm:$0xff]
  %v304 = vld [vmem:[%s1 + $0x160] sm:$0xff]
  %v305 = vld [vmem:[%s1 + $0x168] sm:$0xff]
  %v306 = vld [vmem:[%s1 + $0x170] sm:$0xff]
  %v307 = vld [vmem:[%s1 + $0x178] sm:$0xff]
  %v308 = vld [vmem:[%s1 + $0x180] sm:$0xff]
  %v309 = vld [vmem:[%s1 + $0x188] sm:$0xff]
  %v310 = vld [vmem:[%s1 + $0x190] sm:$0xff]
  %v311 = vld [vmem:[%s1 + $0x198] sm:$0xff]
  %v312 = vld [vmem:[%s1 + $0x1a0] sm:$0xff]
  %v313 = vld [vmem:[%s1 + $0x1a8] sm:$0xff]
  %v314 = vld [vmem:[%s1 + $0x1b0] sm:$0xff]
  %v315 = vld [vmem:[%s1 + $0x1b8] sm:$0xff]
  %v316 = vld [vmem:[%s1 + $0x1c0] sm:$0xff]
  %v317 = vld [vmem:[%s1 + $0x1c8] sm:$0xff]
  %v318 = vld [vmem:[%s1 + $0x1d0] sm:$0xff]
  %v319 = vld [vmem:[%s1 + $0x1d8] sm:$0xff]
  %v320 = vld [vmem:[%s1 + $0x1e0] sm:$0xff]
  %v321 = vld [vmem:[%s1 + $0x1e8] sm:$0xff]
  %v322 = vld [vmem:[%s1 + $0x1f0] sm:$0xff]
  %v323 = vld [vmem:[%s1 + $0x1f8] sm:$0xff]
  %v324 = vld [vmem:[%s1 + $0x200] sm:$0xff]
  %v325 = vld [vmem:[%s1 + $0x208] sm:$0xff]
  %v326 = vld [vmem:[%s1 + $0x210] sm:$0xff]
  %v327 = vld [vmem:[%s1 + $0x218] sm:$0xff]
  %v328 = vld [vmem:[%s1 + $0x220] sm:$0xff]
  %v329 = vld [vmem:[%s1 + $0x228] sm:$0xff]
  %v330 = vld [vmem:[%s1 + $0x230] sm:$0xff]
  %v331 = vld [vmem:[%s1 + $0x238] sm:$0xff]
  %v332 = vld [vmem:[%s1 + $0x240] sm:$0xff]
  %v333 = vld [vmem:[%s1 + $0x248] sm:$0xff]
  %v334 = vld [vmem:[%s1 + $0x250] sm:$0xff]
  %v335 = vld [vmem:[%s1 + $0x258] sm:$0xff]
  %v336 = vld [vmem:[%s1 + $0x260] sm:$0xff]
  %v337 = vld [vmem:[%s1 + $0x268] sm:$0xff]
  %v338 = vld [vmem:[%s1 + $0x270] sm:$0xff]
  %v339 = vld [vmem:[%s1 + $0x278] sm:$0xff]
  %v340 = vld [vmem:[%s1 + $0x280] sm:$0xff]
  %v341 = vld [vmem:[%s1 + $0x288] sm:$0xff]
  %v342 = vld [vmem:[%s1 + $0x290] sm:$0xff]
  %v343 = vld [vmem:[%s1 + $0x298] sm:$0xff]
  %v344 = vld [vmem:[%s1 + $0x2a0] sm:$0xff]
  %v345 = vld [vmem:[%s1 + $0x2a8] sm:$0xff]
  %v346 = vld [vmem:[%s1 + $0x2b0] sm:$0xff]
  %v347 = vld [vmem:[%s1 + $0x2b8] sm:$0xff]
  %v348 = vld [vmem:[%s1 + $0x2c0] sm:$0xff]
  %v349 = vld [vmem:[%s1 + $0x2c8] sm:$0xff]
  %v350 = vld [vmem:[%s1 + $0x2d0] sm:$0xff]
  %v351 = vld [vmem:[%s5] sm:$0xff]
  %v352 = vld [vmem:[%s5 + $0x8] sm:$0xff]
  %v353 = vld [vmem:[%s5 + $0x10] sm:$0xff]
  %v354 = vld [vmem:[%s5 + $0x18] sm:$0xff]
  %v355 = vld [vmem:[%s5 + $0x20] sm:$0xff]
  %v356 = vld [vmem:[%s5 + $0x28] sm:$0xff]
  %v357 = vld [vmem:[%s5 + $0x30] sm:$0xff]
  %v358 = vld [vmem:[%s5 + $0x38] sm:$0xff]
  %v359 = vld [vmem:[%s5 + $0x40] sm:$0xff]
  %v360 = vld [vmem:[%s5 + $0x48] sm:$0xff]
  %v361 = vld [vmem:[%s5 + $0x50] sm:$0xff]
  %v362 = vld [vmem:[%s5 + $0x58] sm:$0xff]
  %v363 = vld [vmem:[%s5 + $0x60] sm:$0xff]
  %v364 = vld [vmem:[%s3] sm:$0xff]
  %v365 = vld [vmem:[%s3 + $0x8] sm:$0xff]
  %v366 = vld [vmem:[%s3 + $0x10] sm:$0xff]
  %v367 = vld [vmem:[%s3 + $0x18] sm:$0xff]
  %v368 = vld [vmem:[%s3 + $0x20] sm:$0xff]
  %v369 = vld [vmem:[%s3 + $0x28] sm:$0xff]
  %v370 = vld [vmem:[%s3 + $0x30] sm:$0xff]
  %v371 = vld [vmem:[%s3 + $0x38] sm:$0xff]
  %v372 = vld [vmem:[%s3 + $0x40] sm:$0xff]
  %v373 = vld [vmem:[%s3 + $0x48] sm:$0xff]
  %v374 = vld [vmem:[%s3 + $0x50] sm:$0xff]
  %v375 = vld [vmem:[%s3 + $0x58] sm:$0xff]
  %v376 = vld [vmem:[%s3 + $0x60] sm:$0xff]
  %v377 = vld [vmem:[%s0] sm:$0x1]
  %v379 = vperm.slane %v377, 0
  %v381 = vmul.f32 %v364, %v379
  %v382 = vmul.f32 %v365, %v379
  %v383 = vmul.f32 %v366, %v379
  %v384 = vmul.f32 %v367, %v379
  %v385 = vmul.f32 %v368, %v379
  %v386 = vmul.f32 %v369, %v379
  %v387 = vmul.f32 %v370, %v379
  %v388 = vmul.f32 %v371, %v379
  %v389 = vmul.f32 %v372, %v379
  %v390 = vmul.f32 %v373, %v379
  %v391 = vmul.f32 %v374, %v379
  %v392 = vmul.f32 %v375, %v379
  %v393 = vmul.f32 %v376, %v379
  %vm394 = vcmask 850944
  %v396 = vsel %vm394, %v381, 0
  %v399 = vsel %vm394, %v382, 0
  %v402 = vsel %vm394, %v383, 0
  %v405 = vsel %vm394, %v384, 0
  %v408 = vsel %vm394, %v385, 0
  %v411 = vsel %vm394, %v386, 0
  %v414 = vsel %vm394, %v387, 0
  %v417 = vsel %vm394, %v388, 0
  %v420 = vsel %vm394, %v389, 0
  %v423 = vsel %vm394, %v390, 0
  %v426 = vsel %vm394, %v391, 0
  %v429 = vsel %vm394, %v392, 0
  %v432 = vsel %vm394, %v393, 0
  %434 = vmatpush.msra.mxu0 0.0
  %435 = vmatpush.msra.mxu0 0.0
  %436 = vmatpush.msra.mxu0 0.0
  %437 = vmatpush.msra.mxu0 %v344
  %438 = vmatpush.msra.mxu0 %v337
  %439 = vmatpush.msra.mxu0 %v330
  %440 = vmatpush.msra.mxu0 %v323
  %441 = vmatpush.msra.mxu0 %v316
  %442 = vmatpush.msra.mxu0 %v309
  %443 = vmatpush.msra.mxu0 %v302
  %444 = vmatpush.msra.mxu0 %v295
  %445 = vmatpush.msra.mxu0 %v288
  %446 = vmatpush.msra.mxu0 %v281
  %447 = vmatpush.msra.mxu0 %v274
  %448 = vmatpush.msra.mxu0 %v267
  %449 = vmatpush.msra.mxu0 %v260
  %450 = vmatmul.f32.gmra.mxu0 %v396
  %v451 = vpop.f32.mrf.mxu0
  %v452 = vadd.f32 0.0, %v451
  %453 = vmatmul.f32.gmra.mxu0 %v399
  %v454 = vpop.f32.mrf.mxu0
  %v455 = vadd.f32 0.0, %v454
  %456 = vmatmul.f32.gmra.mxu0 %v402
  %v457 = vpop.f32.mrf.mxu0
  %v458 = vadd.f32 0.0, %v457
  %459 = vmatmul.f32.gmra.mxu0 %v405
  %v460 = vpop.f32.mrf.mxu0
  %v461 = vadd.f32 0.0, %v460
  %462 = vmatmul.f32.gmra.mxu0 %v408
  %v463 = vpop.f32.mrf.mxu0
  %v464 = vadd.f32 0.0, %v463
  %465 = vmatmul.f32.gmra.mxu0 %v411
  %v466 = vpop.f32.mrf.mxu0
  %v467 = vadd.f32 0.0, %v466
  %468 = vmatmul.f32.gmra.mxu0 %v414
  %v469 = vpop.f32.mrf.mxu0
  %v470 = vadd.f32 0.0, %v469
  %471 = vmatmul.f32.gmra.mxu0 %v417
  %v472 = vpop.f32.mrf.mxu0
  %v473 = vadd.f32 0.0, %v472
  %474 = vmatmul.f32.gmra.mxu0 %v420
  %v475 = vpop.f32.mrf.mxu0
  %v476 = vadd.f32 0.0, %v475
  %477 = vmatmul.f32.gmra.mxu0 %v423
  %v478 = vpop.f32.mrf.mxu0
  %v479 = vadd.f32 0.0, %v478
  %480 = vmatmul.f32.gmra.mxu0 %v426
  %v481 = vpop.f32.mrf.mxu0
  %v482 = vadd.f32 0.0, %v481
  %483 = vmatmul.f32.gmra.mxu0 %v429
  %v484 = vpop.f32.mrf.mxu0
  %v485 = vadd.f32 0.0, %v484
  %486 = vmatmul.f32.gmra.mxu0 %v432
  %v487 = vpop.f32.mrf.mxu0
  %v488 = vadd.f32 0.0, %v487
  %489 = vdwg.mxu0
  %490 = vmatpush.msra.mxu0 0.0
  %491 = vmatpush.msra.mxu0 0.0
  %492 = vmatpush.msra.mxu0 0.0
  %493 = vmatpush.msra.mxu0 %v345
  %494 = vmatpush.msra.mxu0 %v338
  %495 = vmatpush.msra.mxu0 %v331
  %496 = vmatpush.msra.mxu0 %v324
  %497 = vmatpush.msra.mxu0 %v317
  %498 = vmatpush.msra.mxu0 %v310
  %499 = vmatpush.msra.mxu0 %v303
  %500 = vmatpush.msra.mxu0 %v296
  %501 = vmatpush.msra.mxu0 %v289
  %502 = vmatpush.msra.mxu0 %v282
  %503 = vmatpush.msra.mxu0 %v275
  %504 = vmatpush.msra.mxu0 %v268
  %505 = vmatpush.msra.mxu0 %v261
  %506 = vmatmul.f32.gmra.mxu0 %v396
  %v507 = vpop.f32.mrf.mxu0
  %v508 = vadd.f32 0.0, %v507
  %509 = vmatmul.f32.gmra.mxu0 %v399
  %v510 = vpop.f32.mrf.mxu0
  %v511 = vadd.f32 0.0, %v510
  %512 = vmatmul.f32.gmra.mxu0 %v402
  %v513 = vpop.f32.mrf.mxu0
  %v514 = vadd.f32 0.0, %v513
  %515 = vmatmul.f32.gmra.mxu0 %v405
  %v516 = vpop.f32.mrf.mxu0
  %v517 = vadd.f32 0.0, %v516
  %518 = vmatmul.f32.gmra.mxu0 %v408
  %v519 = vpop.f32.mrf.mxu0
  %v520 = vadd.f32 0.0, %v519
  %521 = vmatmul.f32.gmra.mxu0 %v411
  %v522 = vpop.f32.mrf.mxu0
  %v523 = vadd.f32 0.0, %v522
  %524 = vmatmul.f32.gmra.mxu0 %v414
  %v525 = vpop.f32.mrf.mxu0
  %v526 = vadd.f32 0.0, %v525
  %527 = vmatmul.f32.gmra.mxu0 %v417
  %v528 = vpop.f32.mrf.mxu0
  %v529 = vadd.f32 0.0, %v528
  %530 = vmatmul.f32.gmra.mxu0 %v420
  %v531 = vpop.f32.mrf.mxu0
  %v532 = vadd.f32 0.0, %v531
  %533 = vmatmul.f32.gmra.mxu0 %v423
  %v534 = vpop.f32.mrf.mxu0
  %v535 = vadd.f32 0.0, %v534
  %536 = vmatmul.f32.gmra.mxu0 %v426
  %v537 = vpop.f32.mrf.mxu0
  %v538 = vadd.f32 0.0, %v537
  %539 = vmatmul.f32.gmra.mxu0 %v429
  %v540 = vpop.f32.mrf.mxu0
  %v541 = vadd.f32 0.0, %v540
  %542 = vmatmul.f32.gmra.mxu0 %v432
  %v543 = vpop.f32.mrf.mxu0
  %v544 = vadd.f32 0.0, %v543
  %545 = vdwg.mxu0
  %546 = vmatpush.msra.mxu0 0.0
  %547 = vmatpush.msra.mxu0 0.0
  %548 = vmatpush.msra.mxu0 0.0
  %549 = vmatpush.msra.mxu0 %v346
  %550 = vmatpush.msra.mxu0 %v339
  %551 = vmatpush.msra.mxu0 %v332
  %552 = vmatpush.msra.mxu0 %v325
  %553 = vmatpush.msra.mxu0 %v318
  %554 = vmatpush.msra.mxu0 %v311
  %555 = vmatpush.msra.mxu0 %v304
  %556 = vmatpush.msra.mxu0 %v297
  %557 = vmatpush.msra.mxu0 %v290
  %558 = vmatpush.msra.mxu0 %v283
  %559 = vmatpush.msra.mxu0 %v276
  %560 = vmatpush.msra.mxu0 %v269
  %561 = vmatpush.msra.mxu0 %v262
  %562 = vmatmul.f32.gmra.mxu0 %v396
  %v563 = vpop.f32.mrf.mxu0
  %v564 = vadd.f32 0.0, %v563
  %565 = vmatmul.f32.gmra.mxu0 %v399
  %v566 = vpop.f32.mrf.mxu0
  %v567 = vadd.f32 0.0, %v566
  %568 = vmatmul.f32.gmra.mxu0 %v402
  %v569 = vpop.f32.mrf.mxu0
  %v570 = vadd.f32 0.0, %v569
  %571 = vmatmul.f32.gmra.mxu0 %v405
  %v572 = vpop.f32.mrf.mxu0
  %v573 = vadd.f32 0.0, %v572
  %574 = vmatmul.f32.gmra.mxu0 %v408
  %v575 = vpop.f32.mrf.mxu0
  %v576 = vadd.f32 0.0, %v575
  %577 = vmatmul.f32.gmra.mxu0 %v411
  %v578 = vpop.f32.mrf.mxu0
  %v579 = vadd.f32 0.0, %v578
  %580 = vmatmul.f32.gmra.mxu0 %v414
  %v581 = vpop.f32.mrf.mxu0
  %v582 = vadd.f32 0.0, %v581
  %583 = vmatmul.f32.gmra.mxu0 %v417
  %v584 = vpop.f32.mrf.mxu0
  %v585 = vadd.f32 0.0, %v584
  %586 = vmatmul.f32.gmra.mxu0 %v420
  %v587 = vpop.f32.mrf.mxu0
  %v588 = vadd.f32 0.0, %v587
  %589 = vmatmul.f32.gmra.mxu0 %v423
  %v590 = vpop.f32.mrf.mxu0
  %v591 = vadd.f32 0.0, %v590
  %592 = vmatmul.f32.gmra.mxu0 %v426
  %v593 = vpop.f32.mrf.mxu0
  %v594 = vadd.f32 0.0, %v593
  %595 = vmatmul.f32.gmra.mxu0 %v429
  %v596 = vpop.f32.mrf.mxu0
  %v597 = vadd.f32 0.0, %v596
  %598 = vmatmul.f32.gmra.mxu0 %v432
  %v599 = vpop.f32.mrf.mxu0
  %v600 = vadd.f32 0.0, %v599
  %601 = vdwg.mxu0
  %602 = vmatpush.msra.mxu0 0.0
  %603 = vmatpush.msra.mxu0 0.0
  %604 = vmatpush.msra.mxu0 0.0
  %605 = vmatpush.msra.mxu0 %v347
  %606 = vmatpush.msra.mxu0 %v340
  %607 = vmatpush.msra.mxu0 %v333
  %608 = vmatpush.msra.mxu0 %v326
  %609 = vmatpush.msra.mxu0 %v319
  %610 = vmatpush.msra.mxu0 %v312
  %611 = vmatpush.msra.mxu0 %v305
  %612 = vmatpush.msra.mxu0 %v298
  %613 = vmatpush.msra.mxu0 %v291
  %614 = vmatpush.msra.mxu0 %v284
  %615 = vmatpush.msra.mxu0 %v277
  %616 = vmatpush.msra.mxu0 %v270
  %617 = vmatpush.msra.mxu0 %v263
  %618 = vmatmul.f32.gmra.mxu0 %v396
  %v619 = vpop.f32.mrf.mxu0
  %v620 = vadd.f32 0.0, %v619
  %621 = vmatmul.f32.gmra.mxu0 %v399
  %v622 = vpop.f32.mrf.mxu0
  %v623 = vadd.f32 0.0, %v622
  %624 = vmatmul.f32.gmra.mxu0 %v402
  %v625 = vpop.f32.mrf.mxu0
  %v626 = vadd.f32 0.0, %v625
  %627 = vmatmul.f32.gmra.mxu0 %v405
  %v628 = vpop.f32.mrf.mxu0
  %v629 = vadd.f32 0.0, %v628
  %630 = vmatmul.f32.gmra.mxu0 %v408
  %v631 = vpop.f32.mrf.mxu0
  %v632 = vadd.f32 0.0, %v631
  %633 = vmatmul.f32.gmra.mxu0 %v411
  %v634 = vpop.f32.mrf.mxu0
  %v635 = vadd.f32 0.0, %v634
  %636 = vmatmul.f32.gmra.mxu0 %v414
  %v637 = vpop.f32.mrf.mxu0
  %v638 = vadd.f32 0.0, %v637
  %639 = vmatmul.f32.gmra.mxu0 %v417
  %v640 = vpop.f32.mrf.mxu0
  %v641 = vadd.f32 0.0, %v640
  %642 = vmatmul.f32.gmra.mxu0 %v420
  %v643 = vpop.f32.mrf.mxu0
  %v644 = vadd.f32 0.0, %v643
  %645 = vmatmul.f32.gmra.mxu0 %v423
  %v646 = vpop.f32.mrf.mxu0
  %v647 = vadd.f32 0.0, %v646
  %648 = vmatmul.f32.gmra.mxu0 %v426
  %v649 = vpop.f32.mrf.mxu0
  %v650 = vadd.f32 0.0, %v649
  %651 = vmatmul.f32.gmra.mxu0 %v429
  %v652 = vpop.f32.mrf.mxu0
  %v653 = vadd.f32 0.0, %v652
  %654 = vmatmul.f32.gmra.mxu0 %v432
  %v655 = vpop.f32.mrf.mxu0
  %v656 = vadd.f32 0.0, %v655
  %657 = vdwg.mxu0
  %658 = vmatpush.msra.mxu0 0.0
  %659 = vmatpush.msra.mxu0 0.0
  %660 = vmatpush.msra.mxu0 0.0
  %661 = vmatpush.msra.mxu0 %v348
  %662 = vmatpush.msra.mxu0 %v341
  %663 = vmatpush.msra.mxu0 %v334
  %664 = vmatpush.msra.mxu0 %v327
  %665 = vmatpush.msra.mxu0 %v320
  %666 = vmatpush.msra.mxu0 %v313
  %667 = vmatpush.msra.mxu0 %v306
  %668 = vmatpush.msra.mxu0 %v299
  %669 = vmatpush.msra.mxu0 %v292
  %670 = vmatpush.msra.mxu0 %v285
  %671 = vmatpush.msra.mxu0 %v278
  %672 = vmatpush.msra.mxu0 %v271
  %673 = vmatpush.msra.mxu0 %v264
  %674 = vmatmul.f32.gmra.mxu0 %v396
  %v675 = vpop.f32.mrf.mxu0
  %v676 = vadd.f32 0.0, %v675
  %677 = vmatmul.f32.gmra.mxu0 %v399
  %v678 = vpop.f32.mrf.mxu0
  %v679 = vadd.f32 0.0, %v678
  %680 = vmatmul.f32.gmra.mxu0 %v402
  %v681 = vpop.f32.mrf.mxu0
  %v682 = vadd.f32 0.0, %v681
  %683 = vmatmul.f32.gmra.mxu0 %v405
  %v684 = vpop.f32.mrf.mxu0
  %v685 = vadd.f32 0.0, %v684
  %686 = vmatmul.f32.gmra.mxu0 %v408
  %v687 = vpop.f32.mrf.mxu0
  %v688 = vadd.f32 0.0, %v687
  %689 = vmatmul.f32.gmra.mxu0 %v411
  %v690 = vpop.f32.mrf.mxu0
  %v691 = vadd.f32 0.0, %v690
  %692 = vmatmul.f32.gmra.mxu0 %v414
  %v693 = vpop.f32.mrf.mxu0
  %v694 = vadd.f32 0.0, %v693
  %695 = vmatmul.f32.gmra.mxu0 %v417
  %v696 = vpop.f32.mrf.mxu0
  %v697 = vadd.f32 0.0, %v696
  %698 = vmatmul.f32.gmra.mxu0 %v420
  %v699 = vpop.f32.mrf.mxu0
  %v700 = vadd.f32 0.0, %v699
  %701 = vmatmul.f32.gmra.mxu0 %v423
  %v702 = vpop.f32.mrf.mxu0
  %v703 = vadd.f32 0.0, %v702
  %704 = vmatmul.f32.gmra.mxu0 %v426
  %v705 = vpop.f32.mrf.mxu0
  %v706 = vadd.f32 0.0, %v705
  %707 = vmatmul.f32.gmra.mxu0 %v429
  %v708 = vpop.f32.mrf.mxu0
  %v709 = vadd.f32 0.0, %v708
  %710 = vmatmul.f32.gmra.mxu0 %v432
  %v711 = vpop.f32.mrf.mxu0
  %v712 = vadd.f32 0.0, %v711
  %713 = vdwg.mxu0
  %714 = vmatpush.msra.mxu0 0.0
  %715 = vmatpush.msra.mxu0 0.0
  %716 = vmatpush.msra.mxu0 0.0
  %717 = vmatpush.msra.mxu0 %v349
  %718 = vmatpush.msra.mxu0 %v342
  %719 = vmatpush.msra.mxu0 %v335
  %720 = vmatpush.msra.mxu0 %v328
  %721 = vmatpush.msra.mxu0 %v321
  %722 = vmatpush.msra.mxu0 %v314
  %723 = vmatpush.msra.mxu0 %v307
  %724 = vmatpush.msra.mxu0 %v300
  %725 = vmatpush.msra.mxu0 %v293
  %726 = vmatpush.msra.mxu0 %v286
  %727 = vmatpush.msra.mxu0 %v279
  %728 = vmatpush.msra.mxu0 %v272
  %729 = vmatpush.msra.mxu0 %v265
  %730 = vmatmul.f32.gmra.mxu0 %v396
  %v731 = vpop.f32.mrf.mxu0
  %v732 = vadd.f32 0.0, %v731
  %733 = vmatmul.f32.gmra.mxu0 %v399
  %v734 = vpop.f32.mrf.mxu0
  %v735 = vadd.f32 0.0, %v734
  %736 = vmatmul.f32.gmra.mxu0 %v402
  %v737 = vpop.f32.mrf.mxu0
  %v738 = vadd.f32 0.0, %v737
  %739 = vmatmul.f32.gmra.mxu0 %v405
  %v740 = vpop.f32.mrf.mxu0
  %v741 = vadd.f32 0.0, %v740
  %742 = vmatmul.f32.gmra.mxu0 %v408
  %v743 = vpop.f32.mrf.mxu0
  %v744 = vadd.f32 0.0, %v743
  %745 = vmatmul.f32.gmra.mxu0 %v411
  %v746 = vpop.f32.mrf.mxu0
  %v747 = vadd.f32 0.0, %v746
  %748 = vmatmul.f32.gmra.mxu0 %v414
  %v749 = vpop.f32.mrf.mxu0
  %v750 = vadd.f32 0.0, %v749
  %751 = vmatmul.f32.gmra.mxu0 %v417
  %v752 = vpop.f32.mrf.mxu0
  %v753 = vadd.f32 0.0, %v752
  %754 = vmatmul.f32.gmra.mxu0 %v420
  %v755 = vpop.f32.mrf.mxu0
  %v756 = vadd.f32 0.0, %v755
  %757 = vmatmul.f32.gmra.mxu0 %v423
  %v758 = vpop.f32.mrf.mxu0
  %v759 = vadd.f32 0.0, %v758
  %760 = vmatmul.f32.gmra.mxu0 %v426
  %v761 = vpop.f32.mrf.mxu0
  %v762 = vadd.f32 0.0, %v761
  %763 = vmatmul.f32.gmra.mxu0 %v429
  %v764 = vpop.f32.mrf.mxu0
  %v765 = vadd.f32 0.0, %v764
  %766 = vmatmul.f32.gmra.mxu0 %v432
  %v767 = vpop.f32.mrf.mxu0
  %v768 = vadd.f32 0.0, %v767
  %769 = vdwg.mxu0
  %770 = vmatpush.msra.mxu0 0.0
  %771 = vmatpush.msra.mxu0 0.0
  %772 = vmatpush.msra.mxu0 0.0
  %773 = vmatpush.msra.mxu0 %v350
  %774 = vmatpush.msra.mxu0 %v343
  %775 = vmatpush.msra.mxu0 %v336
  %776 = vmatpush.msra.mxu0 %v329
  %777 = vmatpush.msra.mxu0 %v322
  %778 = vmatpush.msra.mxu0 %v315
  %779 = vmatpush.msra.mxu0 %v308
  %780 = vmatpush.msra.mxu0 %v301
  %781 = vmatpush.msra.mxu0 %v294
  %782 = vmatpush.msra.mxu0 %v287
  %783 = vmatpush.msra.mxu0 %v280
  %784 = vmatpush.msra.mxu0 %v273
  %785 = vmatpush.msra.mxu0 %v266
  %786 = vmatmul.f32.gmra.mxu0 %v396
  %v787 = vpop.f32.mrf.mxu0
  %v788 = vadd.f32 0.0, %v787
  %789 = vmatmul.f32.gmra.mxu0 %v399
  %v790 = vpop.f32.mrf.mxu0
  %v791 = vadd.f32 0.0, %v790
  %792 = vmatmul.f32.gmra.mxu0 %v402
  %v793 = vpop.f32.mrf.mxu0
  %v794 = vadd.f32 0.0, %v793
  %795 = vmatmul.f32.gmra.mxu0 %v405
  %v796 = vpop.f32.mrf.mxu0
  %v797 = vadd.f32 0.0, %v796
  %798 = vmatmul.f32.gmra.mxu0 %v408
  %v799 = vpop.f32.mrf.mxu0
  %v800 = vadd.f32 0.0, %v799
  %801 = vmatmul.f32.gmra.mxu0 %v411
  %v802 = vpop.f32.mrf.mxu0
  %v803 = vadd.f32 0.0, %v802
  %804 = vmatmul.f32.gmra.mxu0 %v414
  %v805 = vpop.f32.mrf.mxu0
  %v806 = vadd.f32 0.0, %v805
  %807 = vmatmul.f32.gmra.mxu0 %v417
  %v808 = vpop.f32.mrf.mxu0
  %v809 = vadd.f32 0.0, %v808
  %810 = vmatmul.f32.gmra.mxu0 %v420
  %v811 = vpop.f32.mrf.mxu0
  %v812 = vadd.f32 0.0, %v811
  %813 = vmatmul.f32.gmra.mxu0 %v423
  %v814 = vpop.f32.mrf.mxu0
  %v815 = vadd.f32 0.0, %v814
  %816 = vmatmul.f32.gmra.mxu0 %v426
  %v817 = vpop.f32.mrf.mxu0
  %v818 = vadd.f32 0.0, %v817
  %819 = vmatmul.f32.gmra.mxu0 %v429
  %v820 = vpop.f32.mrf.mxu0
  %v821 = vadd.f32 0.0, %v820
  %822 = vmatmul.f32.gmra.mxu0 %v432
  %v823 = vpop.f32.mrf.mxu0
  %v824 = vadd.f32 0.0, %v823
  %825 = vdwg.mxu0
  %vm826 = vcmask 130048
  %v828 = vsel %vm826, %v788, 0
  %v831 = vsel %vm826, %v791, 0
  %v834 = vsel %vm826, %v794, 0
  %v837 = vsel %vm826, %v797, 0
  %v840 = vsel %vm826, %v800, 0
  %v843 = vsel %vm826, %v803, 0
  %v846 = vsel %vm826, %v806, 0
  %v849 = vsel %vm826, %v809, 0
  %v852 = vsel %vm826, %v812, 0
  %v855 = vsel %vm826, %v815, 0
  %v858 = vsel %vm826, %v818, 0
  %v861 = vsel %vm826, %v821, 0
  %v864 = vsel %vm826, %v824, 0
  %866 = vmatpush.msra.mxu0 1.0
  %867 = vmatpush.msra.mxu0 1.0
  %868 = vmatpush.msra.mxu0 1.0
  %869 = vmatpush.msra.mxu0 1.0
  %870 = vmatpush.msra.mxu0 1.0
  %871 = vmatpush.msra.mxu0 1.0
  %872 = vmatpush.msra.mxu0 1.0
  %873 = vmatpush.msra.mxu0 1.0
  %874 = vmatpush.msra.mxu0 1.0
  %875 = vmatpush.msra.mxu0 1.0
  %876 = vmatpush.msra.mxu0 1.0
  %877 = vmatpush.msra.mxu0 1.0
  %878 = vmatpush.msra.mxu0 1.0
  %879 = vmatpush.msra.mxu0 1.0
  %880 = vmatpush.msra.mxu0 1.0
  %881 = vmatpush.msra.mxu0 1.0
  %882 = vmatmul.f32.gmra.mxu0 %v452
  %v883 = vpop.f32.mrf.mxu0
  %v884 = vadd.f32 0.0, %v883
  %885 = vmatmul.f32.gmra.mxu0 %v455
  %v886 = vpop.f32.mrf.mxu0
  %v887 = vadd.f32 0.0, %v886
  %888 = vmatmul.f32.gmra.mxu0 %v458
  %v889 = vpop.f32.mrf.mxu0
  %v890 = vadd.f32 0.0, %v889
  %891 = vmatmul.f32.gmra.mxu0 %v461
  %v892 = vpop.f32.mrf.mxu0
  %v893 = vadd.f32 0.0, %v892
  %894 = vmatmul.f32.gmra.mxu0 %v464
  %v895 = vpop.f32.mrf.mxu0
  %v896 = vadd.f32 0.0, %v895
  %897 = vmatmul.f32.gmra.mxu0 %v467
  %v898 = vpop.f32.mrf.mxu0
  %v899 = vadd.f32 0.0, %v898
  %900 = vmatmul.f32.gmra.mxu0 %v470
  %v901 = vpop.f32.mrf.mxu0
  %v902 = vadd.f32 0.0, %v901
  %903 = vmatmul.f32.gmra.mxu0 %v473
  %v904 = vpop.f32.mrf.mxu0
  %v905 = vadd.f32 0.0, %v904
  %906 = vmatmul.f32.gmra.mxu0 %v476
  %v907 = vpop.f32.mrf.mxu0
  %v908 = vadd.f32 0.0, %v907
  %909 = vmatmul.f32.gmra.mxu0 %v479
  %v910 = vpop.f32.mrf.mxu0
  %v911 = vadd.f32 0.0, %v910
  %912 = vmatmul.f32.gmra.mxu0 %v482
  %v913 = vpop.f32.mrf.mxu0
  %v914 = vadd.f32 0.0, %v913
  %915 = vmatmul.f32.gmra.mxu0 %v485
  %v916 = vpop.f32.mrf.mxu0
  %v917 = vadd.f32 0.0, %v916
  %918 = vmatmul.f32.gmra.mxu0 %v488
  %v919 = vpop.f32.mrf.mxu0
  %v920 = vadd.f32 0.0, %v919
  %921 = vdwg.mxu0
  %922 = vmatpush.msra.mxu0 1.0
  %923 = vmatpush.msra.mxu0 1.0
  %924 = vmatpush.msra.mxu0 1.0
  %925 = vmatpush.msra.mxu0 1.0
  %926 = vmatpush.msra.mxu0 1.0
  %927 = vmatpush.msra.mxu0 1.0
  %928 = vmatpush.msra.mxu0 1.0
  %929 = vmatpush.msra.mxu0 1.0
  %930 = vmatpush.msra.mxu0 1.0
  %931 = vmatpush.msra.mxu0 1.0
  %932 = vmatpush.msra.mxu0 1.0
  %933 = vmatpush.msra.mxu0 1.0
  %934 = vmatpush.msra.mxu0 1.0
  %935 = vmatpush.msra.mxu0 1.0
  %936 = vmatpush.msra.mxu0 1.0
  %937 = vmatpush.msra.mxu0 1.0
  %938 = vmatmul.f32.gmra.mxu0 %v508
  %v939 = vpop.f32.mrf.mxu0
  %v940 = vadd.f32 %v884, %v939
  %941 = vmatmul.f32.gmra.mxu0 %v511
  %v942 = vpop.f32.mrf.mxu0
  %v943 = vadd.f32 %v887, %v942
  %944 = vmatmul.f32.gmra.mxu0 %v514
  %v945 = vpop.f32.mrf.mxu0
  %v946 = vadd.f32 %v890, %v945
  %947 = vmatmul.f32.gmra.mxu0 %v517
  %v948 = vpop.f32.mrf.mxu0
  %v949 = vadd.f32 %v893, %v948
  %950 = vmatmul.f32.gmra.mxu0 %v520
  %v951 = vpop.f32.mrf.mxu0
  %v952 = vadd.f32 %v896, %v951
  %953 = vmatmul.f32.gmra.mxu0 %v523
  %v954 = vpop.f32.mrf.mxu0
  %v955 = vadd.f32 %v899, %v954
  %956 = vmatmul.f32.gmra.mxu0 %v526
  %v957 = vpop.f32.mrf.mxu0
  %v958 = vadd.f32 %v902, %v957
  %959 = vmatmul.f32.gmra.mxu0 %v529
  %v960 = vpop.f32.mrf.mxu0
  %v961 = vadd.f32 %v905, %v960
  %962 = vmatmul.f32.gmra.mxu0 %v532
  %v963 = vpop.f32.mrf.mxu0
  %v964 = vadd.f32 %v908, %v963
  %965 = vmatmul.f32.gmra.mxu0 %v535
  %v966 = vpop.f32.mrf.mxu0
  %v967 = vadd.f32 %v911, %v966
  %968 = vmatmul.f32.gmra.mxu0 %v538
  %v969 = vpop.f32.mrf.mxu0
  %v970 = vadd.f32 %v914, %v969
  %971 = vmatmul.f32.gmra.mxu0 %v541
  %v972 = vpop.f32.mrf.mxu0
  %v973 = vadd.f32 %v917, %v972
  %974 = vmatmul.f32.gmra.mxu0 %v544
  %v975 = vpop.f32.mrf.mxu0
  %v976 = vadd.f32 %v920, %v975
  %977 = vdwg.mxu0
  %978 = vmatpush.msra.mxu0 1.0
  %979 = vmatpush.msra.mxu0 1.0
  %980 = vmatpush.msra.mxu0 1.0
  %981 = vmatpush.msra.mxu0 1.0
  %982 = vmatpush.msra.mxu0 1.0
  %983 = vmatpush.msra.mxu0 1.0
  %984 = vmatpush.msra.mxu0 1.0
  %985 = vmatpush.msra.mxu0 1.0
  %986 = vmatpush.msra.mxu0 1.0
  %987 = vmatpush.msra.mxu0 1.0
  %988 = vmatpush.msra.mxu0 1.0
  %989 = vmatpush.msra.mxu0 1.0
  %990 = vmatpush.msra.mxu0 1.0
  %991 = vmatpush.msra.mxu0 1.0
  %992 = vmatpush.msra.mxu0 1.0
  %993 = vmatpush.msra.mxu0 1.0
  %994 = vmatmul.f32.gmra.mxu0 %v564
  %v995 = vpop.f32.mrf.mxu0
  %v996 = vadd.f32 %v940, %v995
  %997 = vmatmul.f32.gmra.mxu0 %v567
  %v998 = vpop.f32.mrf.mxu0
  %v999 = vadd.f32 %v943, %v998
  %1000 = vmatmul.f32.gmra.mxu0 %v570
  %v1001 = vpop.f32.mrf.mxu0
  %v1002 = vadd.f32 %v946, %v1001
  %1003 = vmatmul.f32.gmra.mxu0 %v573
  %v1004 = vpop.f32.mrf.mxu0
  %v1005 = vadd.f32 %v949, %v1004
  %1006 = vmatmul.f32.gmra.mxu0 %v576
  %v1007 = vpop.f32.mrf.mxu0
  %v1008 = vadd.f32 %v952, %v1007
  %1009 = vmatmul.f32.gmra.mxu0 %v579
  %v1010 = vpop.f32.mrf.mxu0
  %v1011 = vadd.f32 %v955, %v1010
  %1012 = vmatmul.f32.gmra.mxu0 %v582
  %v1013 = vpop.f32.mrf.mxu0
  %v1014 = vadd.f32 %v958, %v1013
  %1015 = vmatmul.f32.gmra.mxu0 %v585
  %v1016 = vpop.f32.mrf.mxu0
  %v1017 = vadd.f32 %v961, %v1016
  %1018 = vmatmul.f32.gmra.mxu0 %v588
  %v1019 = vpop.f32.mrf.mxu0
  %v1020 = vadd.f32 %v964, %v1019
  %1021 = vmatmul.f32.gmra.mxu0 %v591
  %v1022 = vpop.f32.mrf.mxu0
  %v1023 = vadd.f32 %v967, %v1022
  %1024 = vmatmul.f32.gmra.mxu0 %v594
  %v1025 = vpop.f32.mrf.mxu0
  %v1026 = vadd.f32 %v970, %v1025
  %1027 = vmatmul.f32.gmra.mxu0 %v597
  %v1028 = vpop.f32.mrf.mxu0
  %v1029 = vadd.f32 %v973, %v1028
  %1030 = vmatmul.f32.gmra.mxu0 %v600
  %v1031 = vpop.f32.mrf.mxu0
  %v1032 = vadd.f32 %v976, %v1031
  %1033 = vdwg.mxu0
  %1034 = vmatpush.msra.mxu0 1.0
  %1035 = vmatpush.msra.mxu0 1.0
  %1036 = vmatpush.msra.mxu0 1.0
  %1037 = vmatpush.msra.mxu0 1.0
  %1038 = vmatpush.msra.mxu0 1.0
  %1039 = vmatpush.msra.mxu0 1.0
  %1040 = vmatpush.msra.mxu0 1.0
  %1041 = vmatpush.msra.mxu0 1.0
  %1042 = vmatpush.msra.mxu0 1.0
  %1043 = vmatpush.msra.mxu0 1.0
  %1044 = vmatpush.msra.mxu0 1.0
  %1045 = vmatpush.msra.mxu0 1.0
  %1046 = vmatpush.msra.mxu0 1.0
  %1047 = vmatpush.msra.mxu0 1.0
  %1048 = vmatpush.msra.mxu0 1.0
  %1049 = vmatpush.msra.mxu0 1.0
  %1050 = vmatmul.f32.gmra.mxu0 %v620
  %v1051 = vpop.f32.mrf.mxu0
  %v1052 = vadd.f32 %v996, %v1051
  %1053 = vmatmul.f32.gmra.mxu0 %v623
  %v1054 = vpop.f32.mrf.mxu0
  %v1055 = vadd.f32 %v999, %v1054
  %1056 = vmatmul.f32.gmra.mxu0 %v626
  %v1057 = vpop.f32.mrf.mxu0
  %v1058 = vadd.f32 %v1002, %v1057
  %1059 = vmatmul.f32.gmra.mxu0 %v629
  %v1060 = vpop.f32.mrf.mxu0
  %v1061 = vadd.f32 %v1005, %v1060
  %1062 = vmatmul.f32.gmra.mxu0 %v632
  %v1063 = vpop.f32.mrf.mxu0
  %v1064 = vadd.f32 %v1008, %v1063
  %1065 = vmatmul.f32.gmra.mxu0 %v635
  %v1066 = vpop.f32.mrf.mxu0
  %v1067 = vadd.f32 %v1011, %v1066
  %1068 = vmatmul.f32.gmra.mxu0 %v638
  %v1069 = vpop.f32.mrf.mxu0
  %v1070 = vadd.f32 %v1014, %v1069
  %1071 = vmatmul.f32.gmra.mxu0 %v641
  %v1072 = vpop.f32.mrf.mxu0
  %v1073 = vadd.f32 %v1017, %v1072
  %1074 = vmatmul.f32.gmra.mxu0 %v644
  %v1075 = vpop.f32.mrf.mxu0
  %v1076 = vadd.f32 %v1020, %v1075
  %1077 = vmatmul.f32.gmra.mxu0 %v647
  %v1078 = vpop.f32.mrf.mxu0
  %v1079 = vadd.f32 %v1023, %v1078
  %1080 = vmatmul.f32.gmra.mxu0 %v650
  %v1081 = vpop.f32.mrf.mxu0
  %v1082 = vadd.f32 %v1026, %v1081
  %1083 = vmatmul.f32.gmra.mxu0 %v653
  %v1084 = vpop.f32.mrf.mxu0
  %v1085 = vadd.f32 %v1029, %v1084
  %1086 = vmatmul.f32.gmra.mxu0 %v656
  %v1087 = vpop.f32.mrf.mxu0
  %v1088 = vadd.f32 %v1032, %v1087
  %1089 = vdwg.mxu0
  %1090 = vmatpush.msra.mxu0 1.0
  %1091 = vmatpush.msra.mxu0 1.0
  %1092 = vmatpush.msra.mxu0 1.0
  %1093 = vmatpush.msra.mxu0 1.0
  %1094 = vmatpush.msra.mxu0 1.0
  %1095 = vmatpush.msra.mxu0 1.0
  %1096 = vmatpush.msra.mxu0 1.0
  %1097 = vmatpush.msra.mxu0 1.0
  %1098 = vmatpush.msra.mxu0 1.0
  %1099 = vmatpush.msra.mxu0 1.0
  %1100 = vmatpush.msra.mxu0 1.0
  %1101 = vmatpush.msra.mxu0 1.0
  %1102 = vmatpush.msra.mxu0 1.0
  %1103 = vmatpush.msra.mxu0 1.0
  %1104 = vmatpush.msra.mxu0 1.0
  %1105 = vmatpush.msra.mxu0 1.0
  %1106 = vmatmul.f32.gmra.mxu0 %v676
  %v1107 = vpop.f32.mrf.mxu0
  %v1108 = vadd.f32 %v1052, %v1107
  %1109 = vmatmul.f32.gmra.mxu0 %v679
  %v1110 = vpop.f32.mrf.mxu0
  %v1111 = vadd.f32 %v1055, %v1110
  %1112 = vmatmul.f32.gmra.mxu0 %v682
  %v1113 = vpop.f32.mrf.mxu0
  %v1114 = vadd.f32 %v1058, %v1113
  %1115 = vmatmul.f32.gmra.mxu0 %v685
  %v1116 = vpop.f32.mrf.mxu0
  %v1117 = vadd.f32 %v1061, %v1116
  %1118 = vmatmul.f32.gmra.mxu0 %v688
  %v1119 = vpop.f32.mrf.mxu0
  %v1120 = vadd.f32 %v1064, %v1119
  %1121 = vmatmul.f32.gmra.mxu0 %v691
  %v1122 = vpop.f32.mrf.mxu0
  %v1123 = vadd.f32 %v1067, %v1122
  %1124 = vmatmul.f32.gmra.mxu0 %v694
  %v1125 = vpop.f32.mrf.mxu0
  %v1126 = vadd.f32 %v1070, %v1125
  %1127 = vmatmul.f32.gmra.mxu0 %v697
  %v1128 = vpop.f32.mrf.mxu0
  %v1129 = vadd.f32 %v1073, %v1128
  %1130 = vmatmul.f32.gmra.mxu0 %v700
  %v1131 = vpop.f32.mrf.mxu0
  %v1132 = vadd.f32 %v1076, %v1131
  %1133 = vmatmul.f32.gmra.mxu0 %v703
  %v1134 = vpop.f32.mrf.mxu0
  %v1135 = vadd.f32 %v1079, %v1134
  %1136 = vmatmul.f32.gmra.mxu0 %v706
  %v1137 = vpop.f32.mrf.mxu0
  %v1138 = vadd.f32 %v1082, %v1137
  %1139 = vmatmul.f32.gmra.mxu0 %v709
  %v1140 = vpop.f32.mrf.mxu0
  %v1141 = vadd.f32 %v1085, %v1140
  %1142 = vmatmul.f32.gmra.mxu0 %v712
  %v1143 = vpop.f32.mrf.mxu0
  %v1144 = vadd.f32 %v1088, %v1143
  %1145 = vdwg.mxu0
  %1146 = vmatpush.msra.mxu0 1.0
  %1147 = vmatpush.msra.mxu0 1.0
  %1148 = vmatpush.msra.mxu0 1.0
  %1149 = vmatpush.msra.mxu0 1.0
  %1150 = vmatpush.msra.mxu0 1.0
  %1151 = vmatpush.msra.mxu0 1.0
  %1152 = vmatpush.msra.mxu0 1.0
  %1153 = vmatpush.msra.mxu0 1.0
  %1154 = vmatpush.msra.mxu0 1.0
  %1155 = vmatpush.msra.mxu0 1.0
  %1156 = vmatpush.msra.mxu0 1.0
  %1157 = vmatpush.msra.mxu0 1.0
  %1158 = vmatpush.msra.mxu0 1.0
  %1159 = vmatpush.msra.mxu0 1.0
  %1160 = vmatpush.msra.mxu0 1.0
  %1161 = vmatpush.msra.mxu0 1.0
  %1162 = vmatmul.f32.gmra.mxu0 %v732
  %v1163 = vpop.f32.mrf.mxu0
  %v1164 = vadd.f32 %v1108, %v1163
  %1165 = vmatmul.f32.gmra.mxu0 %v735
  %v1166 = vpop.f32.mrf.mxu0
  %v1167 = vadd.f32 %v1111, %v1166
  %1168 = vmatmul.f32.gmra.mxu0 %v738
  %v1169 = vpop.f32.mrf.mxu0
  %v1170 = vadd.f32 %v1114, %v1169
  %1171 = vmatmul.f32.gmra.mxu0 %v741
  %v1172 = vpop.f32.mrf.mxu0
  %v1173 = vadd.f32 %v1117, %v1172
  %1174 = vmatmul.f32.gmra.mxu0 %v744
  %v1175 = vpop.f32.mrf.mxu0
  %v1176 = vadd.f32 %v1120, %v1175
  %1177 = vmatmul.f32.gmra.mxu0 %v747
  %v1178 = vpop.f32.mrf.mxu0
  %v1179 = vadd.f32 %v1123, %v1178
  %1180 = vmatmul.f32.gmra.mxu0 %v750
  %v1181 = vpop.f32.mrf.mxu0
  %v1182 = vadd.f32 %v1126, %v1181
  %1183 = vmatmul.f32.gmra.mxu0 %v753
  %v1184 = vpop.f32.mrf.mxu0
  %v1185 = vadd.f32 %v1129, %v1184
  %1186 = vmatmul.f32.gmra.mxu0 %v756
  %v1187 = vpop.f32.mrf.mxu0
  %v1188 = vadd.f32 %v1132, %v1187
  %1189 = vmatmul.f32.gmra.mxu0 %v759
  %v1190 = vpop.f32.mrf.mxu0
  %v1191 = vadd.f32 %v1135, %v1190
  %1192 = vmatmul.f32.gmra.mxu0 %v762
  %v1193 = vpop.f32.mrf.mxu0
  %v1194 = vadd.f32 %v1138, %v1193
  %1195 = vmatmul.f32.gmra.mxu0 %v765
  %v1196 = vpop.f32.mrf.mxu0
  %v1197 = vadd.f32 %v1141, %v1196
  %1198 = vmatmul.f32.gmra.mxu0 %v768
  %v1199 = vpop.f32.mrf.mxu0
  %v1200 = vadd.f32 %v1144, %v1199
  %1201 = vdwg.mxu0
  %1202 = vmatpush.msra.mxu0 0.0
  %1203 = vmatpush.msra.mxu0 0.0
  %1204 = vmatpush.msra.mxu0 0.0
  %1205 = vmatpush.msra.mxu0 0.0
  %1206 = vmatpush.msra.mxu0 0.0
  %1207 = vmatpush.msra.mxu0 0.0
  %1208 = vmatpush.msra.mxu0 0.0
  %1209 = vmatpush.msra.mxu0 0.0
  %1210 = vmatpush.msra.mxu0 0.0
  %1211 = vmatpush.msra.mxu0 0.0
  %1212 = vmatpush.msra.mxu0 0.0
  %1213 = vmatpush.msra.mxu0 0.0
  %1214 = vmatpush.msra.mxu0 0.0
  %1215 = vmatpush.msra.mxu0 0.0
  %1216 = vmatpush.msra.mxu0 1.0
  %1217 = vmatpush.msra.mxu0 1.0
  %1218 = vmatmul.f32.gmra.mxu0 %v828
  %v1219 = vpop.f32.mrf.mxu0
  %v1220 = vadd.f32 %v1164, %v1219
  %1221 = vmatmul.f32.gmra.mxu0 %v831
  %v1222 = vpop.f32.mrf.mxu0
  %v1223 = vadd.f32 %v1167, %v1222
  %1224 = vmatmul.f32.gmra.mxu0 %v834
  %v1225 = vpop.f32.mrf.mxu0
  %v1226 = vadd.f32 %v1170, %v1225
  %1227 = vmatmul.f32.gmra.mxu0 %v837
  %v1228 = vpop.f32.mrf.mxu0
  %v1229 = vadd.f32 %v1173, %v1228
  %1230 = vmatmul.f32.gmra.mxu0 %v840
  %v1231 = vpop.f32.mrf.mxu0
  %v1232 = vadd.f32 %v1176, %v1231
  %1233 = vmatmul.f32.gmra.mxu0 %v843
  %v1234 = vpop.f32.mrf.mxu0
  %v1235 = vadd.f32 %v1179, %v1234
  %1236 = vmatmul.f32.gmra.mxu0 %v846
  %v1237 = vpop.f32.mrf.mxu0
  %v1238 = vadd.f32 %v1182, %v1237
  %1239 = vmatmul.f32.gmra.mxu0 %v849
  %v1240 = vpop.f32.mrf.mxu0
  %v1241 = vadd.f32 %v1185, %v1240
  %1242 = vmatmul.f32.gmra.mxu0 %v852
  %v1243 = vpop.f32.mrf.mxu0
  %v1244 = vadd.f32 %v1188, %v1243
  %1245 = vmatmul.f32.gmra.mxu0 %v855
  %v1246 = vpop.f32.mrf.mxu0
  %v1247 = vadd.f32 %v1191, %v1246
  %1248 = vmatmul.f32.gmra.mxu0 %v858
  %v1249 = vpop.f32.mrf.mxu0
  %v1250 = vadd.f32 %v1194, %v1249
  %1251 = vmatmul.f32.gmra.mxu0 %v861
  %v1252 = vpop.f32.mrf.mxu0
  %v1253 = vadd.f32 %v1197, %v1252
  %1254 = vmatmul.f32.gmra.mxu0 %v864
  %v1255 = vpop.f32.mrf.mxu0
  %v1256 = vadd.f32 %v1200, %v1255
  %1257 = vdwg.mxu0
  %v1258 = vmul.f32 %v1220, 0.0012755102
  %v1259 = vmul.f32 %v1223, 0.0012755102
  %v1260 = vmul.f32 %v1226, 0.0012755102
  %v1261 = vmul.f32 %v1229, 0.0012755102
  %v1262 = vmul.f32 %v1232, 0.0012755102
  %v1263 = vmul.f32 %v1235, 0.0012755102
  %v1264 = vmul.f32 %v1238, 0.0012755102
  %v1265 = vmul.f32 %v1241, 0.0012755102
  %v1266 = vmul.f32 %v1244, 0.0012755102
  %v1267 = vmul.f32 %v1247, 0.0012755102
  %v1268 = vmul.f32 %v1250, 0.0012755102
  %v1269 = vmul.f32 %v1253, 0.0012755102
  %v1270 = vmul.f32 %v1256, 0.0012755102
  %v1271 = vmul.f32 %v452, %v452
  %v1272 = vmul.f32 %v508, %v508
  %v1273 = vmul.f32 %v564, %v564
  %v1274 = vmul.f32 %v620, %v620
  %v1275 = vmul.f32 %v676, %v676
  %v1276 = vmul.f32 %v732, %v732
  %v1277 = vmul.f32 %v788, %v788
  %v1278 = vmul.f32 %v455, %v455
  %v1279 = vmul.f32 %v511, %v511
  %v1280 = vmul.f32 %v567, %v567
  %v1281 = vmul.f32 %v623, %v623
  %v1282 = vmul.f32 %v679, %v679
  %v1283 = vmul.f32 %v735, %v735
  %v1284 = vmul.f32 %v791, %v791
  %v1285 = vmul.f32 %v458, %v458
  %v1286 = vmul.f32 %v514, %v514
  %v1287 = vmul.f32 %v570, %v570
  %v1288 = vmul.f32 %v626, %v626
  %v1289 = vmul.f32 %v682, %v682
  %v1290 = vmul.f32 %v738, %v738
  %v1291 = vmul.f32 %v794, %v794
  %v1292 = vmul.f32 %v461, %v461
  %v1293 = vmul.f32 %v517, %v517
  %v1294 = vmul.f32 %v573, %v573
  %v1295 = vmul.f32 %v629, %v629
  %v1296 = vmul.f32 %v685, %v685
  %v1297 = vmul.f32 %v741, %v741
  %v1298 = vmul.f32 %v797, %v797
  %v1299 = vmul.f32 %v464, %v464
  %v1300 = vmul.f32 %v520, %v520
  %v1301 = vmul.f32 %v576, %v576
  %v1302 = vmul.f32 %v632, %v632
  %v1303 = vmul.f32 %v688, %v688
  %v1304 = vmul.f32 %v744, %v744
  %v1305 = vmul.f32 %v800, %v800
  %v1306 = vmul.f32 %v467, %v467
  %v1307 = vmul.f32 %v523, %v523
  %v1308 = vmul.f32 %v579, %v579
  %v1309 = vmul.f32 %v635, %v635
  %v1310 = vmul.f32 %v691, %v691
  %v1311 = vmul.f32 %v747, %v747
  %v1312 = vmul.f32 %v803, %v803
  %v1313 = vmul.f32 %v470, %v470
  %v1314 = vmul.f32 %v526, %v526
  %v1315 = vmul.f32 %v582, %v582
  %v1316 = vmul.f32 %v638, %v638
  %v1317 = vmul.f32 %v694, %v694
  %v1318 = vmul.f32 %v750, %v750
  %v1319 = vmul.f32 %v806, %v806
  %v1320 = vmul.f32 %v473, %v473
  %v1321 = vmul.f32 %v529, %v529
  %v1322 = vmul.f32 %v585, %v585
  %v1323 = vmul.f32 %v641, %v641
  %v1324 = vmul.f32 %v697, %v697
  %v1325 = vmul.f32 %v753, %v753
  %v1326 = vmul.f32 %v809, %v809
  %v1327 = vmul.f32 %v476, %v476
  %v1328 = vmul.f32 %v532, %v532
  %v1329 = vmul.f32 %v588, %v588
  %v1330 = vmul.f32 %v644, %v644
  %v1331 = vmul.f32 %v700, %v700
  %v1332 = vmul.f32 %v756, %v756
  %v1333 = vmul.f32 %v812, %v812
  %v1334 = vmul.f32 %v479, %v479
  %v1335 = vmul.f32 %v535, %v535
  %v1336 = vmul.f32 %v591, %v591
  %v1337 = vmul.f32 %v647, %v647
  %v1338 = vmul.f32 %v703, %v703
  %v1339 = vmul.f32 %v759, %v759
  %v1340 = vmul.f32 %v815, %v815
  %v1341 = vmul.f32 %v482, %v482
  %v1342 = vmul.f32 %v538, %v538
  %v1343 = vmul.f32 %v594, %v594
  %v1344 = vmul.f32 %v650, %v650
  %v1345 = vmul.f32 %v706, %v706
  %v1346 = vmul.f32 %v762, %v762
  %v1347 = vmul.f32 %v818, %v818
  %v1348 = vmul.f32 %v485, %v485
  %v1349 = vmul.f32 %v541, %v541
  %v1350 = vmul.f32 %v597, %v597
  %v1351 = vmul.f32 %v653, %v653
  %v1352 = vmul.f32 %v709, %v709
  %v1353 = vmul.f32 %v765, %v765
  %v1354 = vmul.f32 %v821, %v821
  %v1355 = vmul.f32 %v488, %v488
  %v1356 = vmul.f32 %v544, %v544
  %v1357 = vmul.f32 %v600, %v600
  %v1358 = vmul.f32 %v656, %v656
  %v1359 = vmul.f32 %v712, %v712
  %v1360 = vmul.f32 %v768, %v768
  %v1361 = vmul.f32 %v824, %v824
  %v1363 = vsel %vm826, %v1277, 0
  %v1366 = vsel %vm826, %v1284, 0
  %v1369 = vsel %vm826, %v1291, 0
  %v1372 = vsel %vm826, %v1298, 0
  %v1375 = vsel %vm826, %v1305, 0
  %v1378 = vsel %vm826, %v1312, 0
  %v1381 = vsel %vm826, %v1319, 0
  %v1384 = vsel %vm826, %v1326, 0
  %v1387 = vsel %vm826, %v1333, 0
  %v1390 = vsel %vm826, %v1340, 0
  %v1393 = vsel %vm826, %v1347, 0
  %v1396 = vsel %vm826, %v1354, 0
  %v1399 = vsel %vm826, %v1361, 0
  %1401 = vmatpush.msra.mxu0 1.0
  %1402 = vmatpush.msra.mxu0 1.0
  %1403 = vmatpush.msra.mxu0 1.0
  %1404 = vmatpush.msra.mxu0 1.0
  %1405 = vmatpush.msra.mxu0 1.0
  %1406 = vmatpush.msra.mxu0 1.0
  %1407 = vmatpush.msra.mxu0 1.0
  %1408 = vmatpush.msra.mxu0 1.0
  %1409 = vmatpush.msra.mxu0 1.0
  %1410 = vmatpush.msra.mxu0 1.0
  %1411 = vmatpush.msra.mxu0 1.0
  %1412 = vmatpush.msra.mxu0 1.0
  %1413 = vmatpush.msra.mxu0 1.0
  %1414 = vmatpush.msra.mxu0 1.0
  %1415 = vmatpush.msra.mxu0 1.0
  %1416 = vmatpush.msra.mxu0 1.0
  %1417 = vmatmul.f32.gmra.mxu0 %v1271
  %v1418 = vpop.f32.mrf.mxu0
  %v1419 = vadd.f32 0.0, %v1418
  %1420 = vmatmul.f32.gmra.mxu0 %v1278
  %v1421 = vpop.f32.mrf.mxu0
  %v1422 = vadd.f32 0.0, %v1421
  %1423 = vmatmul.f32.gmra.mxu0 %v1285
  %v1424 = vpop.f32.mrf.mxu0
  %v1425 = vadd.f32 0.0, %v1424
  %1426 = vmatmul.f32.gmra.mxu0 %v1292
  %v1427 = vpop.f32.mrf.mxu0
  %v1428 = vadd.f32 0.0, %v1427
  %1429 = vmatmul.f32.gmra.mxu0 %v1299
  %v1430 = vpop.f32.mrf.mxu0
  %v1431 = vadd.f32 0.0, %v1430
  %1432 = vmatmul.f32.gmra.mxu0 %v1306
  %v1433 = vpop.f32.mrf.mxu0
  %v1434 = vadd.f32 0.0, %v1433
  %1435 = vmatmul.f32.gmra.mxu0 %v1313
  %v1436 = vpop.f32.mrf.mxu0
  %v1437 = vadd.f32 0.0, %v1436
  %1438 = vmatmul.f32.gmra.mxu0 %v1320
  %v1439 = vpop.f32.mrf.mxu0
  %v1440 = vadd.f32 0.0, %v1439
  %1441 = vmatmul.f32.gmra.mxu0 %v1327
  %v1442 = vpop.f32.mrf.mxu0
  %v1443 = vadd.f32 0.0, %v1442
  %1444 = vmatmul.f32.gmra.mxu0 %v1334
  %v1445 = vpop.f32.mrf.mxu0
  %v1446 = vadd.f32 0.0, %v1445
  %1447 = vmatmul.f32.gmra.mxu0 %v1341
  %v1448 = vpop.f32.mrf.mxu0
  %v1449 = vadd.f32 0.0, %v1448
  %1450 = vmatmul.f32.gmra.mxu0 %v1348
  %v1451 = vpop.f32.mrf.mxu0
  %v1452 = vadd.f32 0.0, %v1451
  %1453 = vmatmul.f32.gmra.mxu0 %v1355
  %v1454 = vpop.f32.mrf.mxu0
  %v1455 = vadd.f32 0.0, %v1454
  %1456 = vdwg.mxu0
  %1457 = vmatpush.msra.mxu0 1.0
  %1458 = vmatpush.msra.mxu0 1.0
  %1459 = vmatpush.msra.mxu0 1.0
  %1460 = vmatpush.msra.mxu0 1.0
  %1461 = vmatpush.msra.mxu0 1.0
  %1462 = vmatpush.msra.mxu0 1.0
  %1463 = vmatpush.msra.mxu0 1.0
  %1464 = vmatpush.msra.mxu0 1.0
  %1465 = vmatpush.msra.mxu0 1.0
  %1466 = vmatpush.msra.mxu0 1.0
  %1467 = vmatpush.msra.mxu0 1.0
  %1468 = vmatpush.msra.mxu0 1.0
  %1469 = vmatpush.msra.mxu0 1.0
  %1470 = vmatpush.msra.mxu0 1.0
  %1471 = vmatpush.msra.mxu0 1.0
  %1472 = vmatpush.msra.mxu0 1.0
  %1473 = vmatmul.f32.gmra.mxu0 %v1272
  %v1474 = vpop.f32.mrf.mxu0
  %v1475 = vadd.f32 %v1419, %v1474
  %1476 = vmatmul.f32.gmra.mxu0 %v1279
  %v1477 = vpop.f32.mrf.mxu0
  %v1478 = vadd.f32 %v1422, %v1477
  %1479 = vmatmul.f32.gmra.mxu0 %v1286
  %v1480 = vpop.f32.mrf.mxu0
  %v1481 = vadd.f32 %v1425, %v1480
  %1482 = vmatmul.f32.gmra.mxu0 %v1293
  %v1483 = vpop.f32.mrf.mxu0
  %v1484 = vadd.f32 %v1428, %v1483
  %1485 = vmatmul.f32.gmra.mxu0 %v1300
  %v1486 = vpop.f32.mrf.mxu0
  %v1487 = vadd.f32 %v1431, %v1486
  %1488 = vmatmul.f32.gmra.mxu0 %v1307
  %v1489 = vpop.f32.mrf.mxu0
  %v1490 = vadd.f32 %v1434, %v1489
  %1491 = vmatmul.f32.gmra.mxu0 %v1314
  %v1492 = vpop.f32.mrf.mxu0
  %v1493 = vadd.f32 %v1437, %v1492
  %1494 = vmatmul.f32.gmra.mxu0 %v1321
  %v1495 = vpop.f32.mrf.mxu0
  %v1496 = vadd.f32 %v1440, %v1495
  %1497 = vmatmul.f32.gmra.mxu0 %v1328
  %v1498 = vpop.f32.mrf.mxu0
  %v1499 = vadd.f32 %v1443, %v1498
  %1500 = vmatmul.f32.gmra.mxu0 %v1335
  %v1501 = vpop.f32.mrf.mxu0
  %v1502 = vadd.f32 %v1446, %v1501
  %1503 = vmatmul.f32.gmra.mxu0 %v1342
  %v1504 = vpop.f32.mrf.mxu0
  %v1505 = vadd.f32 %v1449, %v1504
  %1506 = vmatmul.f32.gmra.mxu0 %v1349
  %v1507 = vpop.f32.mrf.mxu0
  %v1508 = vadd.f32 %v1452, %v1507
  %1509 = vmatmul.f32.gmra.mxu0 %v1356
  %v1510 = vpop.f32.mrf.mxu0
  %v1511 = vadd.f32 %v1455, %v1510
  %1512 = vdwg.mxu0
  %1513 = vmatpush.msra.mxu0 1.0
  %1514 = vmatpush.msra.mxu0 1.0
  %1515 = vmatpush.msra.mxu0 1.0
  %1516 = vmatpush.msra.mxu0 1.0
  %1517 = vmatpush.msra.mxu0 1.0
  %1518 = vmatpush.msra.mxu0 1.0
  %1519 = vmatpush.msra.mxu0 1.0
  %1520 = vmatpush.msra.mxu0 1.0
  %1521 = vmatpush.msra.mxu0 1.0
  %1522 = vmatpush.msra.mxu0 1.0
  %1523 = vmatpush.msra.mxu0 1.0
  %1524 = vmatpush.msra.mxu0 1.0
  %1525 = vmatpush.msra.mxu0 1.0
  %1526 = vmatpush.msra.mxu0 1.0
  %1527 = vmatpush.msra.mxu0 1.0
  %1528 = vmatpush.msra.mxu0 1.0
  %1529 = vmatmul.f32.gmra.mxu0 %v1273
  %v1530 = vpop.f32.mrf.mxu0
  %v1531 = vadd.f32 %v1475, %v1530
  %1532 = vmatmul.f32.gmra.mxu0 %v1280
  %v1533 = vpop.f32.mrf.mxu0
  %v1534 = vadd.f32 %v1478, %v1533
  %1535 = vmatmul.f32.gmra.mxu0 %v1287
  %v1536 = vpop.f32.mrf.mxu0
  %v1537 = vadd.f32 %v1481, %v1536
  %1538 = vmatmul.f32.gmra.mxu0 %v1294
  %v1539 = vpop.f32.mrf.mxu0
  %v1540 = vadd.f32 %v1484, %v1539
  %1541 = vmatmul.f32.gmra.mxu0 %v1301
  %v1542 = vpop.f32.mrf.mxu0
  %v1543 = vadd.f32 %v1487, %v1542
  %1544 = vmatmul.f32.gmra.mxu0 %v1308
  %v1545 = vpop.f32.mrf.mxu0
  %v1546 = vadd.f32 %v1490, %v1545
  %1547 = vmatmul.f32.gmra.mxu0 %v1315
  %v1548 = vpop.f32.mrf.mxu0
  %v1549 = vadd.f32 %v1493, %v1548
  %1550 = vmatmul.f32.gmra.mxu0 %v1322
  %v1551 = vpop.f32.mrf.mxu0
  %v1552 = vadd.f32 %v1496, %v1551
  %1553 = vmatmul.f32.gmra.mxu0 %v1329
  %v1554 = vpop.f32.mrf.mxu0
  %v1555 = vadd.f32 %v1499, %v1554
  %1556 = vmatmul.f32.gmra.mxu0 %v1336
  %v1557 = vpop.f32.mrf.mxu0
  %v1558 = vadd.f32 %v1502, %v1557
  %1559 = vmatmul.f32.gmra.mxu0 %v1343
  %v1560 = vpop.f32.mrf.mxu0
  %v1561 = vadd.f32 %v1505, %v1560
  %1562 = vmatmul.f32.gmra.mxu0 %v1350
  %v1563 = vpop.f32.mrf.mxu0
  %v1564 = vadd.f32 %v1508, %v1563
  %1565 = vmatmul.f32.gmra.mxu0 %v1357
  %v1566 = vpop.f32.mrf.mxu0
  %v1567 = vadd.f32 %v1511, %v1566
  %1568 = vdwg.mxu0
  %1569 = vmatpush.msra.mxu0 1.0
  %1570 = vmatpush.msra.mxu0 1.0
  %1571 = vmatpush.msra.mxu0 1.0
  %1572 = vmatpush.msra.mxu0 1.0
  %1573 = vmatpush.msra.mxu0 1.0
  %1574 = vmatpush.msra.mxu0 1.0
  %1575 = vmatpush.msra.mxu0 1.0
  %1576 = vmatpush.msra.mxu0 1.0
  %1577 = vmatpush.msra.mxu0 1.0
  %1578 = vmatpush.msra.mxu0 1.0
  %1579 = vmatpush.msra.mxu0 1.0
  %1580 = vmatpush.msra.mxu0 1.0
  %1581 = vmatpush.msra.mxu0 1.0
  %1582 = vmatpush.msra.mxu0 1.0
  %1583 = vmatpush.msra.mxu0 1.0
  %1584 = vmatpush.msra.mxu0 1.0
  %1585 = vmatmul.f32.gmra.mxu0 %v1274
  %v1586 = vpop.f32.mrf.mxu0
  %v1587 = vadd.f32 %v1531, %v1586
  %1588 = vmatmul.f32.gmra.mxu0 %v1281
  %v1589 = vpop.f32.mrf.mxu0
  %v1590 = vadd.f32 %v1534, %v1589
  %1591 = vmatmul.f32.gmra.mxu0 %v1288
  %v1592 = vpop.f32.mrf.mxu0
  %v1593 = vadd.f32 %v1537, %v1592
  %1594 = vmatmul.f32.gmra.mxu0 %v1295
  %v1595 = vpop.f32.mrf.mxu0
  %v1596 = vadd.f32 %v1540, %v1595
  %1597 = vmatmul.f32.gmra.mxu0 %v1302
  %v1598 = vpop.f32.mrf.mxu0
  %v1599 = vadd.f32 %v1543, %v1598
  %1600 = vmatmul.f32.gmra.mxu0 %v1309
  %v1601 = vpop.f32.mrf.mxu0
  %v1602 = vadd.f32 %v1546, %v1601
  %1603 = vmatmul.f32.gmra.mxu0 %v1316
  %v1604 = vpop.f32.mrf.mxu0
  %v1605 = vadd.f32 %v1549, %v1604
  %1606 = vmatmul.f32.gmra.mxu0 %v1323
  %v1607 = vpop.f32.mrf.mxu0
  %v1608 = vadd.f32 %v1552, %v1607
  %1609 = vmatmul.f32.gmra.mxu0 %v1330
  %v1610 = vpop.f32.mrf.mxu0
  %v1611 = vadd.f32 %v1555, %v1610
  %1612 = vmatmul.f32.gmra.mxu0 %v1337
  %v1613 = vpop.f32.mrf.mxu0
  %v1614 = vadd.f32 %v1558, %v1613
  %1615 = vmatmul.f32.gmra.mxu0 %v1344
  %v1616 = vpop.f32.mrf.mxu0
  %v1617 = vadd.f32 %v1561, %v1616
  %1618 = vmatmul.f32.gmra.mxu0 %v1351
  %v1619 = vpop.f32.mrf.mxu0
  %v1620 = vadd.f32 %v1564, %v1619
  %1621 = vmatmul.f32.gmra.mxu0 %v1358
  %v1622 = vpop.f32.mrf.mxu0
  %v1623 = vadd.f32 %v1567, %v1622
  %1624 = vdwg.mxu0
  %1625 = vmatpush.msra.mxu0 1.0
  %1626 = vmatpush.msra.mxu0 1.0
  %1627 = vmatpush.msra.mxu0 1.0
  %1628 = vmatpush.msra.mxu0 1.0
  %1629 = vmatpush.msra.mxu0 1.0
  %1630 = vmatpush.msra.mxu0 1.0
  %1631 = vmatpush.msra.mxu0 1.0
  %1632 = vmatpush.msra.mxu0 1.0
  %1633 = vmatpush.msra.mxu0 1.0
  %1634 = vmatpush.msra.mxu0 1.0
  %1635 = vmatpush.msra.mxu0 1.0
  %1636 = vmatpush.msra.mxu0 1.0
  %1637 = vmatpush.msra.mxu0 1.0
  %1638 = vmatpush.msra.mxu0 1.0
  %1639 = vmatpush.msra.mxu0 1.0
  %1640 = vmatpush.msra.mxu0 1.0
  %1641 = vmatmul.f32.gmra.mxu0 %v1275
  %v1642 = vpop.f32.mrf.mxu0
  %v1643 = vadd.f32 %v1587, %v1642
  %1644 = vmatmul.f32.gmra.mxu0 %v1282
  %v1645 = vpop.f32.mrf.mxu0
  %v1646 = vadd.f32 %v1590, %v1645
  %1647 = vmatmul.f32.gmra.mxu0 %v1289
  %v1648 = vpop.f32.mrf.mxu0
  %v1649 = vadd.f32 %v1593, %v1648
  %1650 = vmatmul.f32.gmra.mxu0 %v1296
  %v1651 = vpop.f32.mrf.mxu0
  %v1652 = vadd.f32 %v1596, %v1651
  %1653 = vmatmul.f32.gmra.mxu0 %v1303
  %v1654 = vpop.f32.mrf.mxu0
  %v1655 = vadd.f32 %v1599, %v1654
  %1656 = vmatmul.f32.gmra.mxu0 %v1310
  %v1657 = vpop.f32.mrf.mxu0
  %v1658 = vadd.f32 %v1602, %v1657
  %1659 = vmatmul.f32.gmra.mxu0 %v1317
  %v1660 = vpop.f32.mrf.mxu0
  %v1661 = vadd.f32 %v1605, %v1660
  %1662 = vmatmul.f32.gmra.mxu0 %v1324
  %v1663 = vpop.f32.mrf.mxu0
  %v1664 = vadd.f32 %v1608, %v1663
  %1665 = vmatmul.f32.gmra.mxu0 %v1331
  %v1666 = vpop.f32.mrf.mxu0
  %v1667 = vadd.f32 %v1611, %v1666
  %1668 = vmatmul.f32.gmra.mxu0 %v1338
  %v1669 = vpop.f32.mrf.mxu0
  %v1670 = vadd.f32 %v1614, %v1669
  %1671 = vmatmul.f32.gmra.mxu0 %v1345
  %v1672 = vpop.f32.mrf.mxu0
  %v1673 = vadd.f32 %v1617, %v1672
  %1674 = vmatmul.f32.gmra.mxu0 %v1352
  %v1675 = vpop.f32.mrf.mxu0
  %v1676 = vadd.f32 %v1620, %v1675
  %1677 = vmatmul.f32.gmra.mxu0 %v1359
  %v1678 = vpop.f32.mrf.mxu0
  %v1679 = vadd.f32 %v1623, %v1678
  %1680 = vdwg.mxu0
  %1681 = vmatpush.msra.mxu0 1.0
  %1682 = vmatpush.msra.mxu0 1.0
  %1683 = vmatpush.msra.mxu0 1.0
  %1684 = vmatpush.msra.mxu0 1.0
  %1685 = vmatpush.msra.mxu0 1.0
  %1686 = vmatpush.msra.mxu0 1.0
  %1687 = vmatpush.msra.mxu0 1.0
  %1688 = vmatpush.msra.mxu0 1.0
  %1689 = vmatpush.msra.mxu0 1.0
  %1690 = vmatpush.msra.mxu0 1.0
  %1691 = vmatpush.msra.mxu0 1.0
  %1692 = vmatpush.msra.mxu0 1.0
  %1693 = vmatpush.msra.mxu0 1.0
  %1694 = vmatpush.msra.mxu0 1.0
  %1695 = vmatpush.msra.mxu0 1.0
  %1696 = vmatpush.msra.mxu0 1.0
  %1697 = vmatmul.f32.gmra.mxu0 %v1276
  %v1698 = vpop.f32.mrf.mxu0
  %v1699 = vadd.f32 %v1643, %v1698
  %1700 = vmatmul.f32.gmra.mxu0 %v1283
  %v1701 = vpop.f32.mrf.mxu0
  %v1702 = vadd.f32 %v1646, %v1701
  %1703 = vmatmul.f32.gmra.mxu0 %v1290
  %v1704 = vpop.f32.mrf.mxu0
  %v1705 = vadd.f32 %v1649, %v1704
  %1706 = vmatmul.f32.gmra.mxu0 %v1297
  %v1707 = vpop.f32.mrf.mxu0
  %v1708 = vadd.f32 %v1652, %v1707
  %1709 = vmatmul.f32.gmra.mxu0 %v1304
  %v1710 = vpop.f32.mrf.mxu0
  %v1711 = vadd.f32 %v1655, %v1710
  %1712 = vmatmul.f32.gmra.mxu0 %v1311
  %v1713 = vpop.f32.mrf.mxu0
  %v1714 = vadd.f32 %v1658, %v1713
  %1715 = vmatmul.f32.gmra.mxu0 %v1318
  %v1716 = vpop.f32.mrf.mxu0
  %v1717 = vadd.f32 %v1661, %v1716
  %1718 = vmatmul.f32.gmra.mxu0 %v1325
  %v1719 = vpop.f32.mrf.mxu0
  %v1720 = vadd.f32 %v1664, %v1719
  %1721 = vmatmul.f32.gmra.mxu0 %v1332
  %v1722 = vpop.f32.mrf.mxu0
  %v1723 = vadd.f32 %v1667, %v1722
  %1724 = vmatmul.f32.gmra.mxu0 %v1339
  %v1725 = vpop.f32.mrf.mxu0
  %v1726 = vadd.f32 %v1670, %v1725
  %1727 = vmatmul.f32.gmra.mxu0 %v1346
  %v1728 = vpop.f32.mrf.mxu0
  %v1729 = vadd.f32 %v1673, %v1728
  %1730 = vmatmul.f32.gmra.mxu0 %v1353
  %v1731 = vpop.f32.mrf.mxu0
  %v1732 = vadd.f32 %v1676, %v1731
  %1733 = vmatmul.f32.gmra.mxu0 %v1360
  %v1734 = vpop.f32.mrf.mxu0
  %v1735 = vadd.f32 %v1679, %v1734
  %1736 = vdwg.mxu0
  %1737 = vmatpush.msra.mxu0 0.0
  %1738 = vmatpush.msra.mxu0 0.0
  %1739 = vmatpush.msra.mxu0 0.0
  %1740 = vmatpush.msra.mxu0 0.0
  %1741 = vmatpush.msra.mxu0 0.0
  %1742 = vmatpush.msra.mxu0 0.0
  %1743 = vmatpush.msra.mxu0 0.0
  %1744 = vmatpush.msra.mxu0 0.0
  %1745 = vmatpush.msra.mxu0 0.0
  %1746 = vmatpush.msra.mxu0 0.0
  %1747 = vmatpush.msra.mxu0 0.0
  %1748 = vmatpush.msra.mxu0 0.0
  %1749 = vmatpush.msra.mxu0 0.0
  %1750 = vmatpush.msra.mxu0 0.0
  %1751 = vmatpush.msra.mxu0 1.0
  %1752 = vmatpush.msra.mxu0 1.0
  %1753 = vmatmul.f32.gmra.mxu0 %v1363
  %v1754 = vpop.f32.mrf.mxu0
  %v1755 = vadd.f32 %v1699, %v1754
  %1756 = vmatmul.f32.gmra.mxu0 %v1366
  %v1757 = vpop.f32.mrf.mxu0
  %v1758 = vadd.f32 %v1702, %v1757
  %1759 = vmatmul.f32.gmra.mxu0 %v1369
  %v1760 = vpop.f32.mrf.mxu0
  %v1761 = vadd.f32 %v1705, %v1760
  %1762 = vmatmul.f32.gmra.mxu0 %v1372
  %v1763 = vpop.f32.mrf.mxu0
  %v1764 = vadd.f32 %v1708, %v1763
  %1765 = vmatmul.f32.gmra.mxu0 %v1375
  %v1766 = vpop.f32.mrf.mxu0
  %v1767 = vadd.f32 %v1711, %v1766
  %1768 = vmatmul.f32.gmra.mxu0 %v1378
  %v1769 = vpop.f32.mrf.mxu0
  %v1770 = vadd.f32 %v1714, %v1769
  %1771 = vmatmul.f32.gmra.mxu0 %v1381
  %v1772 = vpop.f32.mrf.mxu0
  %v1773 = vadd.f32 %v1717, %v1772
  %1774 = vmatmul.f32.gmra.mxu0 %v1384
  %v1775 = vpop.f32.mrf.mxu0
  %v1776 = vadd.f32 %v1720, %v1775
  %1777 = vmatmul.f32.gmra.mxu0 %v1387
  %v1778 = vpop.f32.mrf.mxu0
  %v1779 = vadd.f32 %v1723, %v1778
  %1780 = vmatmul.f32.gmra.mxu0 %v1390
  %v1781 = vpop.f32.mrf.mxu0
  %v1782 = vadd.f32 %v1726, %v1781
  %1783 = vmatmul.f32.gmra.mxu0 %v1393
  %v1784 = vpop.f32.mrf.mxu0
  %v1785 = vadd.f32 %v1729, %v1784
  %1786 = vmatmul.f32.gmra.mxu0 %v1396
  %v1787 = vpop.f32.mrf.mxu0
  %v1788 = vadd.f32 %v1732, %v1787
  %1789 = vmatmul.f32.gmra.mxu0 %v1399
  %v1790 = vpop.f32.mrf.mxu0
  %v1791 = vadd.f32 %v1735, %v1790
  %1792 = vdwg.mxu0
  %v1793 = vmul.f32 %v1755, 0.0012755102
  %v1794 = vmul.f32 %v1758, 0.0012755102
  %v1795 = vmul.f32 %v1761, 0.0012755102
  %v1796 = vmul.f32 %v1764, 0.0012755102
  %v1797 = vmul.f32 %v1767, 0.0012755102
  %v1798 = vmul.f32 %v1770, 0.0012755102
  %v1799 = vmul.f32 %v1773, 0.0012755102
  %v1800 = vmul.f32 %v1776, 0.0012755102
  %v1801 = vmul.f32 %v1779, 0.0012755102
  %v1802 = vmul.f32 %v1782, 0.0012755102
  %v1803 = vmul.f32 %v1785, 0.0012755102
  %v1804 = vmul.f32 %v1788, 0.0012755102
  %v1805 = vmul.f32 %v1791, 0.0012755102
  %v1806 = vmul.f32 %v1258, %v1258
  %v1807 = vmul.f32 %v1259, %v1259
  %v1808 = vmul.f32 %v1260, %v1260
  %v1809 = vmul.f32 %v1261, %v1261
  %v1810 = vmul.f32 %v1262, %v1262
  %v1811 = vmul.f32 %v1263, %v1263
  %v1812 = vmul.f32 %v1264, %v1264
  %v1813 = vmul.f32 %v1265, %v1265
  %v1814 = vmul.f32 %v1266, %v1266
  %v1815 = vmul.f32 %v1267, %v1267
  %v1816 = vmul.f32 %v1268, %v1268
  %v1817 = vmul.f32 %v1269, %v1269
  %v1818 = vmul.f32 %v1270, %v1270
  %v1819 = vsub.f32 %v1793, %v1806
  %v1820 = vsub.f32 %v1794, %v1807
  %v1821 = vsub.f32 %v1795, %v1808
  %v1822 = vsub.f32 %v1796, %v1809
  %v1823 = vsub.f32 %v1797, %v1810
  %v1824 = vsub.f32 %v1798, %v1811
  %v1825 = vsub.f32 %v1799, %v1812
  %v1826 = vsub.f32 %v1800, %v1813
  %v1827 = vsub.f32 %v1801, %v1814
  %v1828 = vsub.f32 %v1802, %v1815
  %v1829 = vsub.f32 %v1803, %v1816
  %v1830 = vsub.f32 %v1804, %v1817
  %v1831 = vsub.f32 %v1805, %v1818
  %v1832 = vmax.f32 %v1819, 0.0
  %v1833 = vmax.f32 %v1820, 0.0
  %v1834 = vmax.f32 %v1821, 0.0
  %v1835 = vmax.f32 %v1822, 0.0
  %v1836 = vmax.f32 %v1823, 0.0
  %v1837 = vmax.f32 %v1824, 0.0
  %v1838 = vmax.f32 %v1825, 0.0
  %v1839 = vmax.f32 %v1826, 0.0
  %v1840 = vmax.f32 %v1827, 0.0
  %v1841 = vmax.f32 %v1828, 0.0
  %v1842 = vmax.f32 %v1829, 0.0
  %v1843 = vmax.f32 %v1830, 0.0
  %v1844 = vmax.f32 %v1831, 0.0
  %v1845 = vadd.f32 %v1832, 1e-05
  %v1846 = vadd.f32 %v1833, 1e-05
  %v1847 = vadd.f32 %v1834, 1e-05
  %v1848 = vadd.f32 %v1835, 1e-05
  %v1849 = vadd.f32 %v1836, 1e-05
  %v1850 = vadd.f32 %v1837, 1e-05
  %v1851 = vadd.f32 %v1838, 1e-05
  %v1852 = vadd.f32 %v1839, 1e-05
  %v1853 = vadd.f32 %v1840, 1e-05
  %v1854 = vadd.f32 %v1841, 1e-05
  %v1855 = vadd.f32 %v1842, 1e-05
  %v1856 = vadd.f32 %v1843, 1e-05
  %v1857 = vadd.f32 %v1844, 1e-05
  %v1858 = vrsqrt.pop %v1845
  %v1859 = vmul.f32 %v1858, %v1845
  %v1860 = vmul.f32 %v1859, %v1858
  %v1861 = vmul.f32 0.5, %v1860
  %v1862 = vsub.f32 1.5, %v1861
  %v1863 = vmul.f32 %v1858, %v1862
  %vm1864 = vweird.f32 %v1845
  %vm1865 = vweird.f32 %v1858
  %vm1866 = vmor %vm1864, %vm1865
  %v1867 = vsel %vm1866, %v1858, %v1863
  %v1868 = vrsqrt.pop %v1846
  %v1869 = vmul.f32 %v1868, %v1846
  %v1870 = vmul.f32 %v1869, %v1868
  %v1871 = vmul.f32 0.5, %v1870
  %v1872 = vsub.f32 1.5, %v1871
  %v1873 = vmul.f32 %v1868, %v1872
  %vm1874 = vweird.f32 %v1846
  %vm1875 = vweird.f32 %v1868
  %vm1876 = vmor %vm1874, %vm1875
  %v1877 = vsel %vm1876, %v1868, %v1873
  %v1878 = vrsqrt.pop %v1847
  %v1879 = vmul.f32 %v1878, %v1847
  %v1880 = vmul.f32 %v1879, %v1878
  %v1881 = vmul.f32 0.5, %v1880
  %v1882 = vsub.f32 1.5, %v1881
  %v1883 = vmul.f32 %v1878, %v1882
  %vm1884 = vweird.f32 %v1847
  %vm1885 = vweird.f32 %v1878
  %vm1886 = vmor %vm1884, %vm1885
  %v1887 = vsel %vm1886, %v1878, %v1883
  %v1888 = vrsqrt.pop %v1848
  %v1889 = vmul.f32 %v1888, %v1848
  %v1890 = vmul.f32 %v1889, %v1888
  %v1891 = vmul.f32 0.5, %v1890
  %v1892 = vsub.f32 1.5, %v1891
  %v1893 = vmul.f32 %v1888, %v1892
  %vm1894 = vweird.f32 %v1848
  %vm1895 = vweird.f32 %v1888
  %vm1896 = vmor %vm1894, %vm1895
  %v1897 = vsel %vm1896, %v1888, %v1893
  %v1898 = vrsqrt.pop %v1849
  %v1899 = vmul.f32 %v1898, %v1849
  %v1900 = vmul.f32 %v1899, %v1898
  %v1901 = vmul.f32 0.5, %v1900
  %v1902 = vsub.f32 1.5, %v1901
  %v1903 = vmul.f32 %v1898, %v1902
  %vm1904 = vweird.f32 %v1849
  %vm1905 = vweird.f32 %v1898
  %vm1906 = vmor %vm1904, %vm1905
  %v1907 = vsel %vm1906, %v1898, %v1903
  %v1908 = vrsqrt.pop %v1850
  %v1909 = vmul.f32 %v1908, %v1850
  %v1910 = vmul.f32 %v1909, %v1908
  %v1911 = vmul.f32 0.5, %v1910
  %v1912 = vsub.f32 1.5, %v1911
  %v1913 = vmul.f32 %v1908, %v1912
  %vm1914 = vweird.f32 %v1850
  %vm1915 = vweird.f32 %v1908
  %vm1916 = vmor %vm1914, %vm1915
  %v1917 = vsel %vm1916, %v1908, %v1913
  %v1918 = vrsqrt.pop %v1851
  %v1919 = vmul.f32 %v1918, %v1851
  %v1920 = vmul.f32 %v1919, %v1918
  %v1921 = vmul.f32 0.5, %v1920
  %v1922 = vsub.f32 1.5, %v1921
  %v1923 = vmul.f32 %v1918, %v1922
  %vm1924 = vweird.f32 %v1851
  %vm1925 = vweird.f32 %v1918
  %vm1926 = vmor %vm1924, %vm1925
  %v1927 = vsel %vm1926, %v1918, %v1923
  %v1928 = vrsqrt.pop %v1852
  %v1929 = vmul.f32 %v1928, %v1852
  %v1930 = vmul.f32 %v1929, %v1928
  %v1931 = vmul.f32 0.5, %v1930
  %v1932 = vsub.f32 1.5, %v1931
  %v1933 = vmul.f32 %v1928, %v1932
  %vm1934 = vweird.f32 %v1852
  %vm1935 = vweird.f32 %v1928
  %vm1936 = vmor %vm1934, %vm1935
  %v1937 = vsel %vm1936, %v1928, %v1933
  %v1938 = vrsqrt.pop %v1853
  %v1939 = vmul.f32 %v1938, %v1853
  %v1940 = vmul.f32 %v1939, %v1938
  %v1941 = vmul.f32 0.5, %v1940
  %v1942 = vsub.f32 1.5, %v1941
  %v1943 = vmul.f32 %v1938, %v1942
  %vm1944 = vweird.f32 %v1853
  %vm1945 = vweird.f32 %v1938
  %vm1946 = vmor %vm1944, %vm1945
  %v1947 = vsel %vm1946, %v1938, %v1943
  %v1948 = vrsqrt.pop %v1854
  %v1949 = vmul.f32 %v1948, %v1854
  %v1950 = vmul.f32 %v1949, %v1948
  %v1951 = vmul.f32 0.5, %v1950
  %v1952 = vsub.f32 1.5, %v1951
  %v1953 = vmul.f32 %v1948, %v1952
  %vm1954 = vweird.f32 %v1854
  %vm1955 = vweird.f32 %v1948
  %vm1956 = vmor %vm1954, %vm1955
  %v1957 = vsel %vm1956, %v1948, %v1953
  %v1958 = vrsqrt.pop %v1855
  %v1959 = vmul.f32 %v1958, %v1855
  %v1960 = vmul.f32 %v1959, %v1958
  %v1961 = vmul.f32 0.5, %v1960
  %v1962 = vsub.f32 1.5, %v1961
  %v1963 = vmul.f32 %v1958, %v1962
  %vm1964 = vweird.f32 %v1855
  %vm1965 = vweird.f32 %v1958
  %vm1966 = vmor %vm1964, %vm1965
  %v1967 = vsel %vm1966, %v1958, %v1963
  %v1968 = vrsqrt.pop %v1856
  %v1969 = vmul.f32 %v1968, %v1856
  %v1970 = vmul.f32 %v1969, %v1968
  %v1971 = vmul.f32 0.5, %v1970
  %v1972 = vsub.f32 1.5, %v1971
  %v1973 = vmul.f32 %v1968, %v1972
  %vm1974 = vweird.f32 %v1856
  %vm1975 = vweird.f32 %v1968
  %vm1976 = vmor %vm1974, %vm1975
  %v1977 = vsel %vm1976, %v1968, %v1973
  %v1978 = vrsqrt.pop %v1857
  %v1979 = vmul.f32 %v1978, %v1857
  %v1980 = vmul.f32 %v1979, %v1978
  %v1981 = vmul.f32 0.5, %v1980
  %v1982 = vsub.f32 1.5, %v1981
  %v1983 = vmul.f32 %v1978, %v1982
  %vm1984 = vweird.f32 %v1857
  %vm1985 = vweird.f32 %v1978
  %vm1986 = vmor %vm1984, %vm1985
  %v1987 = vsel %vm1986, %v1978, %v1983
  %v1988 = vmul.f32 %v351, %v1867
  %v1989 = vmul.f32 %v352, %v1877
  %v1990 = vmul.f32 %v353, %v1887
  %v1991 = vmul.f32 %v354, %v1897
  %v1992 = vmul.f32 %v355, %v1907
  %v1993 = vmul.f32 %v356, %v1917
  %v1994 = vmul.f32 %v357, %v1927
  %v1995 = vmul.f32 %v358, %v1937
  %v1996 = vmul.f32 %v359, %v1947
  %v1997 = vmul.f32 %v360, %v1957
  %v1998 = vmul.f32 %v361, %v1967
  %v1999 = vmul.f32 %v362, %v1977
  %v2000 = vmul.f32 %v363, %v1987
  %v2001 = vmul.f32 %v1258, %v1988
  %v2002 = vmul.f32 %v1259, %v1989
  %v2003 = vmul.f32 %v1260, %v1990
  %v2004 = vmul.f32 %v1261, %v1991
  %v2005 = vmul.f32 %v1262, %v1992
  %v2006 = vmul.f32 %v1263, %v1993
  %v2007 = vmul.f32 %v1264, %v1994
  %v2008 = vmul.f32 %v1265, %v1995
  %v2009 = vmul.f32 %v1266, %v1996
  %v2010 = vmul.f32 %v1267, %v1997
  %v2011 = vmul.f32 %v1268, %v1998
  %v2012 = vmul.f32 %v1269, %v1999
  %v2013 = vmul.f32 %v1270, %v2000
  %2027 = vrot.lane.b32.xlu0 %v2001, 1
  %v2028 = vpop.permute.xlu0 %2027
  %2029 = vrot.lane.b32.xlu0 %v2002, 1
  %v2030 = vpop.permute.xlu0 %2029
  %2031 = vrot.lane.b32.xlu0 %v2003, 1
  %v2032 = vpop.permute.xlu0 %2031
  %2033 = vrot.lane.b32.xlu0 %v2004, 1
  %v2034 = vpop.permute.xlu0 %2033
  %2035 = vrot.lane.b32.xlu0 %v2005, 1
  %v2036 = vpop.permute.xlu0 %2035
  %2037 = vrot.lane.b32.xlu0 %v2006, 1
  %v2038 = vpop.permute.xlu0 %2037
  %2039 = vrot.lane.b32.xlu0 %v2007, 1
  %v2040 = vpop.permute.xlu0 %2039
  %2041 = vrot.lane.b32.xlu0 %v2008, 1
  %v2042 = vpop.permute.xlu0 %2041
  %2043 = vrot.lane.b32.xlu0 %v2009, 1
  %v2044 = vpop.permute.xlu0 %2043
  %2045 = vrot.lane.b32.xlu0 %v2010, 1
  %v2046 = vpop.permute.xlu0 %2045
  %2047 = vrot.lane.b32.xlu0 %v2011, 1
  %v2048 = vpop.permute.xlu0 %2047
  %2049 = vrot.lane.b32.xlu0 %v2012, 1
  %v2050 = vpop.permute.xlu0 %2049
  %2051 = vrot.lane.b32.xlu0 %v2013, 1
  %v2052 = vpop.permute.xlu0 %2051
  %v2066 = vsub.f32 %v351, %v2028
  %v2067 = vsub.f32 %v352, %v2030
  %v2068 = vsub.f32 %v353, %v2032
  %v2069 = vsub.f32 %v354, %v2034
  %v2070 = vsub.f32 %v355, %v2036
  %v2071 = vsub.f32 %v356, %v2038
  %v2072 = vsub.f32 %v357, %v2040
  %v2073 = vsub.f32 %v358, %v2042
  %v2074 = vsub.f32 %v359, %v2044
  %v2075 = vsub.f32 %v360, %v2046
  %v2076 = vsub.f32 %v361, %v2048
  %v2077 = vsub.f32 %v362, %v2050
  %v2078 = vsub.f32 %v363, %v2052
  %2080 = vset.pattern.permute.xlu0 0
  %2081 = vperm.xlu0 %2080, %v1988
  %v2082 = vpop.permute.xlu0 %2081
  %2085 = vset.pattern.permute.xlu0 0
  %2086 = vperm.xlu0 %2085, %v1989
  %v2087 = vpop.permute.xlu0 %2086
  %2090 = vset.pattern.permute.xlu0 0
  %2091 = vperm.xlu0 %2090, %v1990
  %v2092 = vpop.permute.xlu0 %2091
  %2095 = vset.pattern.permute.xlu0 0
  %2096 = vperm.xlu0 %2095, %v1991
  %v2097 = vpop.permute.xlu0 %2096
  %2100 = vset.pattern.permute.xlu0 0
  %2101 = vperm.xlu0 %2100, %v1992
  %v2102 = vpop.permute.xlu0 %2101
  %2105 = vset.pattern.permute.xlu0 0
  %2106 = vperm.xlu0 %2105, %v1993
  %v2107 = vpop.permute.xlu0 %2106
  %2110 = vset.pattern.permute.xlu0 0
  %2111 = vperm.xlu0 %2110, %v1994
  %v2112 = vpop.permute.xlu0 %2111
  %2115 = vset.pattern.permute.xlu0 0
  %2116 = vperm.xlu0 %2115, %v1995
  %v2117 = vpop.permute.xlu0 %2116
  %2120 = vset.pattern.permute.xlu0 0
  %2121 = vperm.xlu0 %2120, %v1996
  %v2122 = vpop.permute.xlu0 %2121
  %2125 = vset.pattern.permute.xlu0 0
  %2126 = vperm.xlu0 %2125, %v1997
  %v2127 = vpop.permute.xlu0 %2126
  %2130 = vset.pattern.permute.xlu0 0
  %2131 = vperm.xlu0 %2130, %v1998
  %v2132 = vpop.permute.xlu0 %2131
  %2135 = vset.pattern.permute.xlu0 0
  %2136 = vperm.xlu0 %2135, %v1999
  %v2137 = vpop.permute.xlu0 %2136
  %2140 = vset.pattern.permute.xlu0 0
  %2141 = vperm.xlu0 %2140, %v2000
  %v2142 = vpop.permute.xlu0 %2141
  %v2144 = vmul.f32 %v452, %v2082
  %v2145 = vmul.f32 %v508, %v2082
  %v2146 = vmul.f32 %v564, %v2082
  %v2147 = vmul.f32 %v620, %v2082
  %v2148 = vmul.f32 %v676, %v2082
  %v2149 = vmul.f32 %v732, %v2082
  %v2150 = vmul.f32 %v788, %v2082
  %v2151 = vmul.f32 %v455, %v2087
  %v2152 = vmul.f32 %v511, %v2087
  %v2153 = vmul.f32 %v567, %v2087
  %v2154 = vmul.f32 %v623, %v2087
  %v2155 = vmul.f32 %v679, %v2087
  %v2156 = vmul.f32 %v735, %v2087
  %v2157 = vmul.f32 %v791, %v2087
  %v2158 = vmul.f32 %v458, %v2092
  %v2159 = vmul.f32 %v514, %v2092
  %v2160 = vmul.f32 %v570, %v2092
  %v2161 = vmul.f32 %v626, %v2092
  %v2162 = vmul.f32 %v682, %v2092
  %v2163 = vmul.f32 %v738, %v2092
  %v2164 = vmul.f32 %v794, %v2092
  %v2165 = vmul.f32 %v461, %v2097
  %v2166 = vmul.f32 %v517, %v2097
  %v2167 = vmul.f32 %v573, %v2097
  %v2168 = vmul.f32 %v629, %v2097
  %v2169 = vmul.f32 %v685, %v2097
  %v2170 = vmul.f32 %v741, %v2097
  %v2171 = vmul.f32 %v797, %v2097
  %v2172 = vmul.f32 %v464, %v2102
  %v2173 = vmul.f32 %v520, %v2102
  %v2174 = vmul.f32 %v576, %v2102
  %v2175 = vmul.f32 %v632, %v2102
  %v2176 = vmul.f32 %v688, %v2102
  %v2177 = vmul.f32 %v744, %v2102
  %v2178 = vmul.f32 %v800, %v2102
  %v2179 = vmul.f32 %v467, %v2107
  %v2180 = vmul.f32 %v523, %v2107
  %v2181 = vmul.f32 %v579, %v2107
  %v2182 = vmul.f32 %v635, %v2107
  %v2183 = vmul.f32 %v691, %v2107
  %v2184 = vmul.f32 %v747, %v2107
  %v2185 = vmul.f32 %v803, %v2107
  %v2186 = vmul.f32 %v470, %v2112
  %v2187 = vmul.f32 %v526, %v2112
  %v2188 = vmul.f32 %v582, %v2112
  %v2189 = vmul.f32 %v638, %v2112
  %v2190 = vmul.f32 %v694, %v2112
  %v2191 = vmul.f32 %v750, %v2112
  %v2192 = vmul.f32 %v806, %v2112
  %v2193 = vmul.f32 %v473, %v2117
  %v2194 = vmul.f32 %v529, %v2117
  %v2195 = vmul.f32 %v585, %v2117
  %v2196 = vmul.f32 %v641, %v2117
  %v2197 = vmul.f32 %v697, %v2117
  %v2198 = vmul.f32 %v753, %v2117
  %v2199 = vmul.f32 %v809, %v2117
  %v2200 = vmul.f32 %v476, %v2122
  %v2201 = vmul.f32 %v532, %v2122
  %v2202 = vmul.f32 %v588, %v2122
  %v2203 = vmul.f32 %v644, %v2122
  %v2204 = vmul.f32 %v700, %v2122
  %v2205 = vmul.f32 %v756, %v2122
  %v2206 = vmul.f32 %v812, %v2122
  %v2207 = vmul.f32 %v479, %v2127
  %v2208 = vmul.f32 %v535, %v2127
  %v2209 = vmul.f32 %v591, %v2127
  %v2210 = vmul.f32 %v647, %v2127
  %v2211 = vmul.f32 %v703, %v2127
  %v2212 = vmul.f32 %v759, %v2127
  %v2213 = vmul.f32 %v815, %v2127
  %v2214 = vmul.f32 %v482, %v2132
  %v2215 = vmul.f32 %v538, %v2132
  %v2216 = vmul.f32 %v594, %v2132
  %v2217 = vmul.f32 %v650, %v2132
  %v2218 = vmul.f32 %v706, %v2132
  %v2219 = vmul.f32 %v762, %v2132
  %v2220 = vmul.f32 %v818, %v2132
  %v2221 = vmul.f32 %v485, %v2137
  %v2222 = vmul.f32 %v541, %v2137
  %v2223 = vmul.f32 %v597, %v2137
  %v2224 = vmul.f32 %v653, %v2137
  %v2225 = vmul.f32 %v709, %v2137
  %v2226 = vmul.f32 %v765, %v2137
  %v2227 = vmul.f32 %v821, %v2137
  %v2228 = vmul.f32 %v488, %v2142
  %v2229 = vmul.f32 %v544, %v2142
  %v2230 = vmul.f32 %v600, %v2142
  %v2231 = vmul.f32 %v656, %v2142
  %v2232 = vmul.f32 %v712, %v2142
  %v2233 = vmul.f32 %v768, %v2142
  %v2234 = vmul.f32 %v824, %v2142
  %2236 = vset.pattern.permute.xlu0 1
  %2237 = vperm.xlu0 %2236, %v2066
  %v2238 = vpop.permute.xlu0 %2237
  %2241 = vset.pattern.permute.xlu0 1
  %2242 = vperm.xlu0 %2241, %v2067
  %v2243 = vpop.permute.xlu0 %2242
  %2246 = vset.pattern.permute.xlu0 1
  %2247 = vperm.xlu0 %2246, %v2068
  %v2248 = vpop.permute.xlu0 %2247
  %2251 = vset.pattern.permute.xlu0 1
  %2252 = vperm.xlu0 %2251, %v2069
  %v2253 = vpop.permute.xlu0 %2252
  %2256 = vset.pattern.permute.xlu0 1
  %2257 = vperm.xlu0 %2256, %v2070
  %v2258 = vpop.permute.xlu0 %2257
  %2261 = vset.pattern.permute.xlu0 1
  %2262 = vperm.xlu0 %2261, %v2071
  %v2263 = vpop.permute.xlu0 %2262
  %2266 = vset.pattern.permute.xlu0 1
  %2267 = vperm.xlu0 %2266, %v2072
  %v2268 = vpop.permute.xlu0 %2267
  %2271 = vset.pattern.permute.xlu0 1
  %2272 = vperm.xlu0 %2271, %v2073
  %v2273 = vpop.permute.xlu0 %2272
  %2276 = vset.pattern.permute.xlu0 1
  %2277 = vperm.xlu0 %2276, %v2074
  %v2278 = vpop.permute.xlu0 %2277
  %2281 = vset.pattern.permute.xlu0 1
  %2282 = vperm.xlu0 %2281, %v2075
  %v2283 = vpop.permute.xlu0 %2282
  %2286 = vset.pattern.permute.xlu0 1
  %2287 = vperm.xlu0 %2286, %v2076
  %v2288 = vpop.permute.xlu0 %2287
  %2291 = vset.pattern.permute.xlu0 1
  %2292 = vperm.xlu0 %2291, %v2077
  %v2293 = vpop.permute.xlu0 %2292
  %2296 = vset.pattern.permute.xlu0 1
  %2297 = vperm.xlu0 %2296, %v2078
  %v2298 = vpop.permute.xlu0 %2297
  %v2300 = vadd.f32 %v2144, %v2238
  %v2301 = vadd.f32 %v2145, %v2238
  %v2302 = vadd.f32 %v2146, %v2238
  %v2303 = vadd.f32 %v2147, %v2238
  %v2304 = vadd.f32 %v2148, %v2238
  %v2305 = vadd.f32 %v2149, %v2238
  %v2306 = vadd.f32 %v2150, %v2238
  %v2307 = vadd.f32 %v2151, %v2243
  %v2308 = vadd.f32 %v2152, %v2243
  %v2309 = vadd.f32 %v2153, %v2243
  %v2310 = vadd.f32 %v2154, %v2243
  %v2311 = vadd.f32 %v2155, %v2243
  %v2312 = vadd.f32 %v2156, %v2243
  %v2313 = vadd.f32 %v2157, %v2243
  %v2314 = vadd.f32 %v2158, %v2248
  %v2315 = vadd.f32 %v2159, %v2248
  %v2316 = vadd.f32 %v2160, %v2248
  %v2317 = vadd.f32 %v2161, %v2248
  %v2318 = vadd.f32 %v2162, %v2248
  %v2319 = vadd.f32 %v2163, %v2248
  %v2320 = vadd.f32 %v2164, %v2248
  %v2321 = vadd.f32 %v2165, %v2253
  %v2322 = vadd.f32 %v2166, %v2253
  %v2323 = vadd.f32 %v2167, %v2253
  %v2324 = vadd.f32 %v2168, %v2253
  %v2325 = vadd.f32 %v2169, %v2253
  %v2326 = vadd.f32 %v2170, %v2253
  %v2327 = vadd.f32 %v2171, %v2253
  %v2328 = vadd.f32 %v2172, %v2258
  %v2329 = vadd.f32 %v2173, %v2258
  %v2330 = vadd.f32 %v2174, %v2258
  %v2331 = vadd.f32 %v2175, %v2258
  %v2332 = vadd.f32 %v2176, %v2258
  %v2333 = vadd.f32 %v2177, %v2258
  %v2334 = vadd.f32 %v2178, %v2258
  %v2335 = vadd.f32 %v2179, %v2263
  %v2336 = vadd.f32 %v2180, %v2263
  %v2337 = vadd.f32 %v2181, %v2263
  %v2338 = vadd.f32 %v2182, %v2263
  %v2339 = vadd.f32 %v2183, %v2263
  %v2340 = vadd.f32 %v2184, %v2263
  %v2341 = vadd.f32 %v2185, %v2263
  %v2342 = vadd.f32 %v2186, %v2268
  %v2343 = vadd.f32 %v2187, %v2268
  %v2344 = vadd.f32 %v2188, %v2268
  %v2345 = vadd.f32 %v2189, %v2268
  %v2346 = vadd.f32 %v2190, %v2268
  %v2347 = vadd.f32 %v2191, %v2268
  %v2348 = vadd.f32 %v2192, %v2268
  %v2349 = vadd.f32 %v2193, %v2273
  %v2350 = vadd.f32 %v2194, %v2273
  %v2351 = vadd.f32 %v2195, %v2273
  %v2352 = vadd.f32 %v2196, %v2273
  %v2353 = vadd.f32 %v2197, %v2273
  %v2354 = vadd.f32 %v2198, %v2273
  %v2355 = vadd.f32 %v2199, %v2273
  %v2356 = vadd.f32 %v2200, %v2278
  %v2357 = vadd.f32 %v2201, %v2278
  %v2358 = vadd.f32 %v2202, %v2278
  %v2359 = vadd.f32 %v2203, %v2278
  %v2360 = vadd.f32 %v2204, %v2278
  %v2361 = vadd.f32 %v2205, %v2278
  %v2362 = vadd.f32 %v2206, %v2278
  %v2363 = vadd.f32 %v2207, %v2283
  %v2364 = vadd.f32 %v2208, %v2283
  %v2365 = vadd.f32 %v2209, %v2283
  %v2366 = vadd.f32 %v2210, %v2283
  %v2367 = vadd.f32 %v2211, %v2283
  %v2368 = vadd.f32 %v2212, %v2283
  %v2369 = vadd.f32 %v2213, %v2283
  %v2370 = vadd.f32 %v2214, %v2288
  %v2371 = vadd.f32 %v2215, %v2288
  %v2372 = vadd.f32 %v2216, %v2288
  %v2373 = vadd.f32 %v2217, %v2288
  %v2374 = vadd.f32 %v2218, %v2288
  %v2375 = vadd.f32 %v2219, %v2288
  %v2376 = vadd.f32 %v2220, %v2288
  %v2377 = vadd.f32 %v2221, %v2293
  %v2378 = vadd.f32 %v2222, %v2293
  %v2379 = vadd.f32 %v2223, %v2293
  %v2380 = vadd.f32 %v2224, %v2293
  %v2381 = vadd.f32 %v2225, %v2293
  %v2382 = vadd.f32 %v2226, %v2293
  %v2383 = vadd.f32 %v2227, %v2293
  %v2384 = vadd.f32 %v2228, %v2298
  %v2385 = vadd.f32 %v2229, %v2298
  %v2386 = vadd.f32 %v2230, %v2298
  %v2387 = vadd.f32 %v2231, %v2298
  %v2388 = vadd.f32 %v2232, %v2298
  %v2389 = vadd.f32 %v2233, %v2298
  %v2390 = vadd.f32 %v2234, %v2298
  %s2391 = smul.u32 8, 13
  %s2392 = smul.u32 %s2391, 7
  %s2393 = sshll.u32 %s2392, 4
  %2394 = dma.done [#allocation4], %s2393
  %v2395 = vld [vmem:[#allocation2] sm:$0xff]
  %v2396 = vld [vmem:[#allocation2 + $0x8] sm:$0xff]
  %v2397 = vld [vmem:[#allocation2 + $0x10] sm:$0xff]
  %v2398 = vld [vmem:[#allocation2 + $0x18] sm:$0xff]
  %v2399 = vld [vmem:[#allocation2 + $0x20] sm:$0xff]
  %v2400 = vld [vmem:[#allocation2 + $0x28] sm:$0xff]
  %v2401 = vld [vmem:[#allocation2 + $0x30] sm:$0xff]
  %v2402 = vld [vmem:[#allocation2 + $0x38] sm:$0xff]
  %v2403 = vld [vmem:[#allocation2 + $0x40] sm:$0xff]
  %v2404 = vld [vmem:[#allocation2 + $0x48] sm:$0xff]
  %v2405 = vld [vmem:[#allocation2 + $0x50] sm:$0xff]
  %v2406 = vld [vmem:[#allocation2 + $0x58] sm:$0xff]
  %v2407 = vld [vmem:[#allocation2 + $0x60] sm:$0xff]
  %v2408 = vld [vmem:[#allocation2 + $0x68] sm:$0xff]
  %v2409 = vld [vmem:[#allocation2 + $0x70] sm:$0xff]
  %v2410 = vld [vmem:[#allocation2 + $0x78] sm:$0xff]
  %v2411 = vld [vmem:[#allocation2 + $0x80] sm:$0xff]
  %v2412 = vld [vmem:[#allocation2 + $0x88] sm:$0xff]
  %v2413 = vld [vmem:[#allocation2 + $0x90] sm:$0xff]
  %v2414 = vld [vmem:[#allocation2 + $0x98] sm:$0xff]
  %v2415 = vld [vmem:[#allocation2 + $0xa0] sm:$0xff]
  %v2416 = vld [vmem:[#allocation2 + $0xa8] sm:$0xff]
  %v2417 = vld [vmem:[#allocation2 + $0xb0] sm:$0xff]
  %v2418 = vld [vmem:[#allocation2 + $0xb8] sm:$0xff]
  %v2419 = vld [vmem:[#allocation2 + $0xc0] sm:$0xff]
  %v2420 = vld [vmem:[#allocation2 + $0xc8] sm:$0xff]
  %v2421 = vld [vmem:[#allocation2 + $0xd0] sm:$0xff]
  %v2422 = vld [vmem:[#allocation2 + $0xd8] sm:$0xff]
  %v2423 = vld [vmem:[#allocation2 + $0xe0] sm:$0xff]
  %v2424 = vld [vmem:[#allocation2 + $0xe8] sm:$0xff]
  %v2425 = vld [vmem:[#allocation2 + $0xf0] sm:$0xff]
  %v2426 = vld [vmem:[#allocation2 + $0xf8] sm:$0xff]
  %v2427 = vld [vmem:[#allocation2 + $0x100] sm:$0xff]
  %v2428 = vld [vmem:[#allocation2 + $0x108] sm:$0xff]
  %v2429 = vld [vmem:[#allocation2 + $0x110] sm:$0xff]
  %v2430 = vld [vmem:[#allocation2 + $0x118] sm:$0xff]
  %v2431 = vld [vmem:[#allocation2 + $0x120] sm:$0xff]
  %v2432 = vld [vmem:[#allocation2 + $0x128] sm:$0xff]
  %v2433 = vld [vmem:[#allocation2 + $0x130] sm:$0xff]
  %v2434 = vld [vmem:[#allocation2 + $0x138] sm:$0xff]
  %v2435 = vld [vmem:[#allocation2 + $0x140] sm:$0xff]
  %v2436 = vld [vmem:[#allocation2 + $0x148] sm:$0xff]
  %v2437 = vld [vmem:[#allocation2 + $0x150] sm:$0xff]
  %v2438 = vld [vmem:[#allocation2 + $0x158] sm:$0xff]
  %v2439 = vld [vmem:[#allocation2 + $0x160] sm:$0xff]
  %v2440 = vld [vmem:[#allocation2 + $0x168] sm:$0xff]
  %v2441 = vld [vmem:[#allocation2 + $0x170] sm:$0xff]
  %v2442 = vld [vmem:[#allocation2 + $0x178] sm:$0xff]
  %v2443 = vld [vmem:[#allocation2 + $0x180] sm:$0xff]
  %v2444 = vld [vmem:[#allocation2 + $0x188] sm:$0xff]
  %v2445 = vld [vmem:[#allocation2 + $0x190] sm:$0xff]
  %v2446 = vld [vmem:[#allocation2 + $0x198] sm:$0xff]
  %v2447 = vld [vmem:[#allocation2 + $0x1a0] sm:$0xff]
  %v2448 = vld [vmem:[#allocation2 + $0x1a8] sm:$0xff]
  %v2449 = vld [vmem:[#allocation2 + $0x1b0] sm:$0xff]
  %v2450 = vld [vmem:[#allocation2 + $0x1b8] sm:$0xff]
  %v2451 = vld [vmem:[#allocation2 + $0x1c0] sm:$0xff]
  %v2452 = vld [vmem:[#allocation2 + $0x1c8] sm:$0xff]
  %v2453 = vld [vmem:[#allocation2 + $0x1d0] sm:$0xff]
  %v2454 = vld [vmem:[#allocation2 + $0x1d8] sm:$0xff]
  %v2455 = vld [vmem:[#allocation2 + $0x1e0] sm:$0xff]
  %v2456 = vld [vmem:[#allocation2 + $0x1e8] sm:$0xff]
  %v2457 = vld [vmem:[#allocation2 + $0x1f0] sm:$0xff]
  %v2458 = vld [vmem:[#allocation2 + $0x1f8] sm:$0xff]
  %v2459 = vld [vmem:[#allocation2 + $0x200] sm:$0xff]
  %v2460 = vld [vmem:[#allocation2 + $0x208] sm:$0xff]
  %v2461 = vld [vmem:[#allocation2 + $0x210] sm:$0xff]
  %v2462 = vld [vmem:[#allocation2 + $0x218] sm:$0xff]
  %v2463 = vld [vmem:[#allocation2 + $0x220] sm:$0xff]
  %v2464 = vld [vmem:[#allocation2 + $0x228] sm:$0xff]
  %v2465 = vld [vmem:[#allocation2 + $0x230] sm:$0xff]
  %v2466 = vld [vmem:[#allocation2 + $0x238] sm:$0xff]
  %v2467 = vld [vmem:[#allocation2 + $0x240] sm:$0xff]
  %v2468 = vld [vmem:[#allocation2 + $0x248] sm:$0xff]
  %v2469 = vld [vmem:[#allocation2 + $0x250] sm:$0xff]
  %v2470 = vld [vmem:[#allocation2 + $0x258] sm:$0xff]
  %v2471 = vld [vmem:[#allocation2 + $0x260] sm:$0xff]
  %v2472 = vld [vmem:[#allocation2 + $0x268] sm:$0xff]
  %v2473 = vld [vmem:[#allocation2 + $0x270] sm:$0xff]
  %v2474 = vld [vmem:[#allocation2 + $0x278] sm:$0xff]
  %v2475 = vld [vmem:[#allocation2 + $0x280] sm:$0xff]
  %v2476 = vld [vmem:[#allocation2 + $0x288] sm:$0xff]
  %v2477 = vld [vmem:[#allocation2 + $0x290] sm:$0xff]
  %v2478 = vld [vmem:[#allocation2 + $0x298] sm:$0xff]
  %v2479 = vld [vmem:[#allocation2 + $0x2a0] sm:$0xff]
  %v2480 = vld [vmem:[#allocation2 + $0x2a8] sm:$0xff]
  %v2481 = vld [vmem:[#allocation2 + $0x2b0] sm:$0xff]
  %v2482 = vld [vmem:[#allocation2 + $0x2b8] sm:$0xff]
  %v2483 = vld [vmem:[#allocation2 + $0x2c0] sm:$0xff]
  %v2484 = vld [vmem:[#allocation2 + $0x2c8] sm:$0xff]
  %v2485 = vld [vmem:[#allocation2 + $0x2d0] sm:$0xff]
  %v2486 = vadd.f32 %v2395, %v2300
  %v2487 = vadd.f32 %v2396, %v2301
  %v2488 = vadd.f32 %v2397, %v2302
  %v2489 = vadd.f32 %v2398, %v2303
  %v2490 = vadd.f32 %v2399, %v2304
  %v2491 = vadd.f32 %v2400, %v2305
  %v2492 = vadd.f32 %v2401, %v2306
  %v2493 = vadd.f32 %v2402, %v2307
  %v2494 = vadd.f32 %v2403, %v2308
  %v2495 = vadd.f32 %v2404, %v2309
  %v2496 = vadd.f32 %v2405, %v2310
  %v2497 = vadd.f32 %v2406, %v2311
  %v2498 = vadd.f32 %v2407, %v2312
  %v2499 = vadd.f32 %v2408, %v2313
  %v2500 = vadd.f32 %v2409, %v2314
  %v2501 = vadd.f32 %v2410, %v2315
  %v2502 = vadd.f32 %v2411, %v2316
  %v2503 = vadd.f32 %v2412, %v2317
  %v2504 = vadd.f32 %v2413, %v2318
  %v2505 = vadd.f32 %v2414, %v2319
  %v2506 = vadd.f32 %v2415, %v2320
  %v2507 = vadd.f32 %v2416, %v2321
  %v2508 = vadd.f32 %v2417, %v2322
  %v2509 = vadd.f32 %v2418, %v2323
  %v2510 = vadd.f32 %v2419, %v2324
  %v2511 = vadd.f32 %v2420, %v2325
  %v2512 = vadd.f32 %v2421, %v2326
  %v2513 = vadd.f32 %v2422, %v2327
  %v2514 = vadd.f32 %v2423, %v2328
  %v2515 = vadd.f32 %v2424, %v2329
  %v2516 = vadd.f32 %v2425, %v2330
  %v2517 = vadd.f32 %v2426, %v2331
  %v2518 = vadd.f32 %v2427, %v2332
  %v2519 = vadd.f32 %v2428, %v2333
  %v2520 = vadd.f32 %v2429, %v2334
  %v2521 = vadd.f32 %v2430, %v2335
  %v2522 = vadd.f32 %v2431, %v2336
  %v2523 = vadd.f32 %v2432, %v2337
  %v2524 = vadd.f32 %v2433, %v2338
  %v2525 = vadd.f32 %v2434, %v2339
  %v2526 = vadd.f32 %v2435, %v2340
  %v2527 = vadd.f32 %v2436, %v2341
  %v2528 = vadd.f32 %v2437, %v2342
  %v2529 = vadd.f32 %v2438, %v2343
  %v2530 = vadd.f32 %v2439, %v2344
  %v2531 = vadd.f32 %v2440, %v2345
  %v2532 = vadd.f32 %v2441, %v2346
  %v2533 = vadd.f32 %v2442, %v2347
  %v2534 = vadd.f32 %v2443, %v2348
  %v2535 = vadd.f32 %v2444, %v2349
  %v2536 = vadd.f32 %v2445, %v2350
  %v2537 = vadd.f32 %v2446, %v2351
  %v2538 = vadd.f32 %v2447, %v2352
  %v2539 = vadd.f32 %v2448, %v2353
  %v2540 = vadd.f32 %v2449, %v2354
  %v2541 = vadd.f32 %v2450, %v2355
  %v2542 = vadd.f32 %v2451, %v2356
  %v2543 = vadd.f32 %v2452, %v2357
  %v2544 = vadd.f32 %v2453, %v2358
  %v2545 = vadd.f32 %v2454, %v2359
  %v2546 = vadd.f32 %v2455, %v2360
  %v2547 = vadd.f32 %v2456, %v2361
  %v2548 = vadd.f32 %v2457, %v2362
  %v2549 = vadd.f32 %v2458, %v2363
  %v2550 = vadd.f32 %v2459, %v2364
  %v2551 = vadd.f32 %v2460, %v2365
  %v2552 = vadd.f32 %v2461, %v2366
  %v2553 = vadd.f32 %v2462, %v2367
  %v2554 = vadd.f32 %v2463, %v2368
  %v2555 = vadd.f32 %v2464, %v2369
  %v2556 = vadd.f32 %v2465, %v2370
  %v2557 = vadd.f32 %v2466, %v2371
  %v2558 = vadd.f32 %v2467, %v2372
  %v2559 = vadd.f32 %v2468, %v2373
  %v2560 = vadd.f32 %v2469, %v2374
  %v2561 = vadd.f32 %v2470, %v2375
  %v2562 = vadd.f32 %v2471, %v2376
  %v2563 = vadd.f32 %v2472, %v2377
  %v2564 = vadd.f32 %v2473, %v2378
  %v2565 = vadd.f32 %v2474, %v2379
  %v2566 = vadd.f32 %v2475, %v2380
  %v2567 = vadd.f32 %v2476, %v2381
  %v2568 = vadd.f32 %v2477, %v2382
  %v2569 = vadd.f32 %v2478, %v2383
  %v2570 = vadd.f32 %v2479, %v2384
  %v2571 = vadd.f32 %v2480, %v2385
  %v2572 = vadd.f32 %v2481, %v2386
  %v2573 = vadd.f32 %v2482, %v2387
  %v2574 = vadd.f32 %v2483, %v2388
  %v2575 = vadd.f32 %v2484, %v2389
  %v2576 = vadd.f32 %v2485, %v2390
  %v2577 = vmax.f32 %v2486, 0.0
  %v2578 = vmax.f32 %v2487, 0.0
  %v2579 = vmax.f32 %v2488, 0.0
  %v2580 = vmax.f32 %v2489, 0.0
  %v2581 = vmax.f32 %v2490, 0.0
  %v2582 = vmax.f32 %v2491, 0.0
  %v2583 = vmax.f32 %v2492, 0.0
  %v2584 = vmax.f32 %v2493, 0.0
  %v2585 = vmax.f32 %v2494, 0.0
  %v2586 = vmax.f32 %v2495, 0.0
  %v2587 = vmax.f32 %v2496, 0.0
  %v2588 = vmax.f32 %v2497, 0.0
  %v2589 = vmax.f32 %v2498, 0.0
  %v2590 = vmax.f32 %v2499, 0.0
  %v2591 = vmax.f32 %v2500, 0.0
  %v2592 = vmax.f32 %v2501, 0.0
  %v2593 = vmax.f32 %v2502, 0.0
  %v2594 = vmax.f32 %v2503, 0.0
  %v2595 = vmax.f32 %v2504, 0.0
  %v2596 = vmax.f32 %v2505, 0.0
  %v2597 = vmax.f32 %v2506, 0.0
  %v2598 = vmax.f32 %v2507, 0.0
  %v2599 = vmax.f32 %v2508, 0.0
  %v2600 = vmax.f32 %v2509, 0.0
  %v2601 = vmax.f32 %v2510, 0.0
  %v2602 = vmax.f32 %v2511, 0.0
  %v2603 = vmax.f32 %v2512, 0.0
  %v2604 = vmax.f32 %v2513, 0.0
  %v2605 = vmax.f32 %v2514, 0.0
  %v2606 = vmax.f32 %v2515, 0.0
  %v2607 = vmax.f32 %v2516, 0.0
  %v2608 = vmax.f32 %v2517, 0.0
  %v2609 = vmax.f32 %v2518, 0.0
  %v2610 = vmax.f32 %v2519, 0.0
  %v2611 = vmax.f32 %v2520, 0.0
  %v2612 = vmax.f32 %v2521, 0.0
  %v2613 = vmax.f32 %v2522, 0.0
  %v2614 = vmax.f32 %v2523, 0.0
  %v2615 = vmax.f32 %v2524, 0.0
  %v2616 = vmax.f32 %v2525, 0.0
  %v2617 = vmax.f32 %v2526, 0.0
  %v2618 = vmax.f32 %v2527, 0.0
  %v2619 = vmax.f32 %v2528, 0.0
  %v2620 = vmax.f32 %v2529, 0.0
  %v2621 = vmax.f32 %v2530, 0.0
  %v2622 = vmax.f32 %v2531, 0.0
  %v2623 = vmax.f32 %v2532, 0.0
  %v2624 = vmax.f32 %v2533, 0.0
  %v2625 = vmax.f32 %v2534, 0.0
  %v2626 = vmax.f32 %v2535, 0.0
  %v2627 = vmax.f32 %v2536, 0.0
  %v2628 = vmax.f32 %v2537, 0.0
  %v2629 = vmax.f32 %v2538, 0.0
  %v2630 = vmax.f32 %v2539, 0.0
  %v2631 = vmax.f32 %v2540, 0.0
  %v2632 = vmax.f32 %v2541, 0.0
  %v2633 = vmax.f32 %v2542, 0.0
  %v2634 = vmax.f32 %v2543, 0.0
  %v2635 = vmax.f32 %v2544, 0.0
  %v2636 = vmax.f32 %v2545, 0.0
  %v2637 = vmax.f32 %v2546, 0.0
  %v2638 = vmax.f32 %v2547, 0.0
  %v2639 = vmax.f32 %v2548, 0.0
  %v2640 = vmax.f32 %v2549, 0.0
  %v2641 = vmax.f32 %v2550, 0.0
  %v2642 = vmax.f32 %v2551, 0.0
  %v2643 = vmax.f32 %v2552, 0.0
  %v2644 = vmax.f32 %v2553, 0.0
  %v2645 = vmax.f32 %v2554, 0.0
  %v2646 = vmax.f32 %v2555, 0.0
  %v2647 = vmax.f32 %v2556, 0.0
  %v2648 = vmax.f32 %v2557, 0.0
  %v2649 = vmax.f32 %v2558, 0.0
  %v2650 = vmax.f32 %v2559, 0.0
  %v2651 = vmax.f32 %v2560, 0.0
  %v2652 = vmax.f32 %v2561, 0.0
  %v2653 = vmax.f32 %v2562, 0.0
  %v2654 = vmax.f32 %v2563, 0.0
  %v2655 = vmax.f32 %v2564, 0.0
  %v2656 = vmax.f32 %v2565, 0.0
  %v2657 = vmax.f32 %v2566, 0.0
  %v2658 = vmax.f32 %v2567, 0.0
  %v2659 = vmax.f32 %v2568, 0.0
  %v2660 = vmax.f32 %v2569, 0.0
  %v2661 = vmax.f32 %v2570, 0.0
  %v2662 = vmax.f32 %v2571, 0.0
  %v2663 = vmax.f32 %v2572, 0.0
  %v2664 = vmax.f32 %v2573, 0.0
  %v2665 = vmax.f32 %v2574, 0.0
  %v2666 = vmax.f32 %v2575, 0.0
  %v2667 = vmax.f32 %v2576, 0.0
  %s2668 = smul.u32 104, 1
  %s2669 = sshll.u32 %s2668, 4
  %2670 = dma.done %s217, %s2669
  %v2671 = vld [vmem:[#allocation3] sm:$0xff]
  %v2672 = vld [vmem:[#allocation3 + $0x8] sm:$0xff]
  %v2673 = vld [vmem:[#allocation3 + $0x10] sm:$0xff]
  %v2674 = vld [vmem:[#allocation3 + $0x18] sm:$0xff]
  %v2675 = vld [vmem:[#allocation3 + $0x20] sm:$0xff]
  %v2676 = vld [vmem:[#allocation3 + $0x28] sm:$0xff]
  %v2677 = vld [vmem:[#allocation3 + $0x30] sm:$0xff]
  %v2678 = vld [vmem:[#allocation3 + $0x38] sm:$0xff]
  %v2679 = vld [vmem:[#allocation3 + $0x40] sm:$0xff]
  %v2680 = vld [vmem:[#allocation3 + $0x48] sm:$0xff]
  %v2681 = vld [vmem:[#allocation3 + $0x50] sm:$0xff]
  %v2682 = vld [vmem:[#allocation3 + $0x58] sm:$0xff]
  %v2683 = vld [vmem:[#allocation3 + $0x60] sm:$0xff]
  %v2685 = vsel %vm394, %v2671, 0
  %v2688 = vsel %vm394, %v2672, 0
  %v2691 = vsel %vm394, %v2673, 0
  %v2694 = vsel %vm394, %v2674, 0
  %v2697 = vsel %vm394, %v2675, 0
  %v2700 = vsel %vm394, %v2676, 0
  %v2703 = vsel %vm394, %v2677, 0
  %v2706 = vsel %vm394, %v2678, 0
  %v2709 = vsel %vm394, %v2679, 0
  %v2712 = vsel %vm394, %v2680, 0
  %v2715 = vsel %vm394, %v2681, 0
  %v2718 = vsel %vm394, %v2682, 0
  %v2721 = vsel %vm394, %v2683, 0
  %2723 = vmatpush.msra.mxu0 0.0
  %2724 = vmatpush.msra.mxu0 0.0
  %2725 = vmatpush.msra.mxu0 0.0
  %2726 = vmatpush.msra.mxu0 %v2661
  %2727 = vmatpush.msra.mxu0 %v2654
  %2728 = vmatpush.msra.mxu0 %v2647
  %2729 = vmatpush.msra.mxu0 %v2640
  %2730 = vmatpush.msra.mxu0 %v2633
  %2731 = vmatpush.msra.mxu0 %v2626
  %2732 = vmatpush.msra.mxu0 %v2619
  %2733 = vmatpush.msra.mxu0 %v2612
  %2734 = vmatpush.msra.mxu0 %v2605
  %2735 = vmatpush.msra.mxu0 %v2598
  %2736 = vmatpush.msra.mxu0 %v2591
  %2737 = vmatpush.msra.mxu0 %v2584
  %2738 = vmatpush.msra.mxu0 %v2577
  %2739 = vmatmul.f32.gmra.mxu0 %v2685
  %v2740 = vpop.f32.mrf.mxu0
  %v2741 = vadd.f32 0.0, %v2740
  %2742 = vmatmul.f32.gmra.mxu0 %v2688
  %v2743 = vpop.f32.mrf.mxu0
  %v2744 = vadd.f32 0.0, %v2743
  %2745 = vmatmul.f32.gmra.mxu0 %v2691
  %v2746 = vpop.f32.mrf.mxu0
  %v2747 = vadd.f32 0.0, %v2746
  %2748 = vmatmul.f32.gmra.mxu0 %v2694
  %v2749 = vpop.f32.mrf.mxu0
  %v2750 = vadd.f32 0.0, %v2749
  %2751 = vmatmul.f32.gmra.mxu0 %v2697
  %v2752 = vpop.f32.mrf.mxu0
  %v2753 = vadd.f32 0.0, %v2752
  %2754 = vmatmul.f32.gmra.mxu0 %v2700
  %v2755 = vpop.f32.mrf.mxu0
  %v2756 = vadd.f32 0.0, %v2755
  %2757 = vmatmul.f32.gmra.mxu0 %v2703
  %v2758 = vpop.f32.mrf.mxu0
  %v2759 = vadd.f32 0.0, %v2758
  %2760 = vmatmul.f32.gmra.mxu0 %v2706
  %v2761 = vpop.f32.mrf.mxu0
  %v2762 = vadd.f32 0.0, %v2761
  %2763 = vmatmul.f32.gmra.mxu0 %v2709
  %v2764 = vpop.f32.mrf.mxu0
  %v2765 = vadd.f32 0.0, %v2764
  %2766 = vmatmul.f32.gmra.mxu0 %v2712
  %v2767 = vpop.f32.mrf.mxu0
  %v2768 = vadd.f32 0.0, %v2767
  %2769 = vmatmul.f32.gmra.mxu0 %v2715
  %v2770 = vpop.f32.mrf.mxu0
  %v2771 = vadd.f32 0.0, %v2770
  %2772 = vmatmul.f32.gmra.mxu0 %v2718
  %v2773 = vpop.f32.mrf.mxu0
  %v2774 = vadd.f32 0.0, %v2773
  %2775 = vmatmul.f32.gmra.mxu0 %v2721
  %v2776 = vpop.f32.mrf.mxu0
  %v2777 = vadd.f32 0.0, %v2776
  %2778 = vdwg.mxu0
  %2779 = vmatpush.msra.mxu0 0.0
  %2780 = vmatpush.msra.mxu0 0.0
  %2781 = vmatpush.msra.mxu0 0.0
  %2782 = vmatpush.msra.mxu0 %v2662
  %2783 = vmatpush.msra.mxu0 %v2655
  %2784 = vmatpush.msra.mxu0 %v2648
  %2785 = vmatpush.msra.mxu0 %v2641
  %2786 = vmatpush.msra.mxu0 %v2634
  %2787 = vmatpush.msra.mxu0 %v2627
  %2788 = vmatpush.msra.mxu0 %v2620
  %2789 = vmatpush.msra.mxu0 %v2613
  %2790 = vmatpush.msra.mxu0 %v2606
  %2791 = vmatpush.msra.mxu0 %v2599
  %2792 = vmatpush.msra.mxu0 %v2592
  %2793 = vmatpush.msra.mxu0 %v2585
  %2794 = vmatpush.msra.mxu0 %v2578
  %2795 = vmatmul.f32.gmra.mxu0 %v2685
  %v2796 = vpop.f32.mrf.mxu0
  %v2797 = vadd.f32 0.0, %v2796
  %2798 = vmatmul.f32.gmra.mxu0 %v2688
  %v2799 = vpop.f32.mrf.mxu0
  %v2800 = vadd.f32 0.0, %v2799
  %2801 = vmatmul.f32.gmra.mxu0 %v2691
  %v2802 = vpop.f32.mrf.mxu0
  %v2803 = vadd.f32 0.0, %v2802
  %2804 = vmatmul.f32.gmra.mxu0 %v2694
  %v2805 = vpop.f32.mrf.mxu0
  %v2806 = vadd.f32 0.0, %v2805
  %2807 = vmatmul.f32.gmra.mxu0 %v2697
  %v2808 = vpop.f32.mrf.mxu0
  %v2809 = vadd.f32 0.0, %v2808
  %2810 = vmatmul.f32.gmra.mxu0 %v2700
  %v2811 = vpop.f32.mrf.mxu0
  %v2812 = vadd.f32 0.0, %v2811
  %2813 = vmatmul.f32.gmra.mxu0 %v2703
  %v2814 = vpop.f32.mrf.mxu0
  %v2815 = vadd.f32 0.0, %v2814
  %2816 = vmatmul.f32.gmra.mxu0 %v2706
  %v2817 = vpop.f32.mrf.mxu0
  %v2818 = vadd.f32 0.0, %v2817
  %2819 = vmatmul.f32.gmra.mxu0 %v2709
  %v2820 = vpop.f32.mrf.mxu0
  %v2821 = vadd.f32 0.0, %v2820
  %2822 = vmatmul.f32.gmra.mxu0 %v2712
  %v2823 = vpop.f32.mrf.mxu0
  %v2824 = vadd.f32 0.0, %v2823
  %2825 = vmatmul.f32.gmra.mxu0 %v2715
  %v2826 = vpop.f32.mrf.mxu0
  %v2827 = vadd.f32 0.0, %v2826
  %2828 = vmatmul.f32.gmra.mxu0 %v2718
  %v2829 = vpop.f32.mrf.mxu0
  %v2830 = vadd.f32 0.0, %v2829
  %2831 = vmatmul.f32.gmra.mxu0 %v2721
  %v2832 = vpop.f32.mrf.mxu0
  %v2833 = vadd.f32 0.0, %v2832
  %2834 = vdwg.mxu0
  %2835 = vmatpush.msra.mxu0 0.0
  %2836 = vmatpush.msra.mxu0 0.0
  %2837 = vmatpush.msra.mxu0 0.0
  %2838 = vmatpush.msra.mxu0 %v2663
  %2839 = vmatpush.msra.mxu0 %v2656
  %2840 = vmatpush.msra.mxu0 %v2649
  %2841 = vmatpush.msra.mxu0 %v2642
  %2842 = vmatpush.msra.mxu0 %v2635
  %2843 = vmatpush.msra.mxu0 %v2628
  %2844 = vmatpush.msra.mxu0 %v2621
  %2845 = vmatpush.msra.mxu0 %v2614
  %2846 = vmatpush.msra.mxu0 %v2607
  %2847 = vmatpush.msra.mxu0 %v2600
  %2848 = vmatpush.msra.mxu0 %v2593
  %2849 = vmatpush.msra.mxu0 %v2586
  %2850 = vmatpush.msra.mxu0 %v2579
  %2851 = vmatmul.f32.gmra.mxu0 %v2685
  %v2852 = vpop.f32.mrf.mxu0
  %v2853 = vadd.f32 0.0, %v2852
  %2854 = vmatmul.f32.gmra.mxu0 %v2688
  %v2855 = vpop.f32.mrf.mxu0
  %v2856 = vadd.f32 0.0, %v2855
  %2857 = vmatmul.f32.gmra.mxu0 %v2691
  %v2858 = vpop.f32.mrf.mxu0
  %v2859 = vadd.f32 0.0, %v2858
  %2860 = vmatmul.f32.gmra.mxu0 %v2694
  %v2861 = vpop.f32.mrf.mxu0
  %v2862 = vadd.f32 0.0, %v2861
  %2863 = vmatmul.f32.gmra.mxu0 %v2697
  %v2864 = vpop.f32.mrf.mxu0
  %v2865 = vadd.f32 0.0, %v2864
  %2866 = vmatmul.f32.gmra.mxu0 %v2700
  %v2867 = vpop.f32.mrf.mxu0
  %v2868 = vadd.f32 0.0, %v2867
  %2869 = vmatmul.f32.gmra.mxu0 %v2703
  %v2870 = vpop.f32.mrf.mxu0
  %v2871 = vadd.f32 0.0, %v2870
  %2872 = vmatmul.f32.gmra.mxu0 %v2706
  %v2873 = vpop.f32.mrf.mxu0
  %v2874 = vadd.f32 0.0, %v2873
  %2875 = vmatmul.f32.gmra.mxu0 %v2709
  %v2876 = vpop.f32.mrf.mxu0
  %v2877 = vadd.f32 0.0, %v2876
  %2878 = vmatmul.f32.gmra.mxu0 %v2712
  %v2879 = vpop.f32.mrf.mxu0
  %v2880 = vadd.f32 0.0, %v2879
  %2881 = vmatmul.f32.gmra.mxu0 %v2715
  %v2882 = vpop.f32.mrf.mxu0
  %v2883 = vadd.f32 0.0, %v2882
  %2884 = vmatmul.f32.gmra.mxu0 %v2718
  %v2885 = vpop.f32.mrf.mxu0
  %v2886 = vadd.f32 0.0, %v2885
  %2887 = vmatmul.f32.gmra.mxu0 %v2721
  %v2888 = vpop.f32.mrf.mxu0
  %v2889 = vadd.f32 0.0, %v2888
  %2890 = vdwg.mxu0
  %2891 = vmatpush.msra.mxu0 0.0
  %2892 = vmatpush.msra.mxu0 0.0
  %2893 = vmatpush.msra.mxu0 0.0
  %2894 = vmatpush.msra.mxu0 %v2664
  %2895 = vmatpush.msra.mxu0 %v2657
  %2896 = vmatpush.msra.mxu0 %v2650
  %2897 = vmatpush.msra.mxu0 %v2643
  %2898 = vmatpush.msra.mxu0 %v2636
  %2899 = vmatpush.msra.mxu0 %v2629
  %2900 = vmatpush.msra.mxu0 %v2622
  %2901 = vmatpush.msra.mxu0 %v2615
  %2902 = vmatpush.msra.mxu0 %v2608
  %2903 = vmatpush.msra.mxu0 %v2601
  %2904 = vmatpush.msra.mxu0 %v2594
  %2905 = vmatpush.msra.mxu0 %v2587
  %2906 = vmatpush.msra.mxu0 %v2580
  %2907 = vmatmul.f32.gmra.mxu0 %v2685
  %v2908 = vpop.f32.mrf.mxu0
  %v2909 = vadd.f32 0.0, %v2908
  %2910 = vmatmul.f32.gmra.mxu0 %v2688
  %v2911 = vpop.f32.mrf.mxu0
  %v2912 = vadd.f32 0.0, %v2911
  %2913 = vmatmul.f32.gmra.mxu0 %v2691
  %v2914 = vpop.f32.mrf.mxu0
  %v2915 = vadd.f32 0.0, %v2914
  %2916 = vmatmul.f32.gmra.mxu0 %v2694
  %v2917 = vpop.f32.mrf.mxu0
  %v2918 = vadd.f32 0.0, %v2917
  %2919 = vmatmul.f32.gmra.mxu0 %v2697
  %v2920 = vpop.f32.mrf.mxu0
  %v2921 = vadd.f32 0.0, %v2920
  %2922 = vmatmul.f32.gmra.mxu0 %v2700
  %v2923 = vpop.f32.mrf.mxu0
  %v2924 = vadd.f32 0.0, %v2923
  %2925 = vmatmul.f32.gmra.mxu0 %v2703
  %v2926 = vpop.f32.mrf.mxu0
  %v2927 = vadd.f32 0.0, %v2926
  %2928 = vmatmul.f32.gmra.mxu0 %v2706
  %v2929 = vpop.f32.mrf.mxu0
  %v2930 = vadd.f32 0.0, %v2929
  %2931 = vmatmul.f32.gmra.mxu0 %v2709
  %v2932 = vpop.f32.mrf.mxu0
  %v2933 = vadd.f32 0.0, %v2932
  %2934 = vmatmul.f32.gmra.mxu0 %v2712
  %v2935 = vpop.f32.mrf.mxu0
  %v2936 = vadd.f32 0.0, %v2935
  %2937 = vmatmul.f32.gmra.mxu0 %v2715
  %v2938 = vpop.f32.mrf.mxu0
  %v2939 = vadd.f32 0.0, %v2938
  %2940 = vmatmul.f32.gmra.mxu0 %v2718
  %v2941 = vpop.f32.mrf.mxu0
  %v2942 = vadd.f32 0.0, %v2941
  %2943 = vmatmul.f32.gmra.mxu0 %v2721
  %v2944 = vpop.f32.mrf.mxu0
  %v2945 = vadd.f32 0.0, %v2944
  %2946 = vdwg.mxu0
  %2947 = vmatpush.msra.mxu0 0.0
  %2948 = vmatpush.msra.mxu0 0.0
  %2949 = vmatpush.msra.mxu0 0.0
  %2950 = vmatpush.msra.mxu0 %v2665
  %2951 = vmatpush.msra.mxu0 %v2658
  %2952 = vmatpush.msra.mxu0 %v2651
  %2953 = vmatpush.msra.mxu0 %v2644
  %2954 = vmatpush.msra.mxu0 %v2637
  %2955 = vmatpush.msra.mxu0 %v2630
  %2956 = vmatpush.msra.mxu0 %v2623
  %2957 = vmatpush.msra.mxu0 %v2616
  %2958 = vmatpush.msra.mxu0 %v2609
  %2959 = vmatpush.msra.mxu0 %v2602
  %2960 = vmatpush.msra.mxu0 %v2595
  %2961 = vmatpush.msra.mxu0 %v2588
  %2962 = vmatpush.msra.mxu0 %v2581
  %2963 = vmatmul.f32.gmra.mxu0 %v2685
  %v2964 = vpop.f32.mrf.mxu0
  %v2965 = vadd.f32 0.0, %v2964
  %2966 = vmatmul.f32.gmra.mxu0 %v2688
  %v2967 = vpop.f32.mrf.mxu0
  %v2968 = vadd.f32 0.0, %v2967
  %2969 = vmatmul.f32.gmra.mxu0 %v2691
  %v2970 = vpop.f32.mrf.mxu0
  %v2971 = vadd.f32 0.0, %v2970
  %2972 = vmatmul.f32.gmra.mxu0 %v2694
  %v2973 = vpop.f32.mrf.mxu0
  %v2974 = vadd.f32 0.0, %v2973
  %2975 = vmatmul.f32.gmra.mxu0 %v2697
  %v2976 = vpop.f32.mrf.mxu0
  %v2977 = vadd.f32 0.0, %v2976
  %2978 = vmatmul.f32.gmra.mxu0 %v2700
  %v2979 = vpop.f32.mrf.mxu0
  %v2980 = vadd.f32 0.0, %v2979
  %2981 = vmatmul.f32.gmra.mxu0 %v2703
  %v2982 = vpop.f32.mrf.mxu0
  %v2983 = vadd.f32 0.0, %v2982
  %2984 = vmatmul.f32.gmra.mxu0 %v2706
  %v2985 = vpop.f32.mrf.mxu0
  %v2986 = vadd.f32 0.0, %v2985
  %2987 = vmatmul.f32.gmra.mxu0 %v2709
  %v2988 = vpop.f32.mrf.mxu0
  %v2989 = vadd.f32 0.0, %v2988
  %2990 = vmatmul.f32.gmra.mxu0 %v2712
  %v2991 = vpop.f32.mrf.mxu0
  %v2992 = vadd.f32 0.0, %v2991
  %2993 = vmatmul.f32.gmra.mxu0 %v2715
  %v2994 = vpop.f32.mrf.mxu0
  %v2995 = vadd.f32 0.0, %v2994
  %2996 = vmatmul.f32.gmra.mxu0 %v2718
  %v2997 = vpop.f32.mrf.mxu0
  %v2998 = vadd.f32 0.0, %v2997
  %2999 = vmatmul.f32.gmra.mxu0 %v2721
  %v3000 = vpop.f32.mrf.mxu0
  %v3001 = vadd.f32 0.0, %v3000
  %3002 = vdwg.mxu0
  %3003 = vmatpush.msra.mxu0 0.0
  %3004 = vmatpush.msra.mxu0 0.0
  %3005 = vmatpush.msra.mxu0 0.0
  %3006 = vmatpush.msra.mxu0 %v2666
  %3007 = vmatpush.msra.mxu0 %v2659
  %3008 = vmatpush.msra.mxu0 %v2652
  %3009 = vmatpush.msra.mxu0 %v2645
  %3010 = vmatpush.msra.mxu0 %v2638
  %3011 = vmatpush.msra.mxu0 %v2631
  %3012 = vmatpush.msra.mxu0 %v2624
  %3013 = vmatpush.msra.mxu0 %v2617
  %3014 = vmatpush.msra.mxu0 %v2610
  %3015 = vmatpush.msra.mxu0 %v2603
  %3016 = vmatpush.msra.mxu0 %v2596
  %3017 = vmatpush.msra.mxu0 %v2589
  %3018 = vmatpush.msra.mxu0 %v2582
  %3019 = vmatmul.f32.gmra.mxu0 %v2685
  %v3020 = vpop.f32.mrf.mxu0
  %v3021 = vadd.f32 0.0, %v3020
  %3022 = vmatmul.f32.gmra.mxu0 %v2688
  %v3023 = vpop.f32.mrf.mxu0
  %v3024 = vadd.f32 0.0, %v3023
  %3025 = vmatmul.f32.gmra.mxu0 %v2691
  %v3026 = vpop.f32.mrf.mxu0
  %v3027 = vadd.f32 0.0, %v3026
  %3028 = vmatmul.f32.gmra.mxu0 %v2694
  %v3029 = vpop.f32.mrf.mxu0
  %v3030 = vadd.f32 0.0, %v3029
  %3031 = vmatmul.f32.gmra.mxu0 %v2697
  %v3032 = vpop.f32.mrf.mxu0
  %v3033 = vadd.f32 0.0, %v3032
  %3034 = vmatmul.f32.gmra.mxu0 %v2700
  %v3035 = vpop.f32.mrf.mxu0
  %v3036 = vadd.f32 0.0, %v3035
  %3037 = vmatmul.f32.gmra.mxu0 %v2703
  %v3038 = vpop.f32.mrf.mxu0
  %v3039 = vadd.f32 0.0, %v3038
  %3040 = vmatmul.f32.gmra.mxu0 %v2706
  %v3041 = vpop.f32.mrf.mxu0
  %v3042 = vadd.f32 0.0, %v3041
  %3043 = vmatmul.f32.gmra.mxu0 %v2709
  %v3044 = vpop.f32.mrf.mxu0
  %v3045 = vadd.f32 0.0, %v3044
  %3046 = vmatmul.f32.gmra.mxu0 %v2712
  %v3047 = vpop.f32.mrf.mxu0
  %v3048 = vadd.f32 0.0, %v3047
  %3049 = vmatmul.f32.gmra.mxu0 %v2715
  %v3050 = vpop.f32.mrf.mxu0
  %v3051 = vadd.f32 0.0, %v3050
  %3052 = vmatmul.f32.gmra.mxu0 %v2718
  %v3053 = vpop.f32.mrf.mxu0
  %v3054 = vadd.f32 0.0, %v3053
  %3055 = vmatmul.f32.gmra.mxu0 %v2721
  %v3056 = vpop.f32.mrf.mxu0
  %v3057 = vadd.f32 0.0, %v3056
  %3058 = vdwg.mxu0
  %3059 = vmatpush.msra.mxu0 0.0
  %3060 = vmatpush.msra.mxu0 0.0
  %3061 = vmatpush.msra.mxu0 0.0
  %3062 = vmatpush.msra.mxu0 %v2667
  %3063 = vmatpush.msra.mxu0 %v2660
  %3064 = vmatpush.msra.mxu0 %v2653
  %3065 = vmatpush.msra.mxu0 %v2646
  %3066 = vmatpush.msra.mxu0 %v2639
  %3067 = vmatpush.msra.mxu0 %v2632
  %3068 = vmatpush.msra.mxu0 %v2625
  %3069 = vmatpush.msra.mxu0 %v2618
  %3070 = vmatpush.msra.mxu0 %v2611
  %3071 = vmatpush.msra.mxu0 %v2604
  %3072 = vmatpush.msra.mxu0 %v2597
  %3073 = vmatpush.msra.mxu0 %v2590
  %3074 = vmatpush.msra.mxu0 %v2583
  %3075 = vmatmul.f32.gmra.mxu0 %v2685
  %v3076 = vpop.f32.mrf.mxu0
  %v3077 = vadd.f32 0.0, %v3076
  %3078 = vmatmul.f32.gmra.mxu0 %v2688
  %v3079 = vpop.f32.mrf.mxu0
  %v3080 = vadd.f32 0.0, %v3079
  %3081 = vmatmul.f32.gmra.mxu0 %v2691
  %v3082 = vpop.f32.mrf.mxu0
  %v3083 = vadd.f32 0.0, %v3082
  %3084 = vmatmul.f32.gmra.mxu0 %v2694
  %v3085 = vpop.f32.mrf.mxu0
  %v3086 = vadd.f32 0.0, %v3085
  %3087 = vmatmul.f32.gmra.mxu0 %v2697
  %v3088 = vpop.f32.mrf.mxu0
  %v3089 = vadd.f32 0.0, %v3088
  %3090 = vmatmul.f32.gmra.mxu0 %v2700
  %v3091 = vpop.f32.mrf.mxu0
  %v3092 = vadd.f32 0.0, %v3091
  %3093 = vmatmul.f32.gmra.mxu0 %v2703
  %v3094 = vpop.f32.mrf.mxu0
  %v3095 = vadd.f32 0.0, %v3094
  %3096 = vmatmul.f32.gmra.mxu0 %v2706
  %v3097 = vpop.f32.mrf.mxu0
  %v3098 = vadd.f32 0.0, %v3097
  %3099 = vmatmul.f32.gmra.mxu0 %v2709
  %v3100 = vpop.f32.mrf.mxu0
  %v3101 = vadd.f32 0.0, %v3100
  %3102 = vmatmul.f32.gmra.mxu0 %v2712
  %v3103 = vpop.f32.mrf.mxu0
  %v3104 = vadd.f32 0.0, %v3103
  %3105 = vmatmul.f32.gmra.mxu0 %v2715
  %v3106 = vpop.f32.mrf.mxu0
  %v3107 = vadd.f32 0.0, %v3106
  %3108 = vmatmul.f32.gmra.mxu0 %v2718
  %v3109 = vpop.f32.mrf.mxu0
  %v3110 = vadd.f32 0.0, %v3109
  %3111 = vmatmul.f32.gmra.mxu0 %v2721
  %v3112 = vpop.f32.mrf.mxu0
  %v3113 = vadd.f32 0.0, %v3112
  %3114 = vdwg.mxu0
  %v3116 = vsel %vm826, %v3077, 0
  %v3119 = vsel %vm826, %v3080, 0
  %v3122 = vsel %vm826, %v3083, 0
  %v3125 = vsel %vm826, %v3086, 0
  %v3128 = vsel %vm826, %v3089, 0
  %v3131 = vsel %vm826, %v3092, 0
  %v3134 = vsel %vm826, %v3095, 0
  %v3137 = vsel %vm826, %v3098, 0
  %v3140 = vsel %vm826, %v3101, 0
  %v3143 = vsel %vm826, %v3104, 0
  %v3146 = vsel %vm826, %v3107, 0
  %v3149 = vsel %vm826, %v3110, 0
  %v3152 = vsel %vm826, %v3113, 0
  %3154 = vmatpush.msra.mxu0 1.0
  %3155 = vmatpush.msra.mxu0 1.0
  %3156 = vmatpush.msra.mxu0 1.0
  %3157 = vmatpush.msra.mxu0 1.0
  %3158 = vmatpush.msra.mxu0 1.0
  %3159 = vmatpush.msra.mxu0 1.0
  %3160 = vmatpush.msra.mxu0 1.0
  %3161 = vmatpush.msra.mxu0 1.0
  %3162 = vmatpush.msra.mxu0 1.0
  %3163 = vmatpush.msra.mxu0 1.0
  %3164 = vmatpush.msra.mxu0 1.0
  %3165 = vmatpush.msra.mxu0 1.0
  %3166 = vmatpush.msra.mxu0 1.0
  %3167 = vmatpush.msra.mxu0 1.0
  %3168 = vmatpush.msra.mxu0 1.0
  %3169 = vmatpush.msra.mxu0 1.0
  %3170 = vmatmul.f32.gmra.mxu0 %v2741
  %v3171 = vpop.f32.mrf.mxu0
  %v3172 = vadd.f32 0.0, %v3171
  %3173 = vmatmul.f32.gmra.mxu0 %v2744
  %v3174 = vpop.f32.mrf.mxu0
  %v3175 = vadd.f32 0.0, %v3174
  %3176 = vmatmul.f32.gmra.mxu0 %v2747
  %v3177 = vpop.f32.mrf.mxu0
  %v3178 = vadd.f32 0.0, %v3177
  %3179 = vmatmul.f32.gmra.mxu0 %v2750
  %v3180 = vpop.f32.mrf.mxu0
  %v3181 = vadd.f32 0.0, %v3180
  %3182 = vmatmul.f32.gmra.mxu0 %v2753
  %v3183 = vpop.f32.mrf.mxu0
  %v3184 = vadd.f32 0.0, %v3183
  %3185 = vmatmul.f32.gmra.mxu0 %v2756
  %v3186 = vpop.f32.mrf.mxu0
  %v3187 = vadd.f32 0.0, %v3186
  %3188 = vmatmul.f32.gmra.mxu0 %v2759
  %v3189 = vpop.f32.mrf.mxu0
  %v3190 = vadd.f32 0.0, %v3189
  %3191 = vmatmul.f32.gmra.mxu0 %v2762
  %v3192 = vpop.f32.mrf.mxu0
  %v3193 = vadd.f32 0.0, %v3192
  %3194 = vmatmul.f32.gmra.mxu0 %v2765
  %v3195 = vpop.f32.mrf.mxu0
  %v3196 = vadd.f32 0.0, %v3195
  %3197 = vmatmul.f32.gmra.mxu0 %v2768
  %v3198 = vpop.f32.mrf.mxu0
  %v3199 = vadd.f32 0.0, %v3198
  %3200 = vmatmul.f32.gmra.mxu0 %v2771
  %v3201 = vpop.f32.mrf.mxu0
  %v3202 = vadd.f32 0.0, %v3201
  %3203 = vmatmul.f32.gmra.mxu0 %v2774
  %v3204 = vpop.f32.mrf.mxu0
  %v3205 = vadd.f32 0.0, %v3204
  %3206 = vmatmul.f32.gmra.mxu0 %v2777
  %v3207 = vpop.f32.mrf.mxu0
  %v3208 = vadd.f32 0.0, %v3207
  %3209 = vdwg.mxu0
  %3210 = vmatpush.msra.mxu0 1.0
  %3211 = vmatpush.msra.mxu0 1.0
  %3212 = vmatpush.msra.mxu0 1.0
  %3213 = vmatpush.msra.mxu0 1.0
  %3214 = vmatpush.msra.mxu0 1.0
  %3215 = vmatpush.msra.mxu0 1.0
  %3216 = vmatpush.msra.mxu0 1.0
  %3217 = vmatpush.msra.mxu0 1.0
  %3218 = vmatpush.msra.mxu0 1.0
  %3219 = vmatpush.msra.mxu0 1.0
  %3220 = vmatpush.msra.mxu0 1.0
  %3221 = vmatpush.msra.mxu0 1.0
  %3222 = vmatpush.msra.mxu0 1.0
  %3223 = vmatpush.msra.mxu0 1.0
  %3224 = vmatpush.msra.mxu0 1.0
  %3225 = vmatpush.msra.mxu0 1.0
  %3226 = vmatmul.f32.gmra.mxu0 %v2797
  %v3227 = vpop.f32.mrf.mxu0
  %v3228 = vadd.f32 %v3172, %v3227
  %3229 = vmatmul.f32.gmra.mxu0 %v2800
  %v3230 = vpop.f32.mrf.mxu0
  %v3231 = vadd.f32 %v3175, %v3230
  %3232 = vmatmul.f32.gmra.mxu0 %v2803
  %v3233 = vpop.f32.mrf.mxu0
  %v3234 = vadd.f32 %v3178, %v3233
  %3235 = vmatmul.f32.gmra.mxu0 %v2806
  %v3236 = vpop.f32.mrf.mxu0
  %v3237 = vadd.f32 %v3181, %v3236
  %3238 = vmatmul.f32.gmra.mxu0 %v2809
  %v3239 = vpop.f32.mrf.mxu0
  %v3240 = vadd.f32 %v3184, %v3239
  %3241 = vmatmul.f32.gmra.mxu0 %v2812
  %v3242 = vpop.f32.mrf.mxu0
  %v3243 = vadd.f32 %v3187, %v3242
  %3244 = vmatmul.f32.gmra.mxu0 %v2815
  %v3245 = vpop.f32.mrf.mxu0
  %v3246 = vadd.f32 %v3190, %v3245
  %3247 = vmatmul.f32.gmra.mxu0 %v2818
  %v3248 = vpop.f32.mrf.mxu0
  %v3249 = vadd.f32 %v3193, %v3248
  %3250 = vmatmul.f32.gmra.mxu0 %v2821
  %v3251 = vpop.f32.mrf.mxu0
  %v3252 = vadd.f32 %v3196, %v3251
  %3253 = vmatmul.f32.gmra.mxu0 %v2824
  %v3254 = vpop.f32.mrf.mxu0
  %v3255 = vadd.f32 %v3199, %v3254
  %3256 = vmatmul.f32.gmra.mxu0 %v2827
  %v3257 = vpop.f32.mrf.mxu0
  %v3258 = vadd.f32 %v3202, %v3257
  %3259 = vmatmul.f32.gmra.mxu0 %v2830
  %v3260 = vpop.f32.mrf.mxu0
  %v3261 = vadd.f32 %v3205, %v3260
  %3262 = vmatmul.f32.gmra.mxu0 %v2833
  %v3263 = vpop.f32.mrf.mxu0
  %v3264 = vadd.f32 %v3208, %v3263
  %3265 = vdwg.mxu0
  %3266 = vmatpush.msra.mxu0 1.0
  %3267 = vmatpush.msra.mxu0 1.0
  %3268 = vmatpush.msra.mxu0 1.0
  %3269 = vmatpush.msra.mxu0 1.0
  %3270 = vmatpush.msra.mxu0 1.0
  %3271 = vmatpush.msra.mxu0 1.0
  %3272 = vmatpush.msra.mxu0 1.0
  %3273 = vmatpush.msra.mxu0 1.0
  %3274 = vmatpush.msra.mxu0 1.0
  %3275 = vmatpush.msra.mxu0 1.0
  %3276 = vmatpush.msra.mxu0 1.0
  %3277 = vmatpush.msra.mxu0 1.0
  %3278 = vmatpush.msra.mxu0 1.0
  %3279 = vmatpush.msra.mxu0 1.0
  %3280 = vmatpush.msra.mxu0 1.0
  %3281 = vmatpush.msra.mxu0 1.0
  %3282 = vmatmul.f32.gmra.mxu0 %v2853
  %v3283 = vpop.f32.mrf.mxu0
  %v3284 = vadd.f32 %v3228, %v3283
  %3285 = vmatmul.f32.gmra.mxu0 %v2856
  %v3286 = vpop.f32.mrf.mxu0
  %v3287 = vadd.f32 %v3231, %v3286
  %3288 = vmatmul.f32.gmra.mxu0 %v2859
  %v3289 = vpop.f32.mrf.mxu0
  %v3290 = vadd.f32 %v3234, %v3289
  %3291 = vmatmul.f32.gmra.mxu0 %v2862
  %v3292 = vpop.f32.mrf.mxu0
  %v3293 = vadd.f32 %v3237, %v3292
  %3294 = vmatmul.f32.gmra.mxu0 %v2865
  %v3295 = vpop.f32.mrf.mxu0
  %v3296 = vadd.f32 %v3240, %v3295
  %3297 = vmatmul.f32.gmra.mxu0 %v2868
  %v3298 = vpop.f32.mrf.mxu0
  %v3299 = vadd.f32 %v3243, %v3298
  %3300 = vmatmul.f32.gmra.mxu0 %v2871
  %v3301 = vpop.f32.mrf.mxu0
  %v3302 = vadd.f32 %v3246, %v3301
  %3303 = vmatmul.f32.gmra.mxu0 %v2874
  %v3304 = vpop.f32.mrf.mxu0
  %v3305 = vadd.f32 %v3249, %v3304
  %3306 = vmatmul.f32.gmra.mxu0 %v2877
  %v3307 = vpop.f32.mrf.mxu0
  %v3308 = vadd.f32 %v3252, %v3307
  %3309 = vmatmul.f32.gmra.mxu0 %v2880
  %v3310 = vpop.f32.mrf.mxu0
  %v3311 = vadd.f32 %v3255, %v3310
  %3312 = vmatmul.f32.gmra.mxu0 %v2883
  %v3313 = vpop.f32.mrf.mxu0
  %v3314 = vadd.f32 %v3258, %v3313
  %3315 = vmatmul.f32.gmra.mxu0 %v2886
  %v3316 = vpop.f32.mrf.mxu0
  %v3317 = vadd.f32 %v3261, %v3316
  %3318 = vmatmul.f32.gmra.mxu0 %v2889
  %v3319 = vpop.f32.mrf.mxu0
  %v3320 = vadd.f32 %v3264, %v3319
  %3321 = vdwg.mxu0
  %3322 = vmatpush.msra.mxu0 1.0
  %3323 = vmatpush.msra.mxu0 1.0
  %3324 = vmatpush.msra.mxu0 1.0
  %3325 = vmatpush.msra.mxu0 1.0
  %3326 = vmatpush.msra.mxu0 1.0
  %3327 = vmatpush.msra.mxu0 1.0
  %3328 = vmatpush.msra.mxu0 1.0
  %3329 = vmatpush.msra.mxu0 1.0
  %3330 = vmatpush.msra.mxu0 1.0
  %3331 = vmatpush.msra.mxu0 1.0
  %3332 = vmatpush.msra.mxu0 1.0
  %3333 = vmatpush.msra.mxu0 1.0
  %3334 = vmatpush.msra.mxu0 1.0
  %3335 = vmatpush.msra.mxu0 1.0
  %3336 = vmatpush.msra.mxu0 1.0
  %3337 = vmatpush.msra.mxu0 1.0
  %3338 = vmatmul.f32.gmra.mxu0 %v2909
  %v3339 = vpop.f32.mrf.mxu0
  %v3340 = vadd.f32 %v3284, %v3339
  %3341 = vmatmul.f32.gmra.mxu0 %v2912
  %v3342 = vpop.f32.mrf.mxu0
  %v3343 = vadd.f32 %v3287, %v3342
  %3344 = vmatmul.f32.gmra.mxu0 %v2915
  %v3345 = vpop.f32.mrf.mxu0
  %v3346 = vadd.f32 %v3290, %v3345
  %3347 = vmatmul.f32.gmra.mxu0 %v2918
  %v3348 = vpop.f32.mrf.mxu0
  %v3349 = vadd.f32 %v3293, %v3348
  %3350 = vmatmul.f32.gmra.mxu0 %v2921
  %v3351 = vpop.f32.mrf.mxu0
  %v3352 = vadd.f32 %v3296, %v3351
  %3353 = vmatmul.f32.gmra.mxu0 %v2924
  %v3354 = vpop.f32.mrf.mxu0
  %v3355 = vadd.f32 %v3299, %v3354
  %3356 = vmatmul.f32.gmra.mxu0 %v2927
  %v3357 = vpop.f32.mrf.mxu0
  %v3358 = vadd.f32 %v3302, %v3357
  %3359 = vmatmul.f32.gmra.mxu0 %v2930
  %v3360 = vpop.f32.mrf.mxu0
  %v3361 = vadd.f32 %v3305, %v3360
  %3362 = vmatmul.f32.gmra.mxu0 %v2933
  %v3363 = vpop.f32.mrf.mxu0
  %v3364 = vadd.f32 %v3308, %v3363
  %3365 = vmatmul.f32.gmra.mxu0 %v2936
  %v3366 = vpop.f32.mrf.mxu0
  %v3367 = vadd.f32 %v3311, %v3366
  %3368 = vmatmul.f32.gmra.mxu0 %v2939
  %v3369 = vpop.f32.mrf.mxu0
  %v3370 = vadd.f32 %v3314, %v3369
  %3371 = vmatmul.f32.gmra.mxu0 %v2942
  %v3372 = vpop.f32.mrf.mxu0
  %v3373 = vadd.f32 %v3317, %v3372
  %3374 = vmatmul.f32.gmra.mxu0 %v2945
  %v3375 = vpop.f32.mrf.mxu0
  %v3376 = vadd.f32 %v3320, %v3375
  %3377 = vdwg.mxu0
  %3378 = vmatpush.msra.mxu0 1.0
  %3379 = vmatpush.msra.mxu0 1.0
  %3380 = vmatpush.msra.mxu0 1.0
  %3381 = vmatpush.msra.mxu0 1.0
  %3382 = vmatpush.msra.mxu0 1.0
  %3383 = vmatpush.msra.mxu0 1.0
  %3384 = vmatpush.msra.mxu0 1.0
  %3385 = vmatpush.msra.mxu0 1.0
  %3386 = vmatpush.msra.mxu0 1.0
  %3387 = vmatpush.msra.mxu0 1.0
  %3388 = vmatpush.msra.mxu0 1.0
  %3389 = vmatpush.msra.mxu0 1.0
  %3390 = vmatpush.msra.mxu0 1.0
  %3391 = vmatpush.msra.mxu0 1.0
  %3392 = vmatpush.msra.mxu0 1.0
  %3393 = vmatpush.msra.mxu0 1.0
  %3394 = vmatmul.f32.gmra.mxu0 %v2965
  %v3395 = vpop.f32.mrf.mxu0
  %v3396 = vadd.f32 %v3340, %v3395
  %3397 = vmatmul.f32.gmra.mxu0 %v2968
  %v3398 = vpop.f32.mrf.mxu0
  %v3399 = vadd.f32 %v3343, %v3398
  %3400 = vmatmul.f32.gmra.mxu0 %v2971
  %v3401 = vpop.f32.mrf.mxu0
  %v3402 = vadd.f32 %v3346, %v3401
  %3403 = vmatmul.f32.gmra.mxu0 %v2974
  %v3404 = vpop.f32.mrf.mxu0
  %v3405 = vadd.f32 %v3349, %v3404
  %3406 = vmatmul.f32.gmra.mxu0 %v2977
  %v3407 = vpop.f32.mrf.mxu0
  %v3408 = vadd.f32 %v3352, %v3407
  %3409 = vmatmul.f32.gmra.mxu0 %v2980
  %v3410 = vpop.f32.mrf.mxu0
  %v3411 = vadd.f32 %v3355, %v3410
  %3412 = vmatmul.f32.gmra.mxu0 %v2983
  %v3413 = vpop.f32.mrf.mxu0
  %v3414 = vadd.f32 %v3358, %v3413
  %3415 = vmatmul.f32.gmra.mxu0 %v2986
  %v3416 = vpop.f32.mrf.mxu0
  %v3417 = vadd.f32 %v3361, %v3416
  %3418 = vmatmul.f32.gmra.mxu0 %v2989
  %v3419 = vpop.f32.mrf.mxu0
  %v3420 = vadd.f32 %v3364, %v3419
  %3421 = vmatmul.f32.gmra.mxu0 %v2992
  %v3422 = vpop.f32.mrf.mxu0
  %v3423 = vadd.f32 %v3367, %v3422
  %3424 = vmatmul.f32.gmra.mxu0 %v2995
  %v3425 = vpop.f32.mrf.mxu0
  %v3426 = vadd.f32 %v3370, %v3425
  %3427 = vmatmul.f32.gmra.mxu0 %v2998
  %v3428 = vpop.f32.mrf.mxu0
  %v3429 = vadd.f32 %v3373, %v3428
  %3430 = vmatmul.f32.gmra.mxu0 %v3001
  %v3431 = vpop.f32.mrf.mxu0
  %v3432 = vadd.f32 %v3376, %v3431
  %3433 = vdwg.mxu0
  %3434 = vmatpush.msra.mxu0 1.0
  %3435 = vmatpush.msra.mxu0 1.0
  %3436 = vmatpush.msra.mxu0 1.0
  %3437 = vmatpush.msra.mxu0 1.0
  %3438 = vmatpush.msra.mxu0 1.0
  %3439 = vmatpush.msra.mxu0 1.0
  %3440 = vmatpush.msra.mxu0 1.0
  %3441 = vmatpush.msra.mxu0 1.0
  %3442 = vmatpush.msra.mxu0 1.0
  %3443 = vmatpush.msra.mxu0 1.0
  %3444 = vmatpush.msra.mxu0 1.0
  %3445 = vmatpush.msra.mxu0 1.0
  %3446 = vmatpush.msra.mxu0 1.0
  %3447 = vmatpush.msra.mxu0 1.0
  %3448 = vmatpush.msra.mxu0 1.0
  %3449 = vmatpush.msra.mxu0 1.0
  %3450 = vmatmul.f32.gmra.mxu0 %v3021
  %v3451 = vpop.f32.mrf.mxu0
  %v3452 = vadd.f32 %v3396, %v3451
  %3453 = vmatmul.f32.gmra.mxu0 %v3024
  %v3454 = vpop.f32.mrf.mxu0
  %v3455 = vadd.f32 %v3399, %v3454
  %3456 = vmatmul.f32.gmra.mxu0 %v3027
  %v3457 = vpop.f32.mrf.mxu0
  %v3458 = vadd.f32 %v3402, %v3457
  %3459 = vmatmul.f32.gmra.mxu0 %v3030
  %v3460 = vpop.f32.mrf.mxu0
  %v3461 = vadd.f32 %v3405, %v3460
  %3462 = vmatmul.f32.gmra.mxu0 %v3033
  %v3463 = vpop.f32.mrf.mxu0
  %v3464 = vadd.f32 %v3408, %v3463
  %3465 = vmatmul.f32.gmra.mxu0 %v3036
  %v3466 = vpop.f32.mrf.mxu0
  %v3467 = vadd.f32 %v3411, %v3466
  %3468 = vmatmul.f32.gmra.mxu0 %v3039
  %v3469 = vpop.f32.mrf.mxu0
  %v3470 = vadd.f32 %v3414, %v3469
  %3471 = vmatmul.f32.gmra.mxu0 %v3042
  %v3472 = vpop.f32.mrf.mxu0
  %v3473 = vadd.f32 %v3417, %v3472
  %3474 = vmatmul.f32.gmra.mxu0 %v3045
  %v3475 = vpop.f32.mrf.mxu0
  %v3476 = vadd.f32 %v3420, %v3475
  %3477 = vmatmul.f32.gmra.mxu0 %v3048
  %v3478 = vpop.f32.mrf.mxu0
  %v3479 = vadd.f32 %v3423, %v3478
  %3480 = vmatmul.f32.gmra.mxu0 %v3051
  %v3481 = vpop.f32.mrf.mxu0
  %v3482 = vadd.f32 %v3426, %v3481
  %3483 = vmatmul.f32.gmra.mxu0 %v3054
  %v3484 = vpop.f32.mrf.mxu0
  %v3485 = vadd.f32 %v3429, %v3484
  %3486 = vmatmul.f32.gmra.mxu0 %v3057
  %v3487 = vpop.f32.mrf.mxu0
  %v3488 = vadd.f32 %v3432, %v3487
  %3489 = vdwg.mxu0
  %3490 = vmatpush.msra.mxu0 0.0
  %3491 = vmatpush.msra.mxu0 0.0
  %3492 = vmatpush.msra.mxu0 0.0
  %3493 = vmatpush.msra.mxu0 0.0
  %3494 = vmatpush.msra.mxu0 0.0
  %3495 = vmatpush.msra.mxu0 0.0
  %3496 = vmatpush.msra.mxu0 0.0
  %3497 = vmatpush.msra.mxu0 0.0
  %3498 = vmatpush.msra.mxu0 0.0
  %3499 = vmatpush.msra.mxu0 0.0
  %3500 = vmatpush.msra.mxu0 0.0
  %3501 = vmatpush.msra.mxu0 0.0
  %3502 = vmatpush.msra.mxu0 0.0
  %3503 = vmatpush.msra.mxu0 0.0
  %3504 = vmatpush.msra.mxu0 1.0
  %3505 = vmatpush.msra.mxu0 1.0
  %3506 = vmatmul.f32.gmra.mxu0 %v3116
  %v3507 = vpop.f32.mrf.mxu0
  %v3508 = vadd.f32 %v3452, %v3507
  %3509 = vmatmul.f32.gmra.mxu0 %v3119
  %v3510 = vpop.f32.mrf.mxu0
  %v3511 = vadd.f32 %v3455, %v3510
  %3512 = vmatmul.f32.gmra.mxu0 %v3122
  %v3513 = vpop.f32.mrf.mxu0
  %v3514 = vadd.f32 %v3458, %v3513
  %3515 = vmatmul.f32.gmra.mxu0 %v3125
  %v3516 = vpop.f32.mrf.mxu0
  %v3517 = vadd.f32 %v3461, %v3516
  %3518 = vmatmul.f32.gmra.mxu0 %v3128
  %v3519 = vpop.f32.mrf.mxu0
  %v3520 = vadd.f32 %v3464, %v3519
  %3521 = vmatmul.f32.gmra.mxu0 %v3131
  %v3522 = vpop.f32.mrf.mxu0
  %v3523 = vadd.f32 %v3467, %v3522
  %3524 = vmatmul.f32.gmra.mxu0 %v3134
  %v3525 = vpop.f32.mrf.mxu0
  %v3526 = vadd.f32 %v3470, %v3525
  %3527 = vmatmul.f32.gmra.mxu0 %v3137
  %v3528 = vpop.f32.mrf.mxu0
  %v3529 = vadd.f32 %v3473, %v3528
  %3530 = vmatmul.f32.gmra.mxu0 %v3140
  %v3531 = vpop.f32.mrf.mxu0
  %v3532 = vadd.f32 %v3476, %v3531
  %3533 = vmatmul.f32.gmra.mxu0 %v3143
  %v3534 = vpop.f32.mrf.mxu0
  %v3535 = vadd.f32 %v3479, %v3534
  %3536 = vmatmul.f32.gmra.mxu0 %v3146
  %v3537 = vpop.f32.mrf.mxu0
  %v3538 = vadd.f32 %v3482, %v3537
  %3539 = vmatmul.f32.gmra.mxu0 %v3149
  %v3540 = vpop.f32.mrf.mxu0
  %v3541 = vadd.f32 %v3485, %v3540
  %3542 = vmatmul.f32.gmra.mxu0 %v3152
  %v3543 = vpop.f32.mrf.mxu0
  %v3544 = vadd.f32 %v3488, %v3543
  %3545 = vdwg.mxu0
  %v3546 = vmul.f32 %v3508, 0.0012755102
  %v3547 = vmul.f32 %v3511, 0.0012755102
  %v3548 = vmul.f32 %v3514, 0.0012755102
  %v3549 = vmul.f32 %v3517, 0.0012755102
  %v3550 = vmul.f32 %v3520, 0.0012755102
  %v3551 = vmul.f32 %v3523, 0.0012755102
  %v3552 = vmul.f32 %v3526, 0.0012755102
  %v3553 = vmul.f32 %v3529, 0.0012755102
  %v3554 = vmul.f32 %v3532, 0.0012755102
  %v3555 = vmul.f32 %v3535, 0.0012755102
  %v3556 = vmul.f32 %v3538, 0.0012755102
  %v3557 = vmul.f32 %v3541, 0.0012755102
  %v3558 = vmul.f32 %v3544, 0.0012755102
  %v3559 = vmul.f32 %v2741, %v2741
  %v3560 = vmul.f32 %v2797, %v2797
  %v3561 = vmul.f32 %v2853, %v2853
  %v3562 = vmul.f32 %v2909, %v2909
  %v3563 = vmul.f32 %v2965, %v2965
  %v3564 = vmul.f32 %v3021, %v3021
  %v3565 = vmul.f32 %v3077, %v3077
  %v3566 = vmul.f32 %v2744, %v2744
  %v3567 = vmul.f32 %v2800, %v2800
  %v3568 = vmul.f32 %v2856, %v2856
  %v3569 = vmul.f32 %v2912, %v2912
  %v3570 = vmul.f32 %v2968, %v2968
  %v3571 = vmul.f32 %v3024, %v3024
  %v3572 = vmul.f32 %v3080, %v3080
  %v3573 = vmul.f32 %v2747, %v2747
  %v3574 = vmul.f32 %v2803, %v2803
  %v3575 = vmul.f32 %v2859, %v2859
  %v3576 = vmul.f32 %v2915, %v2915
  %v3577 = vmul.f32 %v2971, %v2971
  %v3578 = vmul.f32 %v3027, %v3027
  %v3579 = vmul.f32 %v3083, %v3083
  %v3580 = vmul.f32 %v2750, %v2750
  %v3581 = vmul.f32 %v2806, %v2806
  %v3582 = vmul.f32 %v2862, %v2862
  %v3583 = vmul.f32 %v2918, %v2918
  %v3584 = vmul.f32 %v2974, %v2974
  %v3585 = vmul.f32 %v3030, %v3030
  %v3586 = vmul.f32 %v3086, %v3086
  %v3587 = vmul.f32 %v2753, %v2753
  %v3588 = vmul.f32 %v2809, %v2809
  %v3589 = vmul.f32 %v2865, %v2865
  %v3590 = vmul.f32 %v2921, %v2921
  %v3591 = vmul.f32 %v2977, %v2977
  %v3592 = vmul.f32 %v3033, %v3033
  %v3593 = vmul.f32 %v3089, %v3089
  %v3594 = vmul.f32 %v2756, %v2756
  %v3595 = vmul.f32 %v2812, %v2812
  %v3596 = vmul.f32 %v2868, %v2868
  %v3597 = vmul.f32 %v2924, %v2924
  %v3598 = vmul.f32 %v2980, %v2980
  %v3599 = vmul.f32 %v3036, %v3036
  %v3600 = vmul.f32 %v3092, %v3092
  %v3601 = vmul.f32 %v2759, %v2759
  %v3602 = vmul.f32 %v2815, %v2815
  %v3603 = vmul.f32 %v2871, %v2871
  %v3604 = vmul.f32 %v2927, %v2927
  %v3605 = vmul.f32 %v2983, %v2983
  %v3606 = vmul.f32 %v3039, %v3039
  %v3607 = vmul.f32 %v3095, %v3095
  %v3608 = vmul.f32 %v2762, %v2762
  %v3609 = vmul.f32 %v2818, %v2818
  %v3610 = vmul.f32 %v2874, %v2874
  %v3611 = vmul.f32 %v2930, %v2930
  %v3612 = vmul.f32 %v2986, %v2986
  %v3613 = vmul.f32 %v3042, %v3042
  %v3614 = vmul.f32 %v3098, %v3098
  %v3615 = vmul.f32 %v2765, %v2765
  %v3616 = vmul.f32 %v2821, %v2821
  %v3617 = vmul.f32 %v2877, %v2877
  %v3618 = vmul.f32 %v2933, %v2933
  %v3619 = vmul.f32 %v2989, %v2989
  %v3620 = vmul.f32 %v3045, %v3045
  %v3621 = vmul.f32 %v3101, %v3101
  %v3622 = vmul.f32 %v2768, %v2768
  %v3623 = vmul.f32 %v2824, %v2824
  %v3624 = vmul.f32 %v2880, %v2880
  %v3625 = vmul.f32 %v2936, %v2936
  %v3626 = vmul.f32 %v2992, %v2992
  %v3627 = vmul.f32 %v3048, %v3048
  %v3628 = vmul.f32 %v3104, %v3104
  %v3629 = vmul.f32 %v2771, %v2771
  %v3630 = vmul.f32 %v2827, %v2827
  %v3631 = vmul.f32 %v2883, %v2883
  %v3632 = vmul.f32 %v2939, %v2939
  %v3633 = vmul.f32 %v2995, %v2995
  %v3634 = vmul.f32 %v3051, %v3051
  %v3635 = vmul.f32 %v3107, %v3107
  %v3636 = vmul.f32 %v2774, %v2774
  %v3637 = vmul.f32 %v2830, %v2830
  %v3638 = vmul.f32 %v2886, %v2886
  %v3639 = vmul.f32 %v2942, %v2942
  %v3640 = vmul.f32 %v2998, %v2998
  %v3641 = vmul.f32 %v3054, %v3054
  %v3642 = vmul.f32 %v3110, %v3110
  %v3643 = vmul.f32 %v2777, %v2777
  %v3644 = vmul.f32 %v2833, %v2833
  %v3645 = vmul.f32 %v2889, %v2889
  %v3646 = vmul.f32 %v2945, %v2945
  %v3647 = vmul.f32 %v3001, %v3001
  %v3648 = vmul.f32 %v3057, %v3057
  %v3649 = vmul.f32 %v3113, %v3113
  %v3651 = vsel %vm826, %v3565, 0
  %v3654 = vsel %vm826, %v3572, 0
  %v3657 = vsel %vm826, %v3579, 0
  %v3660 = vsel %vm826, %v3586, 0
  %v3663 = vsel %vm826, %v3593, 0
  %v3666 = vsel %vm826, %v3600, 0
  %v3669 = vsel %vm826, %v3607, 0
  %v3672 = vsel %vm826, %v3614, 0
  %v3675 = vsel %vm826, %v3621, 0
  %v3678 = vsel %vm826, %v3628, 0
  %v3681 = vsel %vm826, %v3635, 0
  %v3684 = vsel %vm826, %v3642, 0
  %v3687 = vsel %vm826, %v3649, 0
  %3689 = vmatpush.msra.mxu0 1.0
  %3690 = vmatpush.msra.mxu0 1.0
  %3691 = vmatpush.msra.mxu0 1.0
  %3692 = vmatpush.msra.mxu0 1.0
  %3693 = vmatpush.msra.mxu0 1.0
  %3694 = vmatpush.msra.mxu0 1.0
  %3695 = vmatpush.msra.mxu0 1.0
  %3696 = vmatpush.msra.mxu0 1.0
  %3697 = vmatpush.msra.mxu0 1.0
  %3698 = vmatpush.msra.mxu0 1.0
  %3699 = vmatpush.msra.mxu0 1.0
  %3700 = vmatpush.msra.mxu0 1.0
  %3701 = vmatpush.msra.mxu0 1.0
  %3702 = vmatpush.msra.mxu0 1.0
  %3703 = vmatpush.msra.mxu0 1.0
  %3704 = vmatpush.msra.mxu0 1.0
  %3705 = vmatmul.f32.gmra.mxu0 %v3559
  %v3706 = vpop.f32.mrf.mxu0
  %v3707 = vadd.f32 0.0, %v3706
  %3708 = vmatmul.f32.gmra.mxu0 %v3566
  %v3709 = vpop.f32.mrf.mxu0
  %v3710 = vadd.f32 0.0, %v3709
  %3711 = vmatmul.f32.gmra.mxu0 %v3573
  %v3712 = vpop.f32.mrf.mxu0
  %v3713 = vadd.f32 0.0, %v3712
  %3714 = vmatmul.f32.gmra.mxu0 %v3580
  %v3715 = vpop.f32.mrf.mxu0
  %v3716 = vadd.f32 0.0, %v3715
  %3717 = vmatmul.f32.gmra.mxu0 %v3587
  %v3718 = vpop.f32.mrf.mxu0
  %v3719 = vadd.f32 0.0, %v3718
  %3720 = vmatmul.f32.gmra.mxu0 %v3594
  %v3721 = vpop.f32.mrf.mxu0
  %v3722 = vadd.f32 0.0, %v3721
  %3723 = vmatmul.f32.gmra.mxu0 %v3601
  %v3724 = vpop.f32.mrf.mxu0
  %v3725 = vadd.f32 0.0, %v3724
  %3726 = vmatmul.f32.gmra.mxu0 %v3608
  %v3727 = vpop.f32.mrf.mxu0
  %v3728 = vadd.f32 0.0, %v3727
  %3729 = vmatmul.f32.gmra.mxu0 %v3615
  %v3730 = vpop.f32.mrf.mxu0
  %v3731 = vadd.f32 0.0, %v3730
  %3732 = vmatmul.f32.gmra.mxu0 %v3622
  %v3733 = vpop.f32.mrf.mxu0
  %v3734 = vadd.f32 0.0, %v3733
  %3735 = vmatmul.f32.gmra.mxu0 %v3629
  %v3736 = vpop.f32.mrf.mxu0
  %v3737 = vadd.f32 0.0, %v3736
  %3738 = vmatmul.f32.gmra.mxu0 %v3636
  %v3739 = vpop.f32.mrf.mxu0
  %v3740 = vadd.f32 0.0, %v3739
  %3741 = vmatmul.f32.gmra.mxu0 %v3643
  %v3742 = vpop.f32.mrf.mxu0
  %v3743 = vadd.f32 0.0, %v3742
  %3744 = vdwg.mxu0
  %3745 = vmatpush.msra.mxu0 1.0
  %3746 = vmatpush.msra.mxu0 1.0
  %3747 = vmatpush.msra.mxu0 1.0
  %3748 = vmatpush.msra.mxu0 1.0
  %3749 = vmatpush.msra.mxu0 1.0
  %3750 = vmatpush.msra.mxu0 1.0
  %3751 = vmatpush.msra.mxu0 1.0
  %3752 = vmatpush.msra.mxu0 1.0
  %3753 = vmatpush.msra.mxu0 1.0
  %3754 = vmatpush.msra.mxu0 1.0
  %3755 = vmatpush.msra.mxu0 1.0
  %3756 = vmatpush.msra.mxu0 1.0
  %3757 = vmatpush.msra.mxu0 1.0
  %3758 = vmatpush.msra.mxu0 1.0
  %3759 = vmatpush.msra.mxu0 1.0
  %3760 = vmatpush.msra.mxu0 1.0
  %3761 = vmatmul.f32.gmra.mxu0 %v3560
  %v3762 = vpop.f32.mrf.mxu0
  %v3763 = vadd.f32 %v3707, %v3762
  %3764 = vmatmul.f32.gmra.mxu0 %v3567
  %v3765 = vpop.f32.mrf.mxu0
  %v3766 = vadd.f32 %v3710, %v3765
  %3767 = vmatmul.f32.gmra.mxu0 %v3574
  %v3768 = vpop.f32.mrf.mxu0
  %v3769 = vadd.f32 %v3713, %v3768
  %3770 = vmatmul.f32.gmra.mxu0 %v3581
  %v3771 = vpop.f32.mrf.mxu0
  %v3772 = vadd.f32 %v3716, %v3771
  %3773 = vmatmul.f32.gmra.mxu0 %v3588
  %v3774 = vpop.f32.mrf.mxu0
  %v3775 = vadd.f32 %v3719, %v3774
  %3776 = vmatmul.f32.gmra.mxu0 %v3595
  %v3777 = vpop.f32.mrf.mxu0
  %v3778 = vadd.f32 %v3722, %v3777
  %3779 = vmatmul.f32.gmra.mxu0 %v3602
  %v3780 = vpop.f32.mrf.mxu0
  %v3781 = vadd.f32 %v3725, %v3780
  %3782 = vmatmul.f32.gmra.mxu0 %v3609
  %v3783 = vpop.f32.mrf.mxu0
  %v3784 = vadd.f32 %v3728, %v3783
  %3785 = vmatmul.f32.gmra.mxu0 %v3616
  %v3786 = vpop.f32.mrf.mxu0
  %v3787 = vadd.f32 %v3731, %v3786
  %3788 = vmatmul.f32.gmra.mxu0 %v3623
  %v3789 = vpop.f32.mrf.mxu0
  %v3790 = vadd.f32 %v3734, %v3789
  %3791 = vmatmul.f32.gmra.mxu0 %v3630
  %v3792 = vpop.f32.mrf.mxu0
  %v3793 = vadd.f32 %v3737, %v3792
  %3794 = vmatmul.f32.gmra.mxu0 %v3637
  %v3795 = vpop.f32.mrf.mxu0
  %v3796 = vadd.f32 %v3740, %v3795
  %3797 = vmatmul.f32.gmra.mxu0 %v3644
  %v3798 = vpop.f32.mrf.mxu0
  %v3799 = vadd.f32 %v3743, %v3798
  %3800 = vdwg.mxu0
  %3801 = vmatpush.msra.mxu0 1.0
  %3802 = vmatpush.msra.mxu0 1.0
  %3803 = vmatpush.msra.mxu0 1.0
  %3804 = vmatpush.msra.mxu0 1.0
  %3805 = vmatpush.msra.mxu0 1.0
  %3806 = vmatpush.msra.mxu0 1.0
  %3807 = vmatpush.msra.mxu0 1.0
  %3808 = vmatpush.msra.mxu0 1.0
  %3809 = vmatpush.msra.mxu0 1.0
  %3810 = vmatpush.msra.mxu0 1.0
  %3811 = vmatpush.msra.mxu0 1.0
  %3812 = vmatpush.msra.mxu0 1.0
  %3813 = vmatpush.msra.mxu0 1.0
  %3814 = vmatpush.msra.mxu0 1.0
  %3815 = vmatpush.msra.mxu0 1.0
  %3816 = vmatpush.msra.mxu0 1.0
  %3817 = vmatmul.f32.gmra.mxu0 %v3561
  %v3818 = vpop.f32.mrf.mxu0
  %v3819 = vadd.f32 %v3763, %v3818
  %3820 = vmatmul.f32.gmra.mxu0 %v3568
  %v3821 = vpop.f32.mrf.mxu0
  %v3822 = vadd.f32 %v3766, %v3821
  %3823 = vmatmul.f32.gmra.mxu0 %v3575
  %v3824 = vpop.f32.mrf.mxu0
  %v3825 = vadd.f32 %v3769, %v3824
  %3826 = vmatmul.f32.gmra.mxu0 %v3582
  %v3827 = vpop.f32.mrf.mxu0
  %v3828 = vadd.f32 %v3772, %v3827
  %3829 = vmatmul.f32.gmra.mxu0 %v3589
  %v3830 = vpop.f32.mrf.mxu0
  %v3831 = vadd.f32 %v3775, %v3830
  %3832 = vmatmul.f32.gmra.mxu0 %v3596
  %v3833 = vpop.f32.mrf.mxu0
  %v3834 = vadd.f32 %v3778, %v3833
  %3835 = vmatmul.f32.gmra.mxu0 %v3603
  %v3836 = vpop.f32.mrf.mxu0
  %v3837 = vadd.f32 %v3781, %v3836
  %3838 = vmatmul.f32.gmra.mxu0 %v3610
  %v3839 = vpop.f32.mrf.mxu0
  %v3840 = vadd.f32 %v3784, %v3839
  %3841 = vmatmul.f32.gmra.mxu0 %v3617
  %v3842 = vpop.f32.mrf.mxu0
  %v3843 = vadd.f32 %v3787, %v3842
  %3844 = vmatmul.f32.gmra.mxu0 %v3624
  %v3845 = vpop.f32.mrf.mxu0
  %v3846 = vadd.f32 %v3790, %v3845
  %3847 = vmatmul.f32.gmra.mxu0 %v3631
  %v3848 = vpop.f32.mrf.mxu0
  %v3849 = vadd.f32 %v3793, %v3848
  %3850 = vmatmul.f32.gmra.mxu0 %v3638
  %v3851 = vpop.f32.mrf.mxu0
  %v3852 = vadd.f32 %v3796, %v3851
  %3853 = vmatmul.f32.gmra.mxu0 %v3645
  %v3854 = vpop.f32.mrf.mxu0
  %v3855 = vadd.f32 %v3799, %v3854
  %3856 = vdwg.mxu0
  %3857 = vmatpush.msra.mxu0 1.0
  %3858 = vmatpush.msra.mxu0 1.0
  %3859 = vmatpush.msra.mxu0 1.0
  %3860 = vmatpush.msra.mxu0 1.0
  %3861 = vmatpush.msra.mxu0 1.0
  %3862 = vmatpush.msra.mxu0 1.0
  %3863 = vmatpush.msra.mxu0 1.0
  %3864 = vmatpush.msra.mxu0 1.0
  %3865 = vmatpush.msra.mxu0 1.0
  %3866 = vmatpush.msra.mxu0 1.0
  %3867 = vmatpush.msra.mxu0 1.0
  %3868 = vmatpush.msra.mxu0 1.0
  %3869 = vmatpush.msra.mxu0 1.0
  %3870 = vmatpush.msra.mxu0 1.0
  %3871 = vmatpush.msra.mxu0 1.0
  %3872 = vmatpush.msra.mxu0 1.0
  %3873 = vmatmul.f32.gmra.mxu0 %v3562
  %v3874 = vpop.f32.mrf.mxu0
  %v3875 = vadd.f32 %v3819, %v3874
  %3876 = vmatmul.f32.gmra.mxu0 %v3569
  %v3877 = vpop.f32.mrf.mxu0
  %v3878 = vadd.f32 %v3822, %v3877
  %3879 = vmatmul.f32.gmra.mxu0 %v3576
  %v3880 = vpop.f32.mrf.mxu0
  %v3881 = vadd.f32 %v3825, %v3880
  %3882 = vmatmul.f32.gmra.mxu0 %v3583
  %v3883 = vpop.f32.mrf.mxu0
  %v3884 = vadd.f32 %v3828, %v3883
  %3885 = vmatmul.f32.gmra.mxu0 %v3590
  %v3886 = vpop.f32.mrf.mxu0
  %v3887 = vadd.f32 %v3831, %v3886
  %3888 = vmatmul.f32.gmra.mxu0 %v3597
  %v3889 = vpop.f32.mrf.mxu0
  %v3890 = vadd.f32 %v3834, %v3889
  %3891 = vmatmul.f32.gmra.mxu0 %v3604
  %v3892 = vpop.f32.mrf.mxu0
  %v3893 = vadd.f32 %v3837, %v3892
  %3894 = vmatmul.f32.gmra.mxu0 %v3611
  %v3895 = vpop.f32.mrf.mxu0
  %v3896 = vadd.f32 %v3840, %v3895
  %3897 = vmatmul.f32.gmra.mxu0 %v3618
  %v3898 = vpop.f32.mrf.mxu0
  %v3899 = vadd.f32 %v3843, %v3898
  %3900 = vmatmul.f32.gmra.mxu0 %v3625
  %v3901 = vpop.f32.mrf.mxu0
  %v3902 = vadd.f32 %v3846, %v3901
  %3903 = vmatmul.f32.gmra.mxu0 %v3632
  %v3904 = vpop.f32.mrf.mxu0
  %v3905 = vadd.f32 %v3849, %v3904
  %3906 = vmatmul.f32.gmra.mxu0 %v3639
  %v3907 = vpop.f32.mrf.mxu0
  %v3908 = vadd.f32 %v3852, %v3907
  %3909 = vmatmul.f32.gmra.mxu0 %v3646
  %v3910 = vpop.f32.mrf.mxu0
  %v3911 = vadd.f32 %v3855, %v3910
  %3912 = vdwg.mxu0
  %3913 = vmatpush.msra.mxu0 1.0
  %3914 = vmatpush.msra.mxu0 1.0
  %3915 = vmatpush.msra.mxu0 1.0
  %3916 = vmatpush.msra.mxu0 1.0
  %3917 = vmatpush.msra.mxu0 1.0
  %3918 = vmatpush.msra.mxu0 1.0
  %3919 = vmatpush.msra.mxu0 1.0
  %3920 = vmatpush.msra.mxu0 1.0
  %3921 = vmatpush.msra.mxu0 1.0
  %3922 = vmatpush.msra.mxu0 1.0
  %3923 = vmatpush.msra.mxu0 1.0
  %3924 = vmatpush.msra.mxu0 1.0
  %3925 = vmatpush.msra.mxu0 1.0
  %3926 = vmatpush.msra.mxu0 1.0
  %3927 = vmatpush.msra.mxu0 1.0
  %3928 = vmatpush.msra.mxu0 1.0
  %3929 = vmatmul.f32.gmra.mxu0 %v3563
  %v3930 = vpop.f32.mrf.mxu0
  %v3931 = vadd.f32 %v3875, %v3930
  %3932 = vmatmul.f32.gmra.mxu0 %v3570
  %v3933 = vpop.f32.mrf.mxu0
  %v3934 = vadd.f32 %v3878, %v3933
  %3935 = vmatmul.f32.gmra.mxu0 %v3577
  %v3936 = vpop.f32.mrf.mxu0
  %v3937 = vadd.f32 %v3881, %v3936
  %3938 = vmatmul.f32.gmra.mxu0 %v3584
  %v3939 = vpop.f32.mrf.mxu0
  %v3940 = vadd.f32 %v3884, %v3939
  %3941 = vmatmul.f32.gmra.mxu0 %v3591
  %v3942 = vpop.f32.mrf.mxu0
  %v3943 = vadd.f32 %v3887, %v3942
  %3944 = vmatmul.f32.gmra.mxu0 %v3598
  %v3945 = vpop.f32.mrf.mxu0
  %v3946 = vadd.f32 %v3890, %v3945
  %3947 = vmatmul.f32.gmra.mxu0 %v3605
  %v3948 = vpop.f32.mrf.mxu0
  %v3949 = vadd.f32 %v3893, %v3948
  %3950 = vmatmul.f32.gmra.mxu0 %v3612
  %v3951 = vpop.f32.mrf.mxu0
  %v3952 = vadd.f32 %v3896, %v3951
  %3953 = vmatmul.f32.gmra.mxu0 %v3619
  %v3954 = vpop.f32.mrf.mxu0
  %v3955 = vadd.f32 %v3899, %v3954
  %3956 = vmatmul.f32.gmra.mxu0 %v3626
  %v3957 = vpop.f32.mrf.mxu0
  %v3958 = vadd.f32 %v3902, %v3957
  %3959 = vmatmul.f32.gmra.mxu0 %v3633
  %v3960 = vpop.f32.mrf.mxu0
  %v3961 = vadd.f32 %v3905, %v3960
  %3962 = vmatmul.f32.gmra.mxu0 %v3640
  %v3963 = vpop.f32.mrf.mxu0
  %v3964 = vadd.f32 %v3908, %v3963
  %3965 = vmatmul.f32.gmra.mxu0 %v3647
  %v3966 = vpop.f32.mrf.mxu0
  %v3967 = vadd.f32 %v3911, %v3966
  %3968 = vdwg.mxu0
  %3969 = vmatpush.msra.mxu0 1.0
  %3970 = vmatpush.msra.mxu0 1.0
  %3971 = vmatpush.msra.mxu0 1.0
  %3972 = vmatpush.msra.mxu0 1.0
  %3973 = vmatpush.msra.mxu0 1.0
  %3974 = vmatpush.msra.mxu0 1.0
  %3975 = vmatpush.msra.mxu0 1.0
  %3976 = vmatpush.msra.mxu0 1.0
  %3977 = vmatpush.msra.mxu0 1.0
  %3978 = vmatpush.msra.mxu0 1.0
  %3979 = vmatpush.msra.mxu0 1.0
  %3980 = vmatpush.msra.mxu0 1.0
  %3981 = vmatpush.msra.mxu0 1.0
  %3982 = vmatpush.msra.mxu0 1.0
  %3983 = vmatpush.msra.mxu0 1.0
  %3984 = vmatpush.msra.mxu0 1.0
  %3985 = vmatmul.f32.gmra.mxu0 %v3564
  %v3986 = vpop.f32.mrf.mxu0
  %v3987 = vadd.f32 %v3931, %v3986
  %3988 = vmatmul.f32.gmra.mxu0 %v3571
  %v3989 = vpop.f32.mrf.mxu0
  %v3990 = vadd.f32 %v3934, %v3989
  %3991 = vmatmul.f32.gmra.mxu0 %v3578
  %v3992 = vpop.f32.mrf.mxu0
  %v3993 = vadd.f32 %v3937, %v3992
  %3994 = vmatmul.f32.gmra.mxu0 %v3585
  %v3995 = vpop.f32.mrf.mxu0
  %v3996 = vadd.f32 %v3940, %v3995
  %3997 = vmatmul.f32.gmra.mxu0 %v3592
  %v3998 = vpop.f32.mrf.mxu0
  %v3999 = vadd.f32 %v3943, %v3998
  %4000 = vmatmul.f32.gmra.mxu0 %v3599
  %v4001 = vpop.f32.mrf.mxu0
  %v4002 = vadd.f32 %v3946, %v4001
  %4003 = vmatmul.f32.gmra.mxu0 %v3606
  %v4004 = vpop.f32.mrf.mxu0
  %v4005 = vadd.f32 %v3949, %v4004
  %4006 = vmatmul.f32.gmra.mxu0 %v3613
  %v4007 = vpop.f32.mrf.mxu0
  %v4008 = vadd.f32 %v3952, %v4007
  %4009 = vmatmul.f32.gmra.mxu0 %v3620
  %v4010 = vpop.f32.mrf.mxu0
  %v4011 = vadd.f32 %v3955, %v4010
  %4012 = vmatmul.f32.gmra.mxu0 %v3627
  %v4013 = vpop.f32.mrf.mxu0
  %v4014 = vadd.f32 %v3958, %v4013
  %4015 = vmatmul.f32.gmra.mxu0 %v3634
  %v4016 = vpop.f32.mrf.mxu0
  %v4017 = vadd.f32 %v3961, %v4016
  %4018 = vmatmul.f32.gmra.mxu0 %v3641
  %v4019 = vpop.f32.mrf.mxu0
  %v4020 = vadd.f32 %v3964, %v4019
  %4021 = vmatmul.f32.gmra.mxu0 %v3648
  %v4022 = vpop.f32.mrf.mxu0
  %v4023 = vadd.f32 %v3967, %v4022
  %4024 = vdwg.mxu0
  %4025 = vmatpush.msra.mxu0 0.0
  %4026 = vmatpush.msra.mxu0 0.0
  %4027 = vmatpush.msra.mxu0 0.0
  %4028 = vmatpush.msra.mxu0 0.0
  %4029 = vmatpush.msra.mxu0 0.0
  %4030 = vmatpush.msra.mxu0 0.0
  %4031 = vmatpush.msra.mxu0 0.0
  %4032 = vmatpush.msra.mxu0 0.0
  %4033 = vmatpush.msra.mxu0 0.0
  %4034 = vmatpush.msra.mxu0 0.0
  %4035 = vmatpush.msra.mxu0 0.0
  %4036 = vmatpush.msra.mxu0 0.0
  %4037 = vmatpush.msra.mxu0 0.0
  %4038 = vmatpush.msra.mxu0 0.0
  %4039 = vmatpush.msra.mxu0 1.0
  %4040 = vmatpush.msra.mxu0 1.0
  %4041 = vmatmul.f32.gmra.mxu0 %v3651
  %v4042 = vpop.f32.mrf.mxu0
  %v4043 = vadd.f32 %v3987, %v4042
  %4044 = vmatmul.f32.gmra.mxu0 %v3654
  %v4045 = vpop.f32.mrf.mxu0
  %v4046 = vadd.f32 %v3990, %v4045
  %4047 = vmatmul.f32.gmra.mxu0 %v3657
  %v4048 = vpop.f32.mrf.mxu0
  %v4049 = vadd.f32 %v3993, %v4048
  %4050 = vmatmul.f32.gmra.mxu0 %v3660
  %v4051 = vpop.f32.mrf.mxu0
  %v4052 = vadd.f32 %v3996, %v4051
  %4053 = vmatmul.f32.gmra.mxu0 %v3663
  %v4054 = vpop.f32.mrf.mxu0
  %v4055 = vadd.f32 %v3999, %v4054
  %4056 = vmatmul.f32.gmra.mxu0 %v3666
  %v4057 = vpop.f32.mrf.mxu0
  %v4058 = vadd.f32 %v4002, %v4057
  %4059 = vmatmul.f32.gmra.mxu0 %v3669
  %v4060 = vpop.f32.mrf.mxu0
  %v4061 = vadd.f32 %v4005, %v4060
  %4062 = vmatmul.f32.gmra.mxu0 %v3672
  %v4063 = vpop.f32.mrf.mxu0
  %v4064 = vadd.f32 %v4008, %v4063
  %4065 = vmatmul.f32.gmra.mxu0 %v3675
  %v4066 = vpop.f32.mrf.mxu0
  %v4067 = vadd.f32 %v4011, %v4066
  %4068 = vmatmul.f32.gmra.mxu0 %v3678
  %v4069 = vpop.f32.mrf.mxu0
  %v4070 = vadd.f32 %v4014, %v4069
  %4071 = vmatmul.f32.gmra.mxu0 %v3681
  %v4072 = vpop.f32.mrf.mxu0
  %v4073 = vadd.f32 %v4017, %v4072
  %4074 = vmatmul.f32.gmra.mxu0 %v3684
  %v4075 = vpop.f32.mrf.mxu0
  %v4076 = vadd.f32 %v4020, %v4075
  %4077 = vmatmul.f32.gmra.mxu0 %v3687
  %v4078 = vpop.f32.mrf.mxu0
  %v4079 = vadd.f32 %v4023, %v4078
  %4080 = vdwg.mxu0
  %v4081 = vmul.f32 %v4043, 0.0012755102
  %v4082 = vmul.f32 %v4046, 0.0012755102
  %v4083 = vmul.f32 %v4049, 0.0012755102
  %v4084 = vmul.f32 %v4052, 0.0012755102
  %v4085 = vmul.f32 %v4055, 0.0012755102
  %v4086 = vmul.f32 %v4058, 0.0012755102
  %v4087 = vmul.f32 %v4061, 0.0012755102
  %v4088 = vmul.f32 %v4064, 0.0012755102
  %v4089 = vmul.f32 %v4067, 0.0012755102
  %v4090 = vmul.f32 %v4070, 0.0012755102
  %v4091 = vmul.f32 %v4073, 0.0012755102
  %v4092 = vmul.f32 %v4076, 0.0012755102
  %v4093 = vmul.f32 %v4079, 0.0012755102
  %v4094 = vmul.f32 %v3546, %v3546
  %v4095 = vmul.f32 %v3547, %v3547
  %v4096 = vmul.f32 %v3548, %v3548
  %v4097 = vmul.f32 %v3549, %v3549
  %v4098 = vmul.f32 %v3550, %v3550
  %v4099 = vmul.f32 %v3551, %v3551
  %v4100 = vmul.f32 %v3552, %v3552
  %v4101 = vmul.f32 %v3553, %v3553
  %v4102 = vmul.f32 %v3554, %v3554
  %v4103 = vmul.f32 %v3555, %v3555
  %v4104 = vmul.f32 %v3556, %v3556
  %v4105 = vmul.f32 %v3557, %v3557
  %v4106 = vmul.f32 %v3558, %v3558
  %v4107 = vsub.f32 %v4081, %v4094
  %v4108 = vsub.f32 %v4082, %v4095
  %v4109 = vsub.f32 %v4083, %v4096
  %v4110 = vsub.f32 %v4084, %v4097
  %v4111 = vsub.f32 %v4085, %v4098
  %v4112 = vsub.f32 %v4086, %v4099
  %v4113 = vsub.f32 %v4087, %v4100
  %v4114 = vsub.f32 %v4088, %v4101
  %v4115 = vsub.f32 %v4089, %v4102
  %v4116 = vsub.f32 %v4090, %v4103
  %v4117 = vsub.f32 %v4091, %v4104
  %v4118 = vsub.f32 %v4092, %v4105
  %v4119 = vsub.f32 %v4093, %v4106
  %v4120 = vmax.f32 %v4107, 0.0
  %v4121 = vmax.f32 %v4108, 0.0
  %v4122 = vmax.f32 %v4109, 0.0
  %v4123 = vmax.f32 %v4110, 0.0
  %v4124 = vmax.f32 %v4111, 0.0
  %v4125 = vmax.f32 %v4112, 0.0
  %v4126 = vmax.f32 %v4113, 0.0
  %v4127 = vmax.f32 %v4114, 0.0
  %v4128 = vmax.f32 %v4115, 0.0
  %v4129 = vmax.f32 %v4116, 0.0
  %v4130 = vmax.f32 %v4117, 0.0
  %v4131 = vmax.f32 %v4118, 0.0
  %v4132 = vmax.f32 %v4119, 0.0
  %v4133 = vadd.f32 %v4120, 1e-05
  %v4134 = vadd.f32 %v4121, 1e-05
  %v4135 = vadd.f32 %v4122, 1e-05
  %v4136 = vadd.f32 %v4123, 1e-05
  %v4137 = vadd.f32 %v4124, 1e-05
  %v4138 = vadd.f32 %v4125, 1e-05
  %v4139 = vadd.f32 %v4126, 1e-05
  %v4140 = vadd.f32 %v4127, 1e-05
  %v4141 = vadd.f32 %v4128, 1e-05
  %v4142 = vadd.f32 %v4129, 1e-05
  %v4143 = vadd.f32 %v4130, 1e-05
  %v4144 = vadd.f32 %v4131, 1e-05
  %v4145 = vadd.f32 %v4132, 1e-05
  %v4146 = vrsqrt.pop %v4133
  %v4147 = vmul.f32 %v4146, %v4133
  %v4148 = vmul.f32 %v4147, %v4146
  %v4149 = vmul.f32 0.5, %v4148
  %v4150 = vsub.f32 1.5, %v4149
  %v4151 = vmul.f32 %v4146, %v4150
  %vm4152 = vweird.f32 %v4133
  %vm4153 = vweird.f32 %v4146
  %vm4154 = vmor %vm4152, %vm4153
  %v4155 = vsel %vm4154, %v4146, %v4151
  %v4156 = vrsqrt.pop %v4134
  %v4157 = vmul.f32 %v4156, %v4134
  %v4158 = vmul.f32 %v4157, %v4156
  %v4159 = vmul.f32 0.5, %v4158
  %v4160 = vsub.f32 1.5, %v4159
  %v4161 = vmul.f32 %v4156, %v4160
  %vm4162 = vweird.f32 %v4134
  %vm4163 = vweird.f32 %v4156
  %vm4164 = vmor %vm4162, %vm4163
  %v4165 = vsel %vm4164, %v4156, %v4161
  %v4166 = vrsqrt.pop %v4135
  %v4167 = vmul.f32 %v4166, %v4135
  %v4168 = vmul.f32 %v4167, %v4166
  %v4169 = vmul.f32 0.5, %v4168
  %v4170 = vsub.f32 1.5, %v4169
  %v4171 = vmul.f32 %v4166, %v4170
  %vm4172 = vweird.f32 %v4135
  %vm4173 = vweird.f32 %v4166
  %vm4174 = vmor %vm4172, %vm4173
  %v4175 = vsel %vm4174, %v4166, %v4171
  %v4176 = vrsqrt.pop %v4136
  %v4177 = vmul.f32 %v4176, %v4136
  %v4178 = vmul.f32 %v4177, %v4176
  %v4179 = vmul.f32 0.5, %v4178
  %v4180 = vsub.f32 1.5, %v4179
  %v4181 = vmul.f32 %v4176, %v4180
  %vm4182 = vweird.f32 %v4136
  %vm4183 = vweird.f32 %v4176
  %vm4184 = vmor %vm4182, %vm4183
  %v4185 = vsel %vm4184, %v4176, %v4181
  %v4186 = vrsqrt.pop %v4137
  %v4187 = vmul.f32 %v4186, %v4137
  %v4188 = vmul.f32 %v4187, %v4186
  %v4189 = vmul.f32 0.5, %v4188
  %v4190 = vsub.f32 1.5, %v4189
  %v4191 = vmul.f32 %v4186, %v4190
  %vm4192 = vweird.f32 %v4137
  %vm4193 = vweird.f32 %v4186
  %vm4194 = vmor %vm4192, %vm4193
  %v4195 = vsel %vm4194, %v4186, %v4191
  %v4196 = vrsqrt.pop %v4138
  %v4197 = vmul.f32 %v4196, %v4138
  %v4198 = vmul.f32 %v4197, %v4196
  %v4199 = vmul.f32 0.5, %v4198
  %v4200 = vsub.f32 1.5, %v4199
  %v4201 = vmul.f32 %v4196, %v4200
  %vm4202 = vweird.f32 %v4138
  %vm4203 = vweird.f32 %v4196
  %vm4204 = vmor %vm4202, %vm4203
  %v4205 = vsel %vm4204, %v4196, %v4201
  %v4206 = vrsqrt.pop %v4139
  %v4207 = vmul.f32 %v4206, %v4139
  %v4208 = vmul.f32 %v4207, %v4206
  %v4209 = vmul.f32 0.5, %v4208
  %v4210 = vsub.f32 1.5, %v4209
  %v4211 = vmul.f32 %v4206, %v4210
  %vm4212 = vweird.f32 %v4139
  %vm4213 = vweird.f32 %v4206
  %vm4214 = vmor %vm4212, %vm4213
  %v4215 = vsel %vm4214, %v4206, %v4211
  %v4216 = vrsqrt.pop %v4140
  %v4217 = vmul.f32 %v4216, %v4140
  %v4218 = vmul.f32 %v4217, %v4216
  %v4219 = vmul.f32 0.5, %v4218
  %v4220 = vsub.f32 1.5, %v4219
  %v4221 = vmul.f32 %v4216, %v4220
  %vm4222 = vweird.f32 %v4140
  %vm4223 = vweird.f32 %v4216
  %vm4224 = vmor %vm4222, %vm4223
  %v4225 = vsel %vm4224, %v4216, %v4221
  %v4226 = vrsqrt.pop %v4141
  %v4227 = vmul.f32 %v4226, %v4141
  %v4228 = vmul.f32 %v4227, %v4226
  %v4229 = vmul.f32 0.5, %v4228
  %v4230 = vsub.f32 1.5, %v4229
  %v4231 = vmul.f32 %v4226, %v4230
  %vm4232 = vweird.f32 %v4141
  %vm4233 = vweird.f32 %v4226
  %vm4234 = vmor %vm4232, %vm4233
  %v4235 = vsel %vm4234, %v4226, %v4231
  %v4236 = vrsqrt.pop %v4142
  %v4237 = vmul.f32 %v4236, %v4142
  %v4238 = vmul.f32 %v4237, %v4236
  %v4239 = vmul.f32 0.5, %v4238
  %v4240 = vsub.f32 1.5, %v4239
  %v4241 = vmul.f32 %v4236, %v4240
  %vm4242 = vweird.f32 %v4142
  %vm4243 = vweird.f32 %v4236
  %vm4244 = vmor %vm4242, %vm4243
  %v4245 = vsel %vm4244, %v4236, %v4241
  %v4246 = vrsqrt.pop %v4143
  %v4247 = vmul.f32 %v4246, %v4143
  %v4248 = vmul.f32 %v4247, %v4246
  %v4249 = vmul.f32 0.5, %v4248
  %v4250 = vsub.f32 1.5, %v4249
  %v4251 = vmul.f32 %v4246, %v4250
  %vm4252 = vweird.f32 %v4143
  %vm4253 = vweird.f32 %v4246
  %vm4254 = vmor %vm4252, %vm4253
  %v4255 = vsel %vm4254, %v4246, %v4251
  %v4256 = vrsqrt.pop %v4144
  %v4257 = vmul.f32 %v4256, %v4144
  %v4258 = vmul.f32 %v4257, %v4256
  %v4259 = vmul.f32 0.5, %v4258
  %v4260 = vsub.f32 1.5, %v4259
  %v4261 = vmul.f32 %v4256, %v4260
  %vm4262 = vweird.f32 %v4144
  %vm4263 = vweird.f32 %v4256
  %vm4264 = vmor %vm4262, %vm4263
  %v4265 = vsel %vm4264, %v4256, %v4261
  %v4266 = vrsqrt.pop %v4145
  %v4267 = vmul.f32 %v4266, %v4145
  %v4268 = vmul.f32 %v4267, %v4266
  %v4269 = vmul.f32 0.5, %v4268
  %v4270 = vsub.f32 1.5, %v4269
  %v4271 = vmul.f32 %v4266, %v4270
  %vm4272 = vweird.f32 %v4145
  %vm4273 = vweird.f32 %v4266
  %vm4274 = vmor %vm4272, %vm4273
  %v4275 = vsel %vm4274, %v4266, %v4271
  %4289 = vrot.lane.b32.xlu0 %v4155, 2
  %v4290 = vpop.permute.xlu0 %4289
  %4291 = vrot.lane.b32.xlu0 %v4165, 2
  %v4292 = vpop.permute.xlu0 %4291
  %4293 = vrot.lane.b32.xlu0 %v4175, 2
  %v4294 = vpop.permute.xlu0 %4293
  %4295 = vrot.lane.b32.xlu0 %v4185, 2
  %v4296 = vpop.permute.xlu0 %4295
  %4297 = vrot.lane.b32.xlu0 %v4195, 2
  %v4298 = vpop.permute.xlu0 %4297
  %4299 = vrot.lane.b32.xlu0 %v4205, 2
  %v4300 = vpop.permute.xlu0 %4299
  %4301 = vrot.lane.b32.xlu0 %v4215, 2
  %v4302 = vpop.permute.xlu0 %4301
  %4303 = vrot.lane.b32.xlu0 %v4225, 2
  %v4304 = vpop.permute.xlu0 %4303
  %4305 = vrot.lane.b32.xlu0 %v4235, 2
  %v4306 = vpop.permute.xlu0 %4305
  %4307 = vrot.lane.b32.xlu0 %v4245, 2
  %v4308 = vpop.permute.xlu0 %4307
  %4309 = vrot.lane.b32.xlu0 %v4255, 2
  %v4310 = vpop.permute.xlu0 %4309
  %4311 = vrot.lane.b32.xlu0 %v4265, 2
  %v4312 = vpop.permute.xlu0 %4311
  %4313 = vrot.lane.b32.xlu0 %v4275, 2
  %v4314 = vpop.permute.xlu0 %4313
  %v4328 = vmul.f32 %v351, %v4290
  %v4329 = vmul.f32 %v352, %v4292
  %v4330 = vmul.f32 %v353, %v4294
  %v4331 = vmul.f32 %v354, %v4296
  %v4332 = vmul.f32 %v355, %v4298
  %v4333 = vmul.f32 %v356, %v4300
  %v4334 = vmul.f32 %v357, %v4302
  %v4335 = vmul.f32 %v358, %v4304
  %v4336 = vmul.f32 %v359, %v4306
  %v4337 = vmul.f32 %v360, %v4308
  %v4338 = vmul.f32 %v361, %v4310
  %v4339 = vmul.f32 %v362, %v4312
  %v4340 = vmul.f32 %v363, %v4314
  %4354 = vrot.lane.b32.xlu0 %v4328, 126
  %v4355 = vpop.permute.xlu0 %4354
  %4356 = vrot.lane.b32.xlu0 %v4329, 126
  %v4357 = vpop.permute.xlu0 %4356
  %4358 = vrot.lane.b32.xlu0 %v4330, 126
  %v4359 = vpop.permute.xlu0 %4358
  %4360 = vrot.lane.b32.xlu0 %v4331, 126
  %v4361 = vpop.permute.xlu0 %4360
  %4362 = vrot.lane.b32.xlu0 %v4332, 126
  %v4363 = vpop.permute.xlu0 %4362
  %4364 = vrot.lane.b32.xlu0 %v4333, 126
  %v4365 = vpop.permute.xlu0 %4364
  %4366 = vrot.lane.b32.xlu0 %v4334, 126
  %v4367 = vpop.permute.xlu0 %4366
  %4368 = vrot.lane.b32.xlu0 %v4335, 126
  %v4369 = vpop.permute.xlu0 %4368
  %4370 = vrot.lane.b32.xlu0 %v4336, 126
  %v4371 = vpop.permute.xlu0 %4370
  %4372 = vrot.lane.b32.xlu0 %v4337, 126
  %v4373 = vpop.permute.xlu0 %4372
  %4374 = vrot.lane.b32.xlu0 %v4338, 126
  %v4375 = vpop.permute.xlu0 %4374
  %4376 = vrot.lane.b32.xlu0 %v4339, 126
  %v4377 = vpop.permute.xlu0 %4376
  %4378 = vrot.lane.b32.xlu0 %v4340, 126
  %v4379 = vpop.permute.xlu0 %4378
  %v4393 = vmul.f32 %v3546, %v4355
  %v4394 = vmul.f32 %v3547, %v4357
  %v4395 = vmul.f32 %v3548, %v4359
  %v4396 = vmul.f32 %v3549, %v4361
  %v4397 = vmul.f32 %v3550, %v4363
  %v4398 = vmul.f32 %v3551, %v4365
  %v4399 = vmul.f32 %v3552, %v4367
  %v4400 = vmul.f32 %v3553, %v4369
  %v4401 = vmul.f32 %v3554, %v4371
  %v4402 = vmul.f32 %v3555, %v4373
  %v4403 = vmul.f32 %v3556, %v4375
  %v4404 = vmul.f32 %v3557, %v4377
  %v4405 = vmul.f32 %v3558, %v4379
  %4419 = vrot.lane.b32.xlu0 %v4393, 3
  %v4420 = vpop.permute.xlu0 %4419
  %4421 = vrot.lane.b32.xlu0 %v4394, 3
  %v4422 = vpop.permute.xlu0 %4421
  %4423 = vrot.lane.b32.xlu0 %v4395, 3
  %v4424 = vpop.permute.xlu0 %4423
  %4425 = vrot.lane.b32.xlu0 %v4396, 3
  %v4426 = vpop.permute.xlu0 %4425
  %4427 = vrot.lane.b32.xlu0 %v4397, 3
  %v4428 = vpop.permute.xlu0 %4427
  %4429 = vrot.lane.b32.xlu0 %v4398, 3
  %v4430 = vpop.permute.xlu0 %4429
  %4431 = vrot.lane.b32.xlu0 %v4399, 3
  %v4432 = vpop.permute.xlu0 %4431
  %4433 = vrot.lane.b32.xlu0 %v4400, 3
  %v4434 = vpop.permute.xlu0 %4433
  %4435 = vrot.lane.b32.xlu0 %v4401, 3
  %v4436 = vpop.permute.xlu0 %4435
  %4437 = vrot.lane.b32.xlu0 %v4402, 3
  %v4438 = vpop.permute.xlu0 %4437
  %4439 = vrot.lane.b32.xlu0 %v4403, 3
  %v4440 = vpop.permute.xlu0 %4439
  %4441 = vrot.lane.b32.xlu0 %v4404, 3
  %v4442 = vpop.permute.xlu0 %4441
  %4443 = vrot.lane.b32.xlu0 %v4405, 3
  %v4444 = vpop.permute.xlu0 %4443
  %v4458 = vsub.f32 %v351, %v4420
  %v4459 = vsub.f32 %v352, %v4422
  %v4460 = vsub.f32 %v353, %v4424
  %v4461 = vsub.f32 %v354, %v4426
  %v4462 = vsub.f32 %v355, %v4428
  %v4463 = vsub.f32 %v356, %v4430
  %v4464 = vsub.f32 %v357, %v4432
  %v4465 = vsub.f32 %v358, %v4434
  %v4466 = vsub.f32 %v359, %v4436
  %v4467 = vsub.f32 %v360, %v4438
  %v4468 = vsub.f32 %v361, %v4440
  %v4469 = vsub.f32 %v362, %v4442
  %v4470 = vsub.f32 %v363, %v4444
  %4471 = vset.pattern.permute.xlu0 2
  %4472 = vperm.xlu0 %4471, %v4328
  %v4473 = vpop.permute.xlu0 %4472
  %4475 = vset.pattern.permute.xlu0 2
  %4476 = vperm.xlu0 %4475, %v4329
  %v4477 = vpop.permute.xlu0 %4476
  %4479 = vset.pattern.permute.xlu0 2
  %4480 = vperm.xlu0 %4479, %v4330
  %v4481 = vpop.permute.xlu0 %4480
  %4483 = vset.pattern.permute.xlu0 2
  %4484 = vperm.xlu0 %4483, %v4331
  %v4485 = vpop.permute.xlu0 %4484
  %4487 = vset.pattern.permute.xlu0 2
  %4488 = vperm.xlu0 %4487, %v4332
  %v4489 = vpop.permute.xlu0 %4488
  %4491 = vset.pattern.permute.xlu0 2
  %4492 = vperm.xlu0 %4491, %v4333
  %v4493 = vpop.permute.xlu0 %4492
  %4495 = vset.pattern.permute.xlu0 2
  %4496 = vperm.xlu0 %4495, %v4334
  %v4497 = vpop.permute.xlu0 %4496
  %4499 = vset.pattern.permute.xlu0 2
  %4500 = vperm.xlu0 %4499, %v4335
  %v4501 = vpop.permute.xlu0 %4500
  %4503 = vset.pattern.permute.xlu0 2
  %4504 = vperm.xlu0 %4503, %v4336
  %v4505 = vpop.permute.xlu0 %4504
  %4507 = vset.pattern.permute.xlu0 2
  %4508 = vperm.xlu0 %4507, %v4337
  %v4509 = vpop.permute.xlu0 %4508
  %4511 = vset.pattern.permute.xlu0 2
  %4512 = vperm.xlu0 %4511, %v4338
  %v4513 = vpop.permute.xlu0 %4512
  %4515 = vset.pattern.permute.xlu0 2
  %4516 = vperm.xlu0 %4515, %v4339
  %v4517 = vpop.permute.xlu0 %4516
  %4519 = vset.pattern.permute.xlu0 2
  %4520 = vperm.xlu0 %4519, %v4340
  %v4521 = vpop.permute.xlu0 %4520
  %v4523 = vmul.f32 %v2741, %v4473
  %v4524 = vmul.f32 %v2797, %v4473
  %v4525 = vmul.f32 %v2853, %v4473
  %v4526 = vmul.f32 %v2909, %v4473
  %v4527 = vmul.f32 %v2965, %v4473
  %v4528 = vmul.f32 %v3021, %v4473
  %v4529 = vmul.f32 %v3077, %v4473
  %v4530 = vmul.f32 %v2744, %v4477
  %v4531 = vmul.f32 %v2800, %v4477
  %v4532 = vmul.f32 %v2856, %v4477
  %v4533 = vmul.f32 %v2912, %v4477
  %v4534 = vmul.f32 %v2968, %v4477
  %v4535 = vmul.f32 %v3024, %v4477
  %v4536 = vmul.f32 %v3080, %v4477
  %v4537 = vmul.f32 %v2747, %v4481
  %v4538 = vmul.f32 %v2803, %v4481
  %v4539 = vmul.f32 %v2859, %v4481
  %v4540 = vmul.f32 %v2915, %v4481
  %v4541 = vmul.f32 %v2971, %v4481
  %v4542 = vmul.f32 %v3027, %v4481
  %v4543 = vmul.f32 %v3083, %v4481
  %v4544 = vmul.f32 %v2750, %v4485
  %v4545 = vmul.f32 %v2806, %v4485
  %v4546 = vmul.f32 %v2862, %v4485
  %v4547 = vmul.f32 %v2918, %v4485
  %v4548 = vmul.f32 %v2974, %v4485
  %v4549 = vmul.f32 %v3030, %v4485
  %v4550 = vmul.f32 %v3086, %v4485
  %v4551 = vmul.f32 %v2753, %v4489
  %v4552 = vmul.f32 %v2809, %v4489
  %v4553 = vmul.f32 %v2865, %v4489
  %v4554 = vmul.f32 %v2921, %v4489
  %v4555 = vmul.f32 %v2977, %v4489
  %v4556 = vmul.f32 %v3033, %v4489
  %v4557 = vmul.f32 %v3089, %v4489
  %v4558 = vmul.f32 %v2756, %v4493
  %v4559 = vmul.f32 %v2812, %v4493
  %v4560 = vmul.f32 %v2868, %v4493
  %v4561 = vmul.f32 %v2924, %v4493
  %v4562 = vmul.f32 %v2980, %v4493
  %v4563 = vmul.f32 %v3036, %v4493
  %v4564 = vmul.f32 %v3092, %v4493
  %v4565 = vmul.f32 %v2759, %v4497
  %v4566 = vmul.f32 %v2815, %v4497
  %v4567 = vmul.f32 %v2871, %v4497
  %v4568 = vmul.f32 %v2927, %v4497
  %v4569 = vmul.f32 %v2983, %v4497
  %v4570 = vmul.f32 %v3039, %v4497
  %v4571 = vmul.f32 %v3095, %v4497
  %v4572 = vmul.f32 %v2762, %v4501
  %v4573 = vmul.f32 %v2818, %v4501
  %v4574 = vmul.f32 %v2874, %v4501
  %v4575 = vmul.f32 %v2930, %v4501
  %v4576 = vmul.f32 %v2986, %v4501
  %v4577 = vmul.f32 %v3042, %v4501
  %v4578 = vmul.f32 %v3098, %v4501
  %v4579 = vmul.f32 %v2765, %v4505
  %v4580 = vmul.f32 %v2821, %v4505
  %v4581 = vmul.f32 %v2877, %v4505
  %v4582 = vmul.f32 %v2933, %v4505
  %v4583 = vmul.f32 %v2989, %v4505
  %v4584 = vmul.f32 %v3045, %v4505
  %v4585 = vmul.f32 %v3101, %v4505
  %v4586 = vmul.f32 %v2768, %v4509
  %v4587 = vmul.f32 %v2824, %v4509
  %v4588 = vmul.f32 %v2880, %v4509
  %v4589 = vmul.f32 %v2936, %v4509
  %v4590 = vmul.f32 %v2992, %v4509
  %v4591 = vmul.f32 %v3048, %v4509
  %v4592 = vmul.f32 %v3104, %v4509
  %v4593 = vmul.f32 %v2771, %v4513
  %v4594 = vmul.f32 %v2827, %v4513
  %v4595 = vmul.f32 %v2883, %v4513
  %v4596 = vmul.f32 %v2939, %v4513
  %v4597 = vmul.f32 %v2995, %v4513
  %v4598 = vmul.f32 %v3051, %v4513
  %v4599 = vmul.f32 %v3107, %v4513
  %v4600 = vmul.f32 %v2774, %v4517
  %v4601 = vmul.f32 %v2830, %v4517
  %v4602 = vmul.f32 %v2886, %v4517
  %v4603 = vmul.f32 %v2942, %v4517
  %v4604 = vmul.f32 %v2998, %v4517
  %v4605 = vmul.f32 %v3054, %v4517
  %v4606 = vmul.f32 %v3110, %v4517
  %v4607 = vmul.f32 %v2777, %v4521
  %v4608 = vmul.f32 %v2833, %v4521
  %v4609 = vmul.f32 %v2889, %v4521
  %v4610 = vmul.f32 %v2945, %v4521
  %v4611 = vmul.f32 %v3001, %v4521
  %v4612 = vmul.f32 %v3057, %v4521
  %v4613 = vmul.f32 %v3113, %v4521
  %4615 = vset.pattern.permute.xlu0 3
  %4616 = vperm.xlu0 %4615, %v4458
  %v4617 = vpop.permute.xlu0 %4616
  %4620 = vset.pattern.permute.xlu0 3
  %4621 = vperm.xlu0 %4620, %v4459
  %v4622 = vpop.permute.xlu0 %4621
  %4625 = vset.pattern.permute.xlu0 3
  %4626 = vperm.xlu0 %4625, %v4460
  %v4627 = vpop.permute.xlu0 %4626
  %4630 = vset.pattern.permute.xlu0 3
  %4631 = vperm.xlu0 %4630, %v4461
  %v4632 = vpop.permute.xlu0 %4631
  %4635 = vset.pattern.permute.xlu0 3
  %4636 = vperm.xlu0 %4635, %v4462
  %v4637 = vpop.permute.xlu0 %4636
  %4640 = vset.pattern.permute.xlu0 3
  %4641 = vperm.xlu0 %4640, %v4463
  %v4642 = vpop.permute.xlu0 %4641
  %4645 = vset.pattern.permute.xlu0 3
  %4646 = vperm.xlu0 %4645, %v4464
  %v4647 = vpop.permute.xlu0 %4646
  %4650 = vset.pattern.permute.xlu0 3
  %4651 = vperm.xlu0 %4650, %v4465
  %v4652 = vpop.permute.xlu0 %4651
  %4655 = vset.pattern.permute.xlu0 3
  %4656 = vperm.xlu0 %4655, %v4466
  %v4657 = vpop.permute.xlu0 %4656
  %4660 = vset.pattern.permute.xlu0 3
  %4661 = vperm.xlu0 %4660, %v4467
  %v4662 = vpop.permute.xlu0 %4661
  %4665 = vset.pattern.permute.xlu0 3
  %4666 = vperm.xlu0 %4665, %v4468
  %v4667 = vpop.permute.xlu0 %4666
  %4670 = vset.pattern.permute.xlu0 3
  %4671 = vperm.xlu0 %4670, %v4469
  %v4672 = vpop.permute.xlu0 %4671
  %4675 = vset.pattern.permute.xlu0 3
  %4676 = vperm.xlu0 %4675, %v4470
  %v4677 = vpop.permute.xlu0 %4676
  %v4679 = vadd.f32 %v4523, %v4617
  %v4680 = vadd.f32 %v4524, %v4617
  %v4681 = vadd.f32 %v4525, %v4617
  %v4682 = vadd.f32 %v4526, %v4617
  %v4683 = vadd.f32 %v4527, %v4617
  %v4684 = vadd.f32 %v4528, %v4617
  %v4685 = vadd.f32 %v4529, %v4617
  %v4686 = vadd.f32 %v4530, %v4622
  %v4687 = vadd.f32 %v4531, %v4622
  %v4688 = vadd.f32 %v4532, %v4622
  %v4689 = vadd.f32 %v4533, %v4622
  %v4690 = vadd.f32 %v4534, %v4622
  %v4691 = vadd.f32 %v4535, %v4622
  %v4692 = vadd.f32 %v4536, %v4622
  %v4693 = vadd.f32 %v4537, %v4627
  %v4694 = vadd.f32 %v4538, %v4627
  %v4695 = vadd.f32 %v4539, %v4627
  %v4696 = vadd.f32 %v4540, %v4627
  %v4697 = vadd.f32 %v4541, %v4627
  %v4698 = vadd.f32 %v4542, %v4627
  %v4699 = vadd.f32 %v4543, %v4627
  %v4700 = vadd.f32 %v4544, %v4632
  %v4701 = vadd.f32 %v4545, %v4632
  %v4702 = vadd.f32 %v4546, %v4632
  %v4703 = vadd.f32 %v4547, %v4632
  %v4704 = vadd.f32 %v4548, %v4632
  %v4705 = vadd.f32 %v4549, %v4632
  %v4706 = vadd.f32 %v4550, %v4632
  %v4707 = vadd.f32 %v4551, %v4637
  %v4708 = vadd.f32 %v4552, %v4637
  %v4709 = vadd.f32 %v4553, %v4637
  %v4710 = vadd.f32 %v4554, %v4637
  %v4711 = vadd.f32 %v4555, %v4637
  %v4712 = vadd.f32 %v4556, %v4637
  %v4713 = vadd.f32 %v4557, %v4637
  %v4714 = vadd.f32 %v4558, %v4642
  %v4715 = vadd.f32 %v4559, %v4642
  %v4716 = vadd.f32 %v4560, %v4642
  %v4717 = vadd.f32 %v4561, %v4642
  %v4718 = vadd.f32 %v4562, %v4642
  %v4719 = vadd.f32 %v4563, %v4642
  %v4720 = vadd.f32 %v4564, %v4642
  %v4721 = vadd.f32 %v4565, %v4647
  %v4722 = vadd.f32 %v4566, %v4647
  %v4723 = vadd.f32 %v4567, %v4647
  %v4724 = vadd.f32 %v4568, %v4647
  %v4725 = vadd.f32 %v4569, %v4647
  %v4726 = vadd.f32 %v4570, %v4647
  %v4727 = vadd.f32 %v4571, %v4647
  %v4728 = vadd.f32 %v4572, %v4652
  %v4729 = vadd.f32 %v4573, %v4652
  %v4730 = vadd.f32 %v4574, %v4652
  %v4731 = vadd.f32 %v4575, %v4652
  %v4732 = vadd.f32 %v4576, %v4652
  %v4733 = vadd.f32 %v4577, %v4652
  %v4734 = vadd.f32 %v4578, %v4652
  %v4735 = vadd.f32 %v4579, %v4657
  %v4736 = vadd.f32 %v4580, %v4657
  %v4737 = vadd.f32 %v4581, %v4657
  %v4738 = vadd.f32 %v4582, %v4657
  %v4739 = vadd.f32 %v4583, %v4657
  %v4740 = vadd.f32 %v4584, %v4657
  %v4741 = vadd.f32 %v4585, %v4657
  %v4742 = vadd.f32 %v4586, %v4662
  %v4743 = vadd.f32 %v4587, %v4662
  %v4744 = vadd.f32 %v4588, %v4662
  %v4745 = vadd.f32 %v4589, %v4662
  %v4746 = vadd.f32 %v4590, %v4662
  %v4747 = vadd.f32 %v4591, %v4662
  %v4748 = vadd.f32 %v4592, %v4662
  %v4749 = vadd.f32 %v4593, %v4667
  %v4750 = vadd.f32 %v4594, %v4667
  %v4751 = vadd.f32 %v4595, %v4667
  %v4752 = vadd.f32 %v4596, %v4667
  %v4753 = vadd.f32 %v4597, %v4667
  %v4754 = vadd.f32 %v4598, %v4667
  %v4755 = vadd.f32 %v4599, %v4667
  %v4756 = vadd.f32 %v4600, %v4672
  %v4757 = vadd.f32 %v4601, %v4672
  %v4758 = vadd.f32 %v4602, %v4672
  %v4759 = vadd.f32 %v4603, %v4672
  %v4760 = vadd.f32 %v4604, %v4672
  %v4761 = vadd.f32 %v4605, %v4672
  %v4762 = vadd.f32 %v4606, %v4672
  %v4763 = vadd.f32 %v4607, %v4677
  %v4764 = vadd.f32 %v4608, %v4677
  %v4765 = vadd.f32 %v4609, %v4677
  %v4766 = vadd.f32 %v4610, %v4677
  %v4767 = vadd.f32 %v4611, %v4677
  %v4768 = vadd.f32 %v4612, %v4677
  %v4769 = vadd.f32 %v4613, %v4677
  %4770 = vst [vmem:[%s6] sm:$0xff] %v4679
  %4771 = vst [vmem:[%s6 + $0x8] sm:$0xff] %v4680
  %4772 = vst [vmem:[%s6 + $0x10] sm:$0xff] %v4681
  %4773 = vst [vmem:[%s6 + $0x18] sm:$0xff] %v4682
  %4774 = vst [vmem:[%s6 + $0x20] sm:$0xff] %v4683
  %4775 = vst [vmem:[%s6 + $0x28] sm:$0xff] %v4684
  %4776 = vst.msk [vmem:[%s6 + $0x30] sm:$0xff] %vm826, %v4685
  %4777 = vst [vmem:[%s6 + $0x38] sm:$0xff] %v4686
  %4778 = vst [vmem:[%s6 + $0x40] sm:$0xff] %v4687
  %4779 = vst [vmem:[%s6 + $0x48] sm:$0xff] %v4688
  %4780 = vst [vmem:[%s6 + $0x50] sm:$0xff] %v4689
  %4781 = vst [vmem:[%s6 + $0x58] sm:$0xff] %v4690
  %4782 = vst [vmem:[%s6 + $0x60] sm:$0xff] %v4691
  %4783 = vst.msk [vmem:[%s6 + $0x68] sm:$0xff] %vm826, %v4692
  %4784 = vst [vmem:[%s6 + $0x70] sm:$0xff] %v4693
  %4785 = vst [vmem:[%s6 + $0x78] sm:$0xff] %v4694
  %4786 = vst [vmem:[%s6 + $0x80] sm:$0xff] %v4695
  %4787 = vst [vmem:[%s6 + $0x88] sm:$0xff] %v4696
  %4788 = vst [vmem:[%s6 + $0x90] sm:$0xff] %v4697
  %4789 = vst [vmem:[%s6 + $0x98] sm:$0xff] %v4698
  %4790 = vst.msk [vmem:[%s6 + $0xa0] sm:$0xff] %vm826, %v4699
  %4791 = vst [vmem:[%s6 + $0xa8] sm:$0xff] %v4700
  %4792 = vst [vmem:[%s6 + $0xb0] sm:$0xff] %v4701
  %4793 = vst [vmem:[%s6 + $0xb8] sm:$0xff] %v4702
  %4794 = vst [vmem:[%s6 + $0xc0] sm:$0xff] %v4703
  %4795 = vst [vmem:[%s6 + $0xc8] sm:$0xff] %v4704
  %4796 = vst [vmem:[%s6 + $0xd0] sm:$0xff] %v4705
  %4797 = vst.msk [vmem:[%s6 + $0xd8] sm:$0xff] %vm826, %v4706
  %4798 = vst [vmem:[%s6 + $0xe0] sm:$0xff] %v4707
  %4799 = vst [vmem:[%s6 + $0xe8] sm:$0xff] %v4708
  %4800 = vst [vmem:[%s6 + $0xf0] sm:$0xff] %v4709
  %4801 = vst [vmem:[%s6 + $0xf8] sm:$0xff] %v4710
  %4802 = vst [vmem:[%s6 + $0x100] sm:$0xff] %v4711
  %4803 = vst [vmem:[%s6 + $0x108] sm:$0xff] %v4712
  %4804 = vst.msk [vmem:[%s6 + $0x110] sm:$0xff] %vm826, %v4713
  %4805 = vst [vmem:[%s6 + $0x118] sm:$0xff] %v4714
  %4806 = vst [vmem:[%s6 + $0x120] sm:$0xff] %v4715
  %4807 = vst [vmem:[%s6 + $0x128] sm:$0xff] %v4716
  %4808 = vst [vmem:[%s6 + $0x130] sm:$0xff] %v4717
  %4809 = vst [vmem:[%s6 + $0x138] sm:$0xff] %v4718
  %4810 = vst [vmem:[%s6 + $0x140] sm:$0xff] %v4719
  %4811 = vst.msk [vmem:[%s6 + $0x148] sm:$0xff] %vm826, %v4720
  %4812 = vst [vmem:[%s6 + $0x150] sm:$0xff] %v4721
  %4813 = vst [vmem:[%s6 + $0x158] sm:$0xff] %v4722
  %4814 = vst [vmem:[%s6 + $0x160] sm:$0xff] %v4723
  %4815 = vst [vmem:[%s6 + $0x168] sm:$0xff] %v4724
  %4816 = vst [vmem:[%s6 + $0x170] sm:$0xff] %v4725
  %4817 = vst [vmem:[%s6 + $0x178] sm:$0xff] %v4726
  %4818 = vst.msk [vmem:[%s6 + $0x180] sm:$0xff] %vm826, %v4727
  %4819 = vst [vmem:[%s6 + $0x188] sm:$0xff] %v4728
  %4820 = vst [vmem:[%s6 + $0x190] sm:$0xff] %v4729
  %4821 = vst [vmem:[%s6 + $0x198] sm:$0xff] %v4730
  %4822 = vst [vmem:[%s6 + $0x1a0] sm:$0xff] %v4731
  %4823 = vst [vmem:[%s6 + $0x1a8] sm:$0xff] %v4732
  %4824 = vst [vmem:[%s6 + $0x1b0] sm:$0xff] %v4733
  %4825 = vst.msk [vmem:[%s6 + $0x1b8] sm:$0xff] %vm826, %v4734
  %4826 = vst [vmem:[%s6 + $0x1c0] sm:$0xff] %v4735
  %4827 = vst [vmem:[%s6 + $0x1c8] sm:$0xff] %v4736
  %4828 = vst [vmem:[%s6 + $0x1d0] sm:$0xff] %v4737
  %4829 = vst [vmem:[%s6 + $0x1d8] sm:$0xff] %v4738
  %4830 = vst [vmem:[%s6 + $0x1e0] sm:$0xff] %v4739
  %4831 = vst [vmem:[%s6 + $0x1e8] sm:$0xff] %v4740
  %4832 = vst.msk [vmem:[%s6 + $0x1f0] sm:$0xff] %vm826, %v4741
  %4833 = vst [vmem:[%s6 + $0x1f8] sm:$0xff] %v4742
  %4834 = vst [vmem:[%s6 + $0x200] sm:$0xff] %v4743
  %4835 = vst [vmem:[%s6 + $0x208] sm:$0xff] %v4744
  %4836 = vst [vmem:[%s6 + $0x210] sm:$0xff] %v4745
  %4837 = vst [vmem:[%s6 + $0x218] sm:$0xff] %v4746
  %4838 = vst [vmem:[%s6 + $0x220] sm:$0xff] %v4747
  %4839 = vst.msk [vmem:[%s6 + $0x228] sm:$0xff] %vm826, %v4748
  %4840 = vst [vmem:[%s6 + $0x230] sm:$0xff] %v4749
  %4841 = vst [vmem:[%s6 + $0x238] sm:$0xff] %v4750
  %4842 = vst [vmem:[%s6 + $0x240] sm:$0xff] %v4751
  %4843 = vst [vmem:[%s6 + $0x248] sm:$0xff] %v4752
  %4844 = vst [vmem:[%s6 + $0x250] sm:$0xff] %v4753
  %4845 = vst [vmem:[%s6 + $0x258] sm:$0xff] %v4754
  %4846 = vst.msk [vmem:[%s6 + $0x260] sm:$0xff] %vm826, %v4755
  %4847 = vst [vmem:[%s6 + $0x268] sm:$0xff] %v4756
  %4848 = vst [vmem:[%s6 + $0x270] sm:$0xff] %v4757
  %4849 = vst [vmem:[%s6 + $0x278] sm:$0xff] %v4758
  %4850 = vst [vmem:[%s6 + $0x280] sm:$0xff] %v4759
  %4851 = vst [vmem:[%s6 + $0x288] sm:$0xff] %v4760
  %4852 = vst [vmem:[%s6 + $0x290] sm:$0xff] %v4761
  %4853 = vst.msk [vmem:[%s6 + $0x298] sm:$0xff] %vm826, %v4762
  %4854 = vst [vmem:[%s6 + $0x2a0] sm:$0xff] %v4763
  %4855 = vst [vmem:[%s6 + $0x2a8] sm:$0xff] %v4764
  %4856 = vst [vmem:[%s6 + $0x2b0] sm:$0xff] %v4765
  %4857 = vst [vmem:[%s6 + $0x2b8] sm:$0xff] %v4766
  %4858 = vst [vmem:[%s6 + $0x2c0] sm:$0xff] %v4767
  %4859 = vst [vmem:[%s6 + $0x2c8] sm:$0xff] %v4768
  %4860 = vst.msk [vmem:[%s6 + $0x2d0] sm:$0xff] %vm826, %v4769
  // Predicated region
  $region56: #{model_forward.1} parent=0 // pred_check
    _
  $region57: #{model_forward.1} parent=0 // pred_check_branch
    %4862 = sbr.rel (0) target = $region59
  $region58: #{model_forward.1} parent=0 // pred_region
    _
  $region59: #{model_forward.1} parent=0 // pred_fallthru
    _
  // Predicated region
  $region60: #{model_forward.1} parent=0 // pred_check
    _
  $region61: #{model_forward.1} parent=0 // pred_check_branch
    %4864 = sbr.rel (0) target = $region63
  $region62: #{model_forward.1} parent=0 // pred_region
    _
  $region63: #{model_forward.1} parent=0 // pred_fallthru
    _
  %4865 = vsyncmov [#allocation4]
  %s4866 = vpop.sfrf %4865
  %p4867 = scmp.eq.s32.totalorder %s4866, 0
  %p4868 = pneg %p4867
  %4870 = shalt.err (%p4868)
  %s4871 = scalar_lea.sflag [#allocation4], 1
  %4872 = vsyncmov %s4871
  %s4873 = vpop.sfrf %4872
  %p4874 = scmp.eq.s32.totalorder %s4873, 0
  %p4875 = pneg %p4874
  %4877 = shalt.err (%p4875)

</llo_original>
